<compile_context>
chip_gen: v7x
topology: tpu7x:2x2x1
jax: 0.10.0
libtpu: 0.0.40
codegen_flags: <defaults>
</compile_context>

<pallas_src>
import jax
import jax.numpy as jnp
from jax.experimental import pallas as pl
from jax.experimental.pallas import tpu as pltpu


def _round_up(x, m):
    return (x + m - 1) // m * m


def _leaky_relu(x, slope=0.2):
    return jnp.where(x >= 0, x, slope * x)


def generator_kernel(x_ref,
                     w1_ref, b1_ref,
                     w2_ref, b2_ref,
                     w3_ref, b3_ref,
                     w4_ref, b4_ref,
                     out_ref):
    # Layer 1: packed input (z | one-hot | 0-pad) @ packed W1 (embedding folded in).
    h = jnp.dot(x_ref[...], w1_ref[...],
                preferred_element_type=jnp.float32) + b1_ref[...]
    h = _leaky_relu(h).astype(jnp.bfloat16)

    # Layer 2
    h = jnp.dot(h, w2_ref[...],
                preferred_element_type=jnp.float32) + b2_ref[...]
    h = _leaky_relu(h).astype(jnp.bfloat16)

    # Layer 3
    h = jnp.dot(h, w3_ref[...],
                preferred_element_type=jnp.float32) + b3_ref[...]
    h = _leaky_relu(h).astype(jnp.bfloat16)

    # Layer 4 + Tanh (f32).  Output is lane-aligned (896 = 7*128 columns).
    h = jnp.dot(h, w4_ref[...],
                preferred_element_type=jnp.float32) + b4_ref[...]
    out_ref[...] = jnp.tanh(h)


def init_params(key):
    """Deterministic parameter init (shapes match the PyTorch module)."""
    ks = jax.random.split(key, 5)

    def linear(kw, fan_in, fan_out):
        bound = 1.0 / jnp.sqrt(fan_in)
        k_w, k_b = jax.random.split(kw)
        w = jax.random.uniform(k_w, (fan_in, fan_out), jnp.float32, -bound, bound)
        b = jax.random.uniform(k_b, (fan_out,), jnp.float32, -bound, bound)
        return w, b

    emb = jax.random.normal(ks[0], (10, 10), jnp.float32)   # nn.Embedding(10, 10)
    w1, b1 = linear(ks[1], 110, 256)
    w2, b2 = linear(ks[2], 256, 512)
    w3, b3 = linear(ks[3], 512, 1024)
    w4, b4 = linear(ks[4], 1024, 784)
    return dict(emb=emb, w1=w1, b1=b1, w2=w2, b2=b2,
                w3=w3, b3=b3, w4=w4, b4=b4)


def prepare_params(params):
    """One-time packing/casting so the per-call path does zero weight surgery.

    W1 is packed to (128, 256):
      rows   0:100 -> W1[:100]          (the z part)
      rows 100:110 -> emb @ W1[100:]    (embedding folded into layer 1)
      rows 110:128 -> zeros             (K padded to a lane-aligned 128)

    W4 / b4 are padded from 784 -> 896 output columns (7*128) with zeros so the
    final matmul and the output store are lane-aligned; the wrapper slices the
    padding off.
    """
    emb, w1 = params["emb"], params["w1"]
    w1_packed = jnp.zeros((128, 256), jnp.float32)
    w1_packed = w1_packed.at[:100, :].set(w1[:100, :])
    w1_packed = w1_packed.at[100:110, :].set(emb @ w1[100:, :])

    w4_padded = jnp.zeros((1024, 896), jnp.float32).at[:, :784].set(params["w4"])
    b4_padded = jnp.zeros((896,), jnp.float32).at[:784].set(params["b4"])

    prep = dict(
        w1=w1_packed.astype(jnp.bfloat16),
        b1=params["b1"].reshape(1, -1).astype(jnp.float32),
        w2=params["w2"].astype(jnp.bfloat16),
        b2=params["b2"].reshape(1, -1).astype(jnp.float32),
        w3=params["w3"].astype(jnp.bfloat16),
        b3=params["b3"].reshape(1, -1).astype(jnp.float32),
        w4=w4_padded.astype(jnp.bfloat16),
        b4=b4_padded.reshape(1, -1).astype(jnp.float32),
    )
    return jax.tree_util.tree_map(jax.device_put, prep)


def generator_forward(z, labels, prepared, *, max_tile_m=256):
    B = z.shape[0]
    z2d = z.reshape(B, 100).astype(jnp.float32)            # z.view(z.size(0), 100)
    labels = labels.reshape(B).astype(jnp.int32)

    # Pack kernel input: [z (100) | one-hot(label) (10) | zeros (18)] -> (B, 128) bf16.
    onehot = jax.nn.one_hot(labels, 10, dtype=jnp.float32)
    x = jnp.concatenate(
        [z2d, onehot, jnp.zeros((B, 18), jnp.float32)], axis=1
    ).astype(jnp.bfloat16)

    # Batch tiling: <=256-row M tiles, padded to a multiple of 8 sublanes.
    tm = min(max_tile_m, _round_up(B, 8))
    b_pad = _round_up(B, tm)
    if b_pad != B:
        x = jnp.pad(x, ((0, b_pad - B), (0, 0)))

    const = lambda i: (0, 0)   # weights: same block every grid step (VMEM-resident)

    out = pl.pallas_call(
        generator_kernel,
        out_shape=jax.ShapeDtypeStruct((b_pad, 896), jnp.float32),
        grid=(b_pad // tm,),
        in_specs=[
            pl.BlockSpec((tm, 128), lambda i: (i, 0)),     # packed input tile
            pl.BlockSpec((128, 256), const),               # W1 (packed, emb folded)
            pl.BlockSpec((1, 256), const),                 # b1
            pl.BlockSpec((256, 512), const),               # W2
            pl.BlockSpec((1, 512), const),                 # b2
            pl.BlockSpec((512, 1024), const),              # W3
            pl.BlockSpec((1, 1024), const),                # b3
            pl.BlockSpec((1024, 896), const),              # W4 (lane-padded)
            pl.BlockSpec((1, 896), const),                 # b4 (lane-padded)
        ],
        out_specs=pl.BlockSpec((tm, 896), lambda i: (i, 0)),
        compiler_params=pltpu.CompilerParams(
            dimension_semantics=("parallel",),             # split batch tiles on v7x
        ),
    )(x, prepared["w1"], prepared["b1"], prepared["w2"], prepared["b2"],
      prepared["w3"], prepared["b3"], prepared["w4"], prepared["b4"])

    # Drop batch pad + lane pad, reshape to images.
    return out[:B, :784].reshape(B, 28, 28)                # out.view(x.size(0), 28, 28)


def _reference_forward(z, labels, prepared):
    """Pure-JAX reference using the same (bf16-quantized) weights, f32 math."""
    B = z.shape[0]
    onehot = jax.nn.one_hot(labels.reshape(B), 10, dtype=jnp.float32)
    x = jnp.concatenate(
        [z.reshape(B, 100), onehot, jnp.zeros((B, 18), jnp.float32)], axis=1)
    h = _leaky_relu(x @ prepared["w1"].astype(jnp.float32) + prepared["b1"])
    h = _leaky_relu(h @ prepared["w2"].astype(jnp.float32) + prepared["b2"])
    h = _leaky_relu(h @ prepared["w3"].astype(jnp.float32) + prepared["b3"])
    h = jnp.tanh(h @ prepared["w4"][:, :784].astype(jnp.float32)
                 + prepared["b4"][:, :784])
    return h.reshape(B, 28, 28)


if __name__ == "__main__":
    key = jax.random.PRNGKey(0)
    k_param, k_z, k_lab = jax.random.split(key, 3)

    params = init_params(k_param)
    prepared = prepare_params(params)      # one-time packing / padding / bf16 cast

    B = 8
    z = jax.random.normal(k_z, (B, 100), jnp.float32)
    labels = jax.random.randint(k_lab, (B,), 0, 10, jnp.int32)

    img = generator_forward(z, labels, prepared)
    jax.block_until_ready(img)

    assert img.shape == (B, 28, 28)
    assert img.dtype == jnp.float32

    ref = _reference_forward(z, labels, prepared)
    max_err = float(jnp.max(jnp.abs(img - ref)))
    assert max_err < 8e-2, f"max |err| = {max_err}"

    print("KERNEL_OK")
</pallas_src>

<mosaic_0001>
module attributes {stable_mosaic.version = 11 : i64} {
  func.func @generator_kernel(%arg0: i32, %arg1: memref<8x128xbf16, #tpu.memory_space<vmem>>, %arg2: memref<128x256xbf16, #tpu.memory_space<vmem>>, %arg3: memref<1x256xf32, #tpu.memory_space<vmem>>, %arg4: memref<256x512xbf16, #tpu.memory_space<vmem>>, %arg5: memref<1x512xf32, #tpu.memory_space<vmem>>, %arg6: memref<512x1024xbf16, #tpu.memory_space<vmem>>, %arg7: memref<1x1024xf32, #tpu.memory_space<vmem>>, %arg8: memref<1024x896xbf16, #tpu.memory_space<vmem>>, %arg9: memref<1x896xf32, #tpu.memory_space<vmem>>, %arg10: memref<8x896xf32, #tpu.memory_space<vmem>>) attributes {dimension_semantics = [#tpu.dimension_semantics<parallel>], iteration_bounds = array<i64: 1>, scalar_prefetch = 0 : i64, scratch_operands = 0 : i64, tpu.core_type = #tpu.core_type<tc>, window_params = [{transform_indices = @transform_0, window_bounds = array<i64: 8, 128>}, {pipeline_mode = #tpu.pipeline_mode<synchronous>, transform_indices = @transform_1, window_bounds = array<i64: 128, 256>}, {pipeline_mode = #tpu.pipeline_mode<synchronous>, transform_indices = @transform_2, window_bounds = array<i64: 1, 256>}, {pipeline_mode = #tpu.pipeline_mode<synchronous>, transform_indices = @transform_3, window_bounds = array<i64: 256, 512>}, {pipeline_mode = #tpu.pipeline_mode<synchronous>, transform_indices = @transform_4, window_bounds = array<i64: 1, 512>}, {pipeline_mode = #tpu.pipeline_mode<synchronous>, transform_indices = @transform_5, window_bounds = array<i64: 512, 1024>}, {pipeline_mode = #tpu.pipeline_mode<synchronous>, transform_indices = @transform_6, window_bounds = array<i64: 1, 1024>}, {pipeline_mode = #tpu.pipeline_mode<synchronous>, transform_indices = @transform_7, window_bounds = array<i64: 1024, 896>}, {pipeline_mode = #tpu.pipeline_mode<synchronous>, transform_indices = @transform_8, window_bounds = array<i64: 1, 896>}, {transform_indices = @transform_9, window_bounds = array<i64: 8, 896>}]} {
    %c0 = arith.constant 0 : index
    %c0_0 = arith.constant 0 : index
    %0 = vector.load %arg1[%c0, %c0_0] : memref<8x128xbf16, #tpu.memory_space<vmem>>, vector<8x128xbf16>
    %c0_1 = arith.constant 0 : index
    %c0_2 = arith.constant 0 : index
    %1 = vector.load %arg2[%c0_1, %c0_2] : memref<128x256xbf16, #tpu.memory_space<vmem>>, vector<128x256xbf16>
    %cst = arith.constant dense<0.000000e+00> : vector<8x256xf32>
    %2 = tpu.matmul %0, %1, %cst {dimension_numbers = #tpu.dot_dimension_numbers<[1], [0], [0], [1], [0, 0, 1, 1], [], []>} : vector<8x128xbf16>, vector<128x256xbf16>, vector<8x256xf32> -> vector<8x256xf32>
    %c0_3 = arith.constant 0 : index
    %c0_4 = arith.constant 0 : index
    %3 = vector.load %arg3[%c0_3, %c0_4] : memref<1x256xf32, #tpu.memory_space<vmem>>, vector<1x256xf32>
    %4 = vector.broadcast %3 : vector<1x256xf32> to vector<8x256xf32>
    %5 = arith.addf %2, %4 : vector<8x256xf32>
    %cst_5 = arith.constant 0.000000e+00 : f32
    %6 = vector.broadcast %cst_5 : f32 to vector<8x256xf32>
    %7 = arith.cmpf oge, %5, %6 : vector<8x256xf32>
    %cst_6 = arith.constant 2.000000e-01 : f32
    %8 = vector.broadcast %cst_6 : f32 to vector<8x256xf32>
    %9 = arith.mulf %8, %5 : vector<8x256xf32>
    %10 = arith.select %7, %5, %9 : vector<8x256xi1>, vector<8x256xf32>
    %11 = arith.truncf %10 : vector<8x256xf32> to vector<8x256xbf16>
    %c0_7 = arith.constant 0 : index
    %c0_8 = arith.constant 0 : index
    %12 = vector.load %arg4[%c0_7, %c0_8] : memref<256x512xbf16, #tpu.memory_space<vmem>>, vector<256x512xbf16>
    %cst_9 = arith.constant dense<0.000000e+00> : vector<8x512xf32>
    %13 = tpu.matmul %11, %12, %cst_9 {dimension_numbers = #tpu.dot_dimension_numbers<[1], [0], [0], [1], [0, 0, 1, 1], [], []>} : vector<8x256xbf16>, vector<256x512xbf16>, vector<8x512xf32> -> vector<8x512xf32>
    %c0_10 = arith.constant 0 : index
    %c0_11 = arith.constant 0 : index
    %14 = vector.load %arg5[%c0_10, %c0_11] : memref<1x512xf32, #tpu.memory_space<vmem>>, vector<1x512xf32>
    %15 = vector.broadcast %14 : vector<1x512xf32> to vector<8x512xf32>
    %16 = arith.addf %13, %15 : vector<8x512xf32>
    %cst_12 = arith.constant 0.000000e+00 : f32
    %17 = vector.broadcast %cst_12 : f32 to vector<8x512xf32>
    %18 = arith.cmpf oge, %16, %17 : vector<8x512xf32>
    %cst_13 = arith.constant 2.000000e-01 : f32
    %19 = vector.broadcast %cst_13 : f32 to vector<8x512xf32>
    %20 = arith.mulf %19, %16 : vector<8x512xf32>
    %21 = arith.select %18, %16, %20 : vector<8x512xi1>, vector<8x512xf32>
    %22 = arith.truncf %21 : vector<8x512xf32> to vector<8x512xbf16>
    %c0_14 = arith.constant 0 : index
    %c0_15 = arith.constant 0 : index
    %23 = vector.load %arg6[%c0_14, %c0_15] : memref<512x1024xbf16, #tpu.memory_space<vmem>>, vector<512x1024xbf16>
    %cst_16 = arith.constant dense<0.000000e+00> : vector<8x1024xf32>
    %24 = tpu.matmul %22, %23, %cst_16 {dimension_numbers = #tpu.dot_dimension_numbers<[1], [0], [0], [1], [0, 0, 1, 1], [], []>} : vector<8x512xbf16>, vector<512x1024xbf16>, vector<8x1024xf32> -> vector<8x1024xf32>
    %c0_17 = arith.constant 0 : index
    %c0_18 = arith.constant 0 : index
    %25 = vector.load %arg7[%c0_17, %c0_18] : memref<1x1024xf32, #tpu.memory_space<vmem>>, vector<1x1024xf32>
    %26 = vector.broadcast %25 : vector<1x1024xf32> to vector<8x1024xf32>
    %27 = arith.addf %24, %26 : vector<8x1024xf32>
    %cst_19 = arith.constant 0.000000e+00 : f32
    %28 = vector.broadcast %cst_19 : f32 to vector<8x1024xf32>
    %29 = arith.cmpf oge, %27, %28 : vector<8x1024xf32>
    %cst_20 = arith.constant 2.000000e-01 : f32
    %30 = vector.broadcast %cst_20 : f32 to vector<8x1024xf32>
    %31 = arith.mulf %30, %27 : vector<8x1024xf32>
    %32 = arith.select %29, %27, %31 : vector<8x1024xi1>, vector<8x1024xf32>
    %33 = arith.truncf %32 : vector<8x1024xf32> to vector<8x1024xbf16>
    %c0_21 = arith.constant 0 : index
    %c0_22 = arith.constant 0 : index
    %34 = vector.load %arg8[%c0_21, %c0_22] : memref<1024x896xbf16, #tpu.memory_space<vmem>>, vector<1024x896xbf16>
    %cst_23 = arith.constant dense<0.000000e+00> : vector<8x896xf32>
    %35 = tpu.matmul %33, %34, %cst_23 {dimension_numbers = #tpu.dot_dimension_numbers<[1], [0], [0], [1], [0, 0, 1, 1], [], []>} : vector<8x1024xbf16>, vector<1024x896xbf16>, vector<8x896xf32> -> vector<8x896xf32>
    %c0_24 = arith.constant 0 : index
    %c0_25 = arith.constant 0 : index
    %36 = vector.load %arg9[%c0_24, %c0_25] : memref<1x896xf32, #tpu.memory_space<vmem>>, vector<1x896xf32>
    %37 = vector.broadcast %36 : vector<1x896xf32> to vector<8x896xf32>
    %38 = arith.addf %35, %37 : vector<8x896xf32>
    %39 = math.tanh %38 : vector<8x896xf32>
    %c0_26 = arith.constant 0 : index
    %c0_27 = arith.constant 0 : index
    %40 = vector.load %arg10[%c0_26, %c0_27] : memref<8x896xf32, #tpu.memory_space<vmem>>, vector<8x896xf32>
    tpu.vector_store %arg10[%c0_26, %c0_27], %39 {strides = array<i32>} : memref<8x896xf32, #tpu.memory_space<vmem>>, vector<8x896xf32>,
    return
  }
  func.func @transform_0(%arg0: i32) -> (i32, i32) {
    %c0_i32 = arith.constant 0 : i32
    %c0_i32_0 = arith.constant 0 : i32
    return %arg0, %c0_i32 : i32, i32
  }
  func.func @transform_1(%arg0: i32) -> (i32, i32) {
    %c0_i32 = arith.constant 0 : i32
    %c0_i32_0 = arith.constant 0 : i32
    %c0_i32_1 = arith.constant 0 : i32
    return %c0_i32, %c0_i32_0 : i32, i32
  }
  func.func @transform_2(%arg0: i32) -> (i32, i32) {
    %c0_i32 = arith.constant 0 : i32
    %c0_i32_0 = arith.constant 0 : i32
    %c0_i32_1 = arith.constant 0 : i32
    return %c0_i32, %c0_i32_0 : i32, i32
  }
  func.func @transform_3(%arg0: i32) -> (i32, i32) {
    %c0_i32 = arith.constant 0 : i32
    %c0_i32_0 = arith.constant 0 : i32
    %c0_i32_1 = arith.constant 0 : i32
    return %c0_i32, %c0_i32_0 : i32, i32
  }
  func.func @transform_4(%arg0: i32) -> (i32, i32) {
    %c0_i32 = arith.constant 0 : i32
    %c0_i32_0 = arith.constant 0 : i32
    %c0_i32_1 = arith.constant 0 : i32
    return %c0_i32, %c0_i32_0 : i32, i32
  }
  func.func @transform_5(%arg0: i32) -> (i32, i32) {
    %c0_i32 = arith.constant 0 : i32
    %c0_i32_0 = arith.constant 0 : i32
    %c0_i32_1 = arith.constant 0 : i32
    return %c0_i32, %c0_i32_0 : i32, i32
  }
  func.func @transform_6(%arg0: i32) -> (i32, i32) {
    %c0_i32 = arith.constant 0 : i32
    %c0_i32_0 = arith.constant 0 : i32
    %c0_i32_1 = arith.constant 0 : i32
    return %c0_i32, %c0_i32_0 : i32, i32
  }
  func.func @transform_7(%arg0: i32) -> (i32, i32) {
    %c0_i32 = arith.constant 0 : i32
    %c0_i32_0 = arith.constant 0 : i32
    %c0_i32_1 = arith.constant 0 : i32
    return %c0_i32, %c0_i32_0 : i32, i32
  }
  func.func @transform_8(%arg0: i32) -> (i32, i32) {
    %c0_i32 = arith.constant 0 : i32
    %c0_i32_0 = arith.constant 0 : i32
    %c0_i32_1 = arith.constant 0 : i32
    return %c0_i32, %c0_i32_0 : i32, i32
  }
  func.func @transform_9(%arg0: i32) -> (i32, i32) {
    %c0_i32 = arith.constant 0 : i32
    %c0_i32_0 = arith.constant 0 : i32
    return %arg0, %c0_i32 : i32, i32
  }
}

</mosaic_0001>

<llo_original>
// kernel: tpu_custom_call.1
$region0: #{tpu_custom_call.1}
  #allocation0 [shape = 'u32[]', space=smem, size = 0x4, offset = 0x4, fixed_abs, tag = 'smem constant byte address 0x4 - core index']
  #allocation1 [shape = 'u32[144,128]{1,0:T(1,128)}', space=vmem, size = 0x12000, scoped, tag = 'internal scratch']
  %s0 = inlined_call_operand.hbm [shape: bf16[8,128], index: 0, kind: input, shape index: {}]
  %s1 = inlined_call_operand.hbm [shape: bf16[128,256], index: 1, kind: input, shape index: {}]
  %s2 = inlined_call_operand.hbm [shape: f32[1,256], index: 2, kind: input, shape index: {}]
  %s3 = inlined_call_operand.hbm [shape: bf16[256,512], index: 3, kind: input, shape index: {}]
  %s4 = inlined_call_operand.hbm [shape: f32[1,512], index: 4, kind: input, shape index: {}]
  %s5 = inlined_call_operand.hbm [shape: bf16[512,1024], index: 5, kind: input, shape index: {}]
  %s6 = inlined_call_operand.hbm [shape: f32[1,1024], index: 6, kind: input, shape index: {}]
  %s7 = inlined_call_operand.hbm [shape: bf16[1024,896], index: 7, kind: input, shape index: {}]
  %s8 = inlined_call_operand.hbm [shape: f32[1,896], index: 8, kind: input, shape index: {}]
  %s9 = inlined_call_operand.hbm [shape: f32[8,896], index: 9, kind: output, shape index: {}]
  %s10 = sld [smem:[#allocation0]]
  $region82: #{tpu_custom_call.1} parent=0
    _
  %s12 = ssub.s32 1, %s10
  %s13 = scalar_select 0, %s12, %s10
  $region1: #{tpu_custom_call.1} parent=0
    #allocation2 [shape = 'u8[2048]{0}', space=vmem, size = 0x800, scoped, tag = 'input window, operand 0, single buffered']
    #allocation3 [shape = 's32[1]{0}', space=sflag, size = 0x4, scoped, tag = 'scoped memory for tpu_custom_call.1']
    #allocation4 [shape = 's32[1]{0}', space=sflag, size = 0x4, scoped, tag = 'scoped memory for tpu_custom_call.1']
    #allocation5 [shape = 'u8[65536]{0}', space=vmem, size = 0x10000, scoped, tag = 'input window, operand 1, single buffered']
    #allocation6 [shape = 's32[1]{0}', space=sflag, size = 0x4, scoped, tag = 'scoped memory for tpu_custom_call.1']
    #allocation7 [shape = 'u8[1024]{0}', space=vmem, size = 0x400, scoped, tag = 'input window, operand 2, single buffered']
    #allocation8 [shape = 'u8[262144]{0}', space=vmem, size = 0x40000, scoped, tag = 'input window, operand 3, single buffered']
    #allocation9 [shape = 's32[1]{0}', space=sflag, size = 0x4, scoped, tag = 'scoped memory for tpu_custom_call.1']
    #allocation10 [shape = 'u8[2048]{0}', space=vmem, size = 0x800, scoped, tag = 'input window, operand 4, single buffered']
    #allocation11 [shape = 'u8[1048576]{0}', space=vmem, size = 0x100000, scoped, tag = 'input window, operand 5, single buffered']
    #allocation12 [shape = 's32[1]{0}', space=sflag, size = 0x4, scoped, tag = 'scoped memory for tpu_custom_call.1']
    #allocation13 [shape = 'u8[4096]{0}', space=vmem, size = 0x1000, scoped, tag = 'input window, operand 6, single buffered']
    #allocation14 [shape = 'u8[1835008]{0}', space=vmem, size = 0x1c0000, scoped, tag = 'input window, operand 7, single buffered']
    #allocation15 [shape = 's32[1]{0}', space=sflag, size = 0x4, scoped, tag = 'scoped memory for tpu_custom_call.1']
    #allocation16 [shape = 'u8[3584]{0}', space=vmem, size = 0x1000, scoped, tag = 'input window, operand 8, single buffered']
    #allocation17 [shape = 'u8[28672]{0}', space=vmem, size = 0x7000, scoped, tag = 'output window, operand 0, single buffered']
    %14 = vsyncpa [#allocation3], 0
    %15 = vsyncpa [#allocation6], 0
    %16 = vsyncpa [#allocation9], 0
    %17 = vsyncpa [#allocation12], 0
    %18 = vsyncpa [#allocation15], 0
    %19 = vsyncpa [#allocation4], 0
    // Predicated region
    $region2: #{tpu_custom_call.1} parent=1 // pred_check
      _
    $region3: #{tpu_custom_call.1} parent=1 // pred_check_branch
      %21 = sbr.rel (0) target = $region5
    $region4: #{tpu_custom_call.1} parent=1 // pred_region
      %s23 = ssub.s32 64, 64
      %24 = vsyncadd [#allocation3], %s23
      %s26 = sshll.u32 [#allocation2], 4
      %s27 = int_to_ptr.vmem [resolvable:$true] %s26
      %29 = dma.hbm_to_vmem [thread:$0]  %s0, 64, %s27, [#allocation3]
    $region5: #{tpu_custom_call.1} parent=1 // pred_fallthru
      _
    // Predicated region
    $region6: #{tpu_custom_call.1} parent=1 // pred_check
      _
    $region7: #{tpu_custom_call.1} parent=1 // pred_check_branch
      %31 = sbr.rel (0) target = $region9
    $region8: #{tpu_custom_call.1} parent=1 // pred_region
      %s33 = ssub.s32 2048, 2048
      %34 = vsyncadd [#allocation6], %s33
      %s35 = sshll.u32 [#allocation5], 4
      %s36 = int_to_ptr.vmem [resolvable:$true] %s35
      %41 = dma.hbm_to_vmem [thread:$0]  %s1, 2048, %s36, [#allocation6], 128, 128, 8
    $region9: #{tpu_custom_call.1} parent=1 // pred_fallthru
      _
    // Predicated region
    $region10: #{tpu_custom_call.1} parent=1 // pred_check
      _
    $region11: #{tpu_custom_call.1} parent=1 // pred_check_branch
      %43 = sbr.rel (0) target = $region13
    $region12: #{tpu_custom_call.1} parent=1 // pred_region
      %s45 = ssub.s32 32, 32
      %46 = vsyncadd [#allocation6], %s45
      %s48 = sshll.u32 [#allocation7], 4
      %s49 = int_to_ptr.vmem [resolvable:$true] %s48
      %51 = dma.hbm_to_vmem [thread:$0]  %s2, 32, %s49, [#allocation6]
    $region13: #{tpu_custom_call.1} parent=1 // pred_fallthru
      _
    // Predicated region
    $region14: #{tpu_custom_call.1} parent=1 // pred_check
      _
    $region15: #{tpu_custom_call.1} parent=1 // pred_check_branch
      %53 = sbr.rel (0) target = $region17
    $region16: #{tpu_custom_call.1} parent=1 // pred_region
      %s55 = ssub.s32 8192, 8192
      %56 = vsyncadd [#allocation9], %s55
      %s57 = sshll.u32 [#allocation8], 4
      %s58 = int_to_ptr.vmem [resolvable:$true] %s57
      %63 = dma.hbm_to_vmem [thread:$0]  %s3, 8192, %s58, [#allocation9], 256, 256, 16
    $region17: #{tpu_custom_call.1} parent=1 // pred_fallthru
      _
    // Predicated region
    $region18: #{tpu_custom_call.1} parent=1 // pred_check
      _
    $region19: #{tpu_custom_call.1} parent=1 // pred_check_branch
      %65 = sbr.rel (0) target = $region21
    $region20: #{tpu_custom_call.1} parent=1 // pred_region
      %s67 = ssub.s32 64, 64
      %68 = vsyncadd [#allocation9], %s67
      %s70 = sshll.u32 [#allocation10], 4
      %s71 = int_to_ptr.vmem [resolvable:$true] %s70
      %73 = dma.hbm_to_vmem [thread:$0]  %s4, 64, %s71, [#allocation9]
    $region21: #{tpu_custom_call.1} parent=1 // pred_fallthru
      _
    // Predicated region
    $region22: #{tpu_custom_call.1} parent=1 // pred_check
      _
    $region23: #{tpu_custom_call.1} parent=1 // pred_check_branch
      %75 = sbr.rel (0) target = $region25
    $region24: #{tpu_custom_call.1} parent=1 // pred_region
      %s77 = ssub.s32 32768, 32768
      %78 = vsyncadd [#allocation12], %s77
      %s79 = sshll.u32 [#allocation11], 4
      %s80 = int_to_ptr.vmem [resolvable:$true] %s79
      %85 = dma.hbm_to_vmem [thread:$0]  %s5, 32768, %s80, [#allocation12], 512, 512, 32
    $region25: #{tpu_custom_call.1} parent=1 // pred_fallthru
      _
    // Predicated region
    $region26: #{tpu_custom_call.1} parent=1 // pred_check
      _
    $region27: #{tpu_custom_call.1} parent=1 // pred_check_branch
      %87 = sbr.rel (0) target = $region29
    $region28: #{tpu_custom_call.1} parent=1 // pred_region
      %s89 = ssub.s32 128, 128
      %90 = vsyncadd [#allocation12], %s89
      %s92 = sshll.u32 [#allocation13], 4
      %s93 = int_to_ptr.vmem [resolvable:$true] %s92
      %95 = dma.hbm_to_vmem [thread:$0]  %s6, 128, %s93, [#allocation12]
    $region29: #{tpu_custom_call.1} parent=1 // pred_fallthru
      _
    // Predicated region
    $region30: #{tpu_custom_call.1} parent=1 // pred_check
      _
    $region31: #{tpu_custom_call.1} parent=1 // pred_check_branch
      %97 = sbr.rel (0) target = $region33
    $region32: #{tpu_custom_call.1} parent=1 // pred_region
      %s99 = ssub.s32 57344, 57344
      %100 = vsyncadd [#allocation15], %s99
      %s101 = sshll.u32 [#allocation14], 4
      %s102 = int_to_ptr.vmem [resolvable:$true] %s101
      %107 = dma.hbm_to_vmem [thread:$0]  %s7, 57344, %s102, [#allocation15], 448, 448, 28
    $region33: #{tpu_custom_call.1} parent=1 // pred_fallthru
      _
    // Predicated region
    $region34: #{tpu_custom_call.1} parent=1 // pred_check
      _
    $region35: #{tpu_custom_call.1} parent=1 // pred_check_branch
      %109 = sbr.rel (0) target = $region37
    $region36: #{tpu_custom_call.1} parent=1 // pred_region
      %s111 = ssub.s32 112, 112
      %112 = vsyncadd [#allocation15], %s111
      %s114 = sshll.u32 [#allocation16], 4
      %s115 = int_to_ptr.vmem [resolvable:$true] %s114
      %117 = dma.hbm_to_vmem [thread:$0]  %s8, 112, %s115, [#allocation15]
    $region37: #{tpu_custom_call.1} parent=1 // pred_fallthru
      _
    // Predicated region
    $region38: #{tpu_custom_call.1} parent=1 // pred_check
      _
    $region39: #{tpu_custom_call.1} parent=1 // pred_check_branch
      %119 = sbr.rel (0) target = $region41
    $region40: #{tpu_custom_call.1} parent=1 // pred_region
      %120 = dma.done [#allocation3], 64
    $region41: #{tpu_custom_call.1} parent=1 // pred_fallthru
      _
    // Predicated region
    $region42: #{tpu_custom_call.1} parent=1 // pred_check
      _
    $region43: #{tpu_custom_call.1} parent=1 // pred_check_branch
      %122 = sbr.rel (0) target = $region45
    $region44: #{tpu_custom_call.1} parent=1 // pred_region
      %123 = dma.done [#allocation6], 2048
    $region45: #{tpu_custom_call.1} parent=1 // pred_fallthru
      _
    // Predicated region
    $region46: #{tpu_custom_call.1} parent=1 // pred_check
      _
    $region47: #{tpu_custom_call.1} parent=1 // pred_check_branch
      %125 = sbr.rel (0) target = $region49
    $region48: #{tpu_custom_call.1} parent=1 // pred_region
      %126 = dma.done [#allocation6], 32
    $region49: #{tpu_custom_call.1} parent=1 // pred_fallthru
      _
    // Predicated region
    $region50: #{tpu_custom_call.1} parent=1 // pred_check
      _
    $region51: #{tpu_custom_call.1} parent=1 // pred_check_branch
      %128 = sbr.rel (0) target = $region53
    $region52: #{tpu_custom_call.1} parent=1 // pred_region
      %129 = dma.done [#allocation9], 8192
    $region53: #{tpu_custom_call.1} parent=1 // pred_fallthru
      _
    // Predicated region
    $region54: #{tpu_custom_call.1} parent=1 // pred_check
      _
    $region55: #{tpu_custom_call.1} parent=1 // pred_check_branch
      %131 = sbr.rel (0) target = $region57
    $region56: #{tpu_custom_call.1} parent=1 // pred_region
      %132 = dma.done [#allocation9], 64
    $region57: #{tpu_custom_call.1} parent=1 // pred_fallthru
      _
    // Predicated region
    $region58: #{tpu_custom_call.1} parent=1 // pred_check
      _
    $region59: #{tpu_custom_call.1} parent=1 // pred_check_branch
      %134 = sbr.rel (0) target = $region61
    $region60: #{tpu_custom_call.1} parent=1 // pred_region
      %135 = dma.done [#allocation12], 32768
    $region61: #{tpu_custom_call.1} parent=1 // pred_fallthru
      _
    // Predicated region
    $region62: #{tpu_custom_call.1} parent=1 // pred_check
      _
    $region63: #{tpu_custom_call.1} parent=1 // pred_check_branch
      %137 = sbr.rel (0) target = $region65
    $region64: #{tpu_custom_call.1} parent=1 // pred_region
      %138 = dma.done [#allocation12], 128
    $region65: #{tpu_custom_call.1} parent=1 // pred_fallthru
      _
    // Predicated region
    $region66: #{tpu_custom_call.1} parent=1 // pred_check
      _
    $region67: #{tpu_custom_call.1} parent=1 // pred_check_branch
      %140 = sbr.rel (0) target = $region69
    $region68: #{tpu_custom_call.1} parent=1 // pred_region
      %141 = dma.done [#allocation15], 57344
    $region69: #{tpu_custom_call.1} parent=1 // pred_fallthru
      _
    // Predicated region
    $region70: #{tpu_custom_call.1} parent=1 // pred_check
      _
    $region71: #{tpu_custom_call.1} parent=1 // pred_check_branch
      %143 = sbr.rel (0) target = $region73
    $region72: #{tpu_custom_call.1} parent=1 // pred_region
      %144 = dma.done [#allocation15], 112
    $region73: #{tpu_custom_call.1} parent=1 // pred_fallthru
      _
    %v146 = vld [vmem:[#allocation2] sm:$0xf]
    %v147 = vld [vmem:[#allocation5] sm:$0xff]
    %v148 = vld [vmem:[#allocation5 + $0x8] sm:$0xff]
    %v149 = vld [vmem:[#allocation5 + $0x10] sm:$0xff]
    %v150 = vld [vmem:[#allocation5 + $0x18] sm:$0xff]
    %v151 = vld [vmem:[#allocation5 + $0x20] sm:$0xff]
    %v152 = vld [vmem:[#allocation5 + $0x28] sm:$0xff]
    %v153 = vld [vmem:[#allocation5 + $0x30] sm:$0xff]
    %v154 = vld [vmem:[#allocation5 + $0x38] sm:$0xff]
    %v155 = vld [vmem:[#allocation5 + $0x40] sm:$0xff]
    %v156 = vld [vmem:[#allocation5 + $0x48] sm:$0xff]
    %v157 = vld [vmem:[#allocation5 + $0x50] sm:$0xff]
    %v158 = vld [vmem:[#allocation5 + $0x58] sm:$0xff]
    %v159 = vld [vmem:[#allocation5 + $0x60] sm:$0xff]
    %v160 = vld [vmem:[#allocation5 + $0x68] sm:$0xff]
    %v161 = vld [vmem:[#allocation5 + $0x70] sm:$0xff]
    %v162 = vld [vmem:[#allocation5 + $0x78] sm:$0xff]
    %v163 = vld [vmem:[#allocation7] sm:$0x3]
    %v165 = vlaneseq
    %v166 = vshrl.u32 %v165, 7
    %v167 = vsub.s32 0, %v166
    %v168 = vrot.slane %v163, %v167
    %v169 = vlaneseq
    %v170 = vshrl.u32 %v169, 7
    %v171 = vsub.s32 1, %v170
    %v172 = vrot.slane %v163, %v171
    %v191 = vunpack.c.l.b16 %v147
    %v192 = vunpack.c.h.b16 %v147
    %v193 = vunpack.c.l.b16 %v148
    %v194 = vunpack.c.h.b16 %v148
    %v195 = vunpack.c.l.b16 %v149
    %v196 = vunpack.c.h.b16 %v149
    %v197 = vunpack.c.l.b16 %v150
    %v198 = vunpack.c.h.b16 %v150
    %v199 = vunpack.c.l.b16 %v151
    %v200 = vunpack.c.h.b16 %v151
    %v201 = vunpack.c.l.b16 %v152
    %v202 = vunpack.c.h.b16 %v152
    %v203 = vunpack.c.l.b16 %v153
    %v204 = vunpack.c.h.b16 %v153
    %v205 = vunpack.c.l.b16 %v154
    %v206 = vunpack.c.h.b16 %v154
    %v207 = vunpack.c.l.b16 %v155
    %v208 = vunpack.c.h.b16 %v155
    %v209 = vunpack.c.l.b16 %v156
    %v210 = vunpack.c.h.b16 %v156
    %v211 = vunpack.c.l.b16 %v157
    %v212 = vunpack.c.h.b16 %v157
    %v213 = vunpack.c.l.b16 %v158
    %v214 = vunpack.c.h.b16 %v158
    %v215 = vunpack.c.l.b16 %v159
    %v216 = vunpack.c.h.b16 %v159
    %v217 = vunpack.c.l.b16 %v160
    %v218 = vunpack.c.h.b16 %v160
    %v219 = vunpack.c.l.b16 %v161
    %v220 = vunpack.c.h.b16 %v161
    %v221 = vunpack.c.l.b16 %v162
    %v222 = vunpack.c.h.b16 %v162
    %v223 = vpack.c.b16 %v193, %v191
    %v224 = vpack.c.b16 %v194, %v192
    %v225 = vpack.c.b16 %v197, %v195
    %v226 = vpack.c.b16 %v198, %v196
    %v227 = vpack.c.b16 %v201, %v199
    %v228 = vpack.c.b16 %v202, %v200
    %v229 = vpack.c.b16 %v205, %v203
    %v230 = vpack.c.b16 %v206, %v204
    %v231 = vpack.c.b16 %v209, %v207
    %v232 = vpack.c.b16 %v210, %v208
    %v233 = vpack.c.b16 %v213, %v211
    %v234 = vpack.c.b16 %v214, %v212
    %v235 = vpack.c.b16 %v217, %v215
    %v236 = vpack.c.b16 %v218, %v216
    %v237 = vpack.c.b16 %v221, %v219
    %v238 = vpack.c.b16 %v222, %v220
    %255 = vmatprep.subr.bf16.mxu0 %v224
    %256 = vmatpush1.bf16.msra.mxu0 %v223
    %257 = vmatprep.subr.bf16.mxu0 %v226
    %258 = vmatpush1.bf16.msra.mxu0 %v225
    %259 = vmatprep.subr.bf16.mxu0 %v228
    %260 = vmatpush1.bf16.msra.mxu0 %v227
    %261 = vmatprep.subr.bf16.mxu0 %v230
    %262 = vmatpush1.bf16.msra.mxu0 %v229
    %263 = vmatprep.subr.bf16.mxu0 %v232
    %264 = vmatpush1.bf16.msra.mxu0 %v231
    %265 = vmatprep.subr.bf16.mxu0 %v234
    %266 = vmatpush1.bf16.msra.mxu0 %v233
    %267 = vmatprep.subr.bf16.mxu0 %v236
    %268 = vmatpush1.bf16.msra.mxu0 %v235
    %269 = vmatprep.subr.bf16.mxu0 %v238
    %270 = vmatpush1.bf16.msra.mxu0 %v237
    %271 = vmatprep.subr.bf16.mxu0 0
    %272 = vmatpush1.bf16.msra.mxu0 0
    %273 = vmatprep.subr.bf16.mxu0 0
    %274 = vmatpush1.bf16.msra.mxu0 0
    %275 = vmatprep.subr.bf16.mxu0 0
    %276 = vmatpush1.bf16.msra.mxu0 0
    %277 = vmatprep.subr.bf16.mxu0 0
    %278 = vmatpush1.bf16.msra.mxu0 0
    %279 = vmatprep.subr.bf16.mxu0 0
    %280 = vmatpush1.bf16.msra.mxu0 0
    %281 = vmatprep.subr.bf16.mxu0 0
    %282 = vmatpush1.bf16.msra.mxu0 0
    %283 = vmatprep.subr.bf16.mxu0 0
    %284 = vmatpush1.bf16.msra.mxu0 0
    %285 = vmatprep.subr.bf16.mxu0 0
    %286 = vmatpush1.bf16.msra.mxu0 0
    %287 = vmatprep.mubr.bf16.mxu0 0
    %288 = vmatmul.mubr.bf16.gmra.mrb[0].mxu0 %v146
    %v289 = vpop.f32.mrb[0].mxu0
    %v290 = vadd.f32 %v168, %v289
    %v291 = vpop.f32.mrb[0].mxu0
    %v292 = vadd.f32 %v172, %v291
    %v293 = vpop.f32.mrb[0].mxu0
    %v294 = vpop.f32.mrb[0].mxu0
    %295 = vdwg.mxu0
    %vm296 = vcmp.ge.f32.partialorder %v290, 0.0
    %vm297 = vcmp.ge.f32.partialorder %v292, 0.0
    %v298 = vmul.f32 %v290, 0.2
    %v299 = vmul.f32 %v292, 0.2
    %v300 = vsel %vm296, %v290, %v298
    %v301 = vsel %vm297, %v292, %v299
    %v302 = vpack.c.bf16 %v300, %v300
    %v303 = vpack.c.bf16 %v301, %v301
    %v304 = vld [vmem:[#allocation8] sm:$0xff]
    %v305 = vld [vmem:[#allocation8 + $0x8] sm:$0xff]
    %v306 = vld [vmem:[#allocation8 + $0x10] sm:$0xff]
    %v307 = vld [vmem:[#allocation8 + $0x18] sm:$0xff]
    %v308 = vld [vmem:[#allocation8 + $0x20] sm:$0xff]
    %v309 = vld [vmem:[#allocation8 + $0x28] sm:$0xff]
    %v310 = vld [vmem:[#allocation8 + $0x30] sm:$0xff]
    %v311 = vld [vmem:[#allocation8 + $0x38] sm:$0xff]
    %v312 = vld [vmem:[#allocation8 + $0x40] sm:$0xff]
    %v313 = vld [vmem:[#allocation8 + $0x48] sm:$0xff]
    %v314 = vld [vmem:[#allocation8 + $0x50] sm:$0xff]
    %v315 = vld [vmem:[#allocation8 + $0x58] sm:$0xff]
    %v316 = vld [vmem:[#allocation8 + $0x60] sm:$0xff]
    %v317 = vld [vmem:[#allocation8 + $0x68] sm:$0xff]
    %v318 = vld [vmem:[#allocation8 + $0x70] sm:$0xff]
    %v319 = vld [vmem:[#allocation8 + $0x78] sm:$0xff]
    %v320 = vld [vmem:[#allocation8 + $0x80] sm:$0xff]
    %v321 = vld [vmem:[#allocation8 + $0x88] sm:$0xff]
    %v322 = vld [vmem:[#allocation8 + $0x90] sm:$0xff]
    %v323 = vld [vmem:[#allocation8 + $0x98] sm:$0xff]
    %v324 = vld [vmem:[#allocation8 + $0xa0] sm:$0xff]
    %v325 = vld [vmem:[#allocation8 + $0xa8] sm:$0xff]
    %v326 = vld [vmem:[#allocation8 + $0xb0] sm:$0xff]
    %v327 = vld [vmem:[#allocation8 + $0xb8] sm:$0xff]
    %v328 = vld [vmem:[#allocation8 + $0xc0] sm:$0xff]
    %v329 = vld [vmem:[#allocation8 + $0xc8] sm:$0xff]
    %v330 = vld [vmem:[#allocation8 + $0xd0] sm:$0xff]
    %v331 = vld [vmem:[#allocation8 + $0xd8] sm:$0xff]
    %v332 = vld [vmem:[#allocation8 + $0xe0] sm:$0xff]
    %v333 = vld [vmem:[#allocation8 + $0xe8] sm:$0xff]
    %v334 = vld [vmem:[#allocation8 + $0xf0] sm:$0xff]
    %v335 = vld [vmem:[#allocation8 + $0xf8] sm:$0xff]
    %v336 = vld [vmem:[#allocation8 + $0x100] sm:$0xff]
    %v337 = vld [vmem:[#allocation8 + $0x108] sm:$0xff]
    %v338 = vld [vmem:[#allocation8 + $0x110] sm:$0xff]
    %v339 = vld [vmem:[#allocation8 + $0x118] sm:$0xff]
    %v340 = vld [vmem:[#allocation8 + $0x120] sm:$0xff]
    %v341 = vld [vmem:[#allocation8 + $0x128] sm:$0xff]
    %v342 = vld [vmem:[#allocation8 + $0x130] sm:$0xff]
    %v343 = vld [vmem:[#allocation8 + $0x138] sm:$0xff]
    %v344 = vld [vmem:[#allocation8 + $0x140] sm:$0xff]
    %v345 = vld [vmem:[#allocation8 + $0x148] sm:$0xff]
    %v346 = vld [vmem:[#allocation8 + $0x150] sm:$0xff]
    %v347 = vld [vmem:[#allocation8 + $0x158] sm:$0xff]
    %v348 = vld [vmem:[#allocation8 + $0x160] sm:$0xff]
    %v349 = vld [vmem:[#allocation8 + $0x168] sm:$0xff]
    %v350 = vld [vmem:[#allocation8 + $0x170] sm:$0xff]
    %v351 = vld [vmem:[#allocation8 + $0x178] sm:$0xff]
    %v352 = vld [vmem:[#allocation8 + $0x180] sm:$0xff]
    %v353 = vld [vmem:[#allocation8 + $0x188] sm:$0xff]
    %v354 = vld [vmem:[#allocation8 + $0x190] sm:$0xff]
    %v355 = vld [vmem:[#allocation8 + $0x198] sm:$0xff]
    %v356 = vld [vmem:[#allocation8 + $0x1a0] sm:$0xff]
    %v357 = vld [vmem:[#allocation8 + $0x1a8] sm:$0xff]
    %v358 = vld [vmem:[#allocation8 + $0x1b0] sm:$0xff]
    %v359 = vld [vmem:[#allocation8 + $0x1b8] sm:$0xff]
    %v360 = vld [vmem:[#allocation8 + $0x1c0] sm:$0xff]
    %v361 = vld [vmem:[#allocation8 + $0x1c8] sm:$0xff]
    %v362 = vld [vmem:[#allocation8 + $0x1d0] sm:$0xff]
    %v363 = vld [vmem:[#allocation8 + $0x1d8] sm:$0xff]
    %v364 = vld [vmem:[#allocation8 + $0x1e0] sm:$0xff]
    %v365 = vld [vmem:[#allocation8 + $0x1e8] sm:$0xff]
    %v366 = vld [vmem:[#allocation8 + $0x1f0] sm:$0xff]
    %v367 = vld [vmem:[#allocation8 + $0x1f8] sm:$0xff]
    %v368 = vld [vmem:[#allocation10] sm:$0xf]
    %v370 = vlaneseq
    %v371 = vshrl.u32 %v370, 7
    %v372 = vsub.s32 0, %v371
    %v373 = vrot.slane %v368, %v372
    %v374 = vlaneseq
    %v375 = vshrl.u32 %v374, 7
    %v376 = vsub.s32 1, %v375
    %v377 = vrot.slane %v368, %v376
    %v378 = vlaneseq
    %v379 = vshrl.u32 %v378, 7
    %v380 = vsub.s32 2, %v379
    %v381 = vrot.slane %v368, %v380
    %v382 = vlaneseq
    %v383 = vshrl.u32 %v382, 7
    %v384 = vsub.s32 3, %v383
    %v385 = vrot.slane %v368, %v384
    %v454 = vunpack.c.l.b16 %v304
    %v455 = vunpack.c.h.b16 %v304
    %v456 = vunpack.c.l.b16 %v305
    %v457 = vunpack.c.h.b16 %v305
    %v458 = vunpack.c.l.b16 %v306
    %v459 = vunpack.c.h.b16 %v306
    %v460 = vunpack.c.l.b16 %v307
    %v461 = vunpack.c.h.b16 %v307
    %v462 = vunpack.c.l.b16 %v308
    %v463 = vunpack.c.h.b16 %v308
    %v464 = vunpack.c.l.b16 %v309
    %v465 = vunpack.c.h.b16 %v309
    %v466 = vunpack.c.l.b16 %v310
    %v467 = vunpack.c.h.b16 %v310
    %v468 = vunpack.c.l.b16 %v311
    %v469 = vunpack.c.h.b16 %v311
    %v470 = vunpack.c.l.b16 %v312
    %v471 = vunpack.c.h.b16 %v312
    %v472 = vunpack.c.l.b16 %v313
    %v473 = vunpack.c.h.b16 %v313
    %v474 = vunpack.c.l.b16 %v314
    %v475 = vunpack.c.h.b16 %v314
    %v476 = vunpack.c.l.b16 %v315
    %v477 = vunpack.c.h.b16 %v315
    %v478 = vunpack.c.l.b16 %v316
    %v479 = vunpack.c.h.b16 %v316
    %v480 = vunpack.c.l.b16 %v317
    %v481 = vunpack.c.h.b16 %v317
    %v482 = vunpack.c.l.b16 %v318
    %v483 = vunpack.c.h.b16 %v318
    %v484 = vunpack.c.l.b16 %v319
    %v485 = vunpack.c.h.b16 %v319
    %v486 = vunpack.c.l.b16 %v320
    %v487 = vunpack.c.h.b16 %v320
    %v488 = vunpack.c.l.b16 %v321
    %v489 = vunpack.c.h.b16 %v321
    %v490 = vunpack.c.l.b16 %v322
    %v491 = vunpack.c.h.b16 %v322
    %v492 = vunpack.c.l.b16 %v323
    %v493 = vunpack.c.h.b16 %v323
    %v494 = vunpack.c.l.b16 %v324
    %v495 = vunpack.c.h.b16 %v324
    %v496 = vunpack.c.l.b16 %v325
    %v497 = vunpack.c.h.b16 %v325
    %v498 = vunpack.c.l.b16 %v326
    %v499 = vunpack.c.h.b16 %v326
    %v500 = vunpack.c.l.b16 %v327
    %v501 = vunpack.c.h.b16 %v327
    %v502 = vunpack.c.l.b16 %v328
    %v503 = vunpack.c.h.b16 %v328
    %v504 = vunpack.c.l.b16 %v329
    %v505 = vunpack.c.h.b16 %v329
    %v506 = vunpack.c.l.b16 %v330
    %v507 = vunpack.c.h.b16 %v330
    %v508 = vunpack.c.l.b16 %v331
    %v509 = vunpack.c.h.b16 %v331
    %v510 = vunpack.c.l.b16 %v332
    %v511 = vunpack.c.h.b16 %v332
    %v512 = vunpack.c.l.b16 %v333
    %v513 = vunpack.c.h.b16 %v333
    %v514 = vunpack.c.l.b16 %v334
    %v515 = vunpack.c.h.b16 %v334
    %v516 = vunpack.c.l.b16 %v335
    %v517 = vunpack.c.h.b16 %v335
    %v518 = vunpack.c.l.b16 %v336
    %v519 = vunpack.c.h.b16 %v336
    %v520 = vunpack.c.l.b16 %v337
    %v521 = vunpack.c.h.b16 %v337
    %v522 = vunpack.c.l.b16 %v338
    %v523 = vunpack.c.h.b16 %v338
    %v524 = vunpack.c.l.b16 %v339
    %v525 = vunpack.c.h.b16 %v339
    %v526 = vunpack.c.l.b16 %v340
    %v527 = vunpack.c.h.b16 %v340
    %v528 = vunpack.c.l.b16 %v341
    %v529 = vunpack.c.h.b16 %v341
    %v530 = vunpack.c.l.b16 %v342
    %v531 = vunpack.c.h.b16 %v342
    %v532 = vunpack.c.l.b16 %v343
    %v533 = vunpack.c.h.b16 %v343
    %v534 = vunpack.c.l.b16 %v344
    %v535 = vunpack.c.h.b16 %v344
    %v536 = vunpack.c.l.b16 %v345
    %v537 = vunpack.c.h.b16 %v345
    %v538 = vunpack.c.l.b16 %v346
    %v539 = vunpack.c.h.b16 %v346
    %v540 = vunpack.c.l.b16 %v347
    %v541 = vunpack.c.h.b16 %v347
    %v542 = vunpack.c.l.b16 %v348
    %v543 = vunpack.c.h.b16 %v348
    %v544 = vunpack.c.l.b16 %v349
    %v545 = vunpack.c.h.b16 %v349
    %v546 = vunpack.c.l.b16 %v350
    %v547 = vunpack.c.h.b16 %v350
    %v548 = vunpack.c.l.b16 %v351
    %v549 = vunpack.c.h.b16 %v351
    %v550 = vunpack.c.l.b16 %v352
    %v551 = vunpack.c.h.b16 %v352
    %v552 = vunpack.c.l.b16 %v353
    %v553 = vunpack.c.h.b16 %v353
    %v554 = vunpack.c.l.b16 %v354
    %v555 = vunpack.c.h.b16 %v354
    %v556 = vunpack.c.l.b16 %v355
    %v557 = vunpack.c.h.b16 %v355
    %v558 = vunpack.c.l.b16 %v356
    %v559 = vunpack.c.h.b16 %v356
    %v560 = vunpack.c.l.b16 %v357
    %v561 = vunpack.c.h.b16 %v357
    %v562 = vunpack.c.l.b16 %v358
    %v563 = vunpack.c.h.b16 %v358
    %v564 = vunpack.c.l.b16 %v359
    %v565 = vunpack.c.h.b16 %v359
    %v566 = vunpack.c.l.b16 %v360
    %v567 = vunpack.c.h.b16 %v360
    %v568 = vunpack.c.l.b16 %v361
    %v569 = vunpack.c.h.b16 %v361
    %v570 = vunpack.c.l.b16 %v362
    %v571 = vunpack.c.h.b16 %v362
    %v572 = vunpack.c.l.b16 %v363
    %v573 = vunpack.c.h.b16 %v363
    %v574 = vunpack.c.l.b16 %v364
    %v575 = vunpack.c.h.b16 %v364
    %v576 = vunpack.c.l.b16 %v365
    %v577 = vunpack.c.h.b16 %v365
    %v578 = vunpack.c.l.b16 %v366
    %v579 = vunpack.c.h.b16 %v366
    %v580 = vunpack.c.l.b16 %v367
    %v581 = vunpack.c.h.b16 %v367
    %v582 = vpack.c.b16 %v458, %v454
    %v583 = vpack.c.b16 %v459, %v455
    %v584 = vpack.c.b16 %v460, %v456
    %v585 = vpack.c.b16 %v461, %v457
    %v586 = vpack.c.b16 %v466, %v462
    %v587 = vpack.c.b16 %v467, %v463
    %v588 = vpack.c.b16 %v468, %v464
    %v589 = vpack.c.b16 %v469, %v465
    %v590 = vpack.c.b16 %v474, %v470
    %v591 = vpack.c.b16 %v475, %v471
    %v592 = vpack.c.b16 %v476, %v472
    %v593 = vpack.c.b16 %v477, %v473
    %v594 = vpack.c.b16 %v482, %v478
    %v595 = vpack.c.b16 %v483, %v479
    %v596 = vpack.c.b16 %v484, %v480
    %v597 = vpack.c.b16 %v485, %v481
    %v598 = vpack.c.b16 %v490, %v486
    %v599 = vpack.c.b16 %v491, %v487
    %v600 = vpack.c.b16 %v492, %v488
    %v601 = vpack.c.b16 %v493, %v489
    %v602 = vpack.c.b16 %v498, %v494
    %v603 = vpack.c.b16 %v499, %v495
    %v604 = vpack.c.b16 %v500, %v496
    %v605 = vpack.c.b16 %v501, %v497
    %v606 = vpack.c.b16 %v506, %v502
    %v607 = vpack.c.b16 %v507, %v503
    %v608 = vpack.c.b16 %v508, %v504
    %v609 = vpack.c.b16 %v509, %v505
    %v610 = vpack.c.b16 %v514, %v510
    %v611 = vpack.c.b16 %v515, %v511
    %v612 = vpack.c.b16 %v516, %v512
    %v613 = vpack.c.b16 %v517, %v513
    %v614 = vpack.c.b16 %v522, %v518
    %v615 = vpack.c.b16 %v523, %v519
    %v616 = vpack.c.b16 %v524, %v520
    %v617 = vpack.c.b16 %v525, %v521
    %v618 = vpack.c.b16 %v530, %v526
    %v619 = vpack.c.b16 %v531, %v527
    %v620 = vpack.c.b16 %v532, %v528
    %v621 = vpack.c.b16 %v533, %v529
    %v622 = vpack.c.b16 %v538, %v534
    %v623 = vpack.c.b16 %v539, %v535
    %v624 = vpack.c.b16 %v540, %v536
    %v625 = vpack.c.b16 %v541, %v537
    %v626 = vpack.c.b16 %v546, %v542
    %v627 = vpack.c.b16 %v547, %v543
    %v628 = vpack.c.b16 %v548, %v544
    %v629 = vpack.c.b16 %v549, %v545
    %v630 = vpack.c.b16 %v554, %v550
    %v631 = vpack.c.b16 %v555, %v551
    %v632 = vpack.c.b16 %v556, %v552
    %v633 = vpack.c.b16 %v557, %v553
    %v634 = vpack.c.b16 %v562, %v558
    %v635 = vpack.c.b16 %v563, %v559
    %v636 = vpack.c.b16 %v564, %v560
    %v637 = vpack.c.b16 %v565, %v561
    %v638 = vpack.c.b16 %v570, %v566
    %v639 = vpack.c.b16 %v571, %v567
    %v640 = vpack.c.b16 %v572, %v568
    %v641 = vpack.c.b16 %v573, %v569
    %v642 = vpack.c.b16 %v578, %v574
    %v643 = vpack.c.b16 %v579, %v575
    %v644 = vpack.c.b16 %v580, %v576
    %v645 = vpack.c.b16 %v581, %v577
    %710 = vmatprep.subr.bf16.mxu0 %v583
    %711 = vmatpush1.bf16.msra.mxu0 %v582
    %712 = vmatprep.subr.bf16.mxu0 %v587
    %713 = vmatpush1.bf16.msra.mxu0 %v586
    %714 = vmatprep.subr.bf16.mxu0 %v591
    %715 = vmatpush1.bf16.msra.mxu0 %v590
    %716 = vmatprep.subr.bf16.mxu0 %v595
    %717 = vmatpush1.bf16.msra.mxu0 %v594
    %718 = vmatprep.subr.bf16.mxu0 %v599
    %719 = vmatpush1.bf16.msra.mxu0 %v598
    %720 = vmatprep.subr.bf16.mxu0 %v603
    %721 = vmatpush1.bf16.msra.mxu0 %v602
    %722 = vmatprep.subr.bf16.mxu0 %v607
    %723 = vmatpush1.bf16.msra.mxu0 %v606
    %724 = vmatprep.subr.bf16.mxu0 %v611
    %725 = vmatpush1.bf16.msra.mxu0 %v610
    %726 = vmatprep.subr.bf16.mxu0 %v615
    %727 = vmatpush1.bf16.msra.mxu0 %v614
    %728 = vmatprep.subr.bf16.mxu0 %v619
    %729 = vmatpush1.bf16.msra.mxu0 %v618
    %730 = vmatprep.subr.bf16.mxu0 %v623
    %731 = vmatpush1.bf16.msra.mxu0 %v622
    %732 = vmatprep.subr.bf16.mxu0 %v627
    %733 = vmatpush1.bf16.msra.mxu0 %v626
    %734 = vmatprep.subr.bf16.mxu0 %v631
    %735 = vmatpush1.bf16.msra.mxu0 %v630
    %736 = vmatprep.subr.bf16.mxu0 %v635
    %737 = vmatpush1.bf16.msra.mxu0 %v634
    %738 = vmatprep.subr.bf16.mxu0 %v639
    %739 = vmatpush1.bf16.msra.mxu0 %v638
    %740 = vmatprep.subr.bf16.mxu0 %v643
    %741 = vmatpush1.bf16.msra.mxu0 %v642
    %742 = vmatprep.mubr.bf16.mxu0 %v303
    %743 = vmatmul.mubr.bf16.gmra.mrb[0].mxu0 %v302
    %v744 = vpop.f32.mrb[0].mxu0
    %v745 = vadd.f32 %v373, %v744
    %v746 = vpop.f32.mrb[0].mxu0
    %v747 = vadd.f32 %v377, %v746
    %v748 = vpop.f32.mrb[0].mxu0
    %v749 = vpop.f32.mrb[0].mxu0
    %750 = vdwg.mxu0
    %751 = vmatprep.subr.bf16.mxu0 %v585
    %752 = vmatpush1.bf16.msra.mxu0 %v584
    %753 = vmatprep.subr.bf16.mxu0 %v589
    %754 = vmatpush1.bf16.msra.mxu0 %v588
    %755 = vmatprep.subr.bf16.mxu0 %v593
    %756 = vmatpush1.bf16.msra.mxu0 %v592
    %757 = vmatprep.subr.bf16.mxu0 %v597
    %758 = vmatpush1.bf16.msra.mxu0 %v596
    %759 = vmatprep.subr.bf16.mxu0 %v601
    %760 = vmatpush1.bf16.msra.mxu0 %v600
    %761 = vmatprep.subr.bf16.mxu0 %v605
    %762 = vmatpush1.bf16.msra.mxu0 %v604
    %763 = vmatprep.subr.bf16.mxu0 %v609
    %764 = vmatpush1.bf16.msra.mxu0 %v608
    %765 = vmatprep.subr.bf16.mxu0 %v613
    %766 = vmatpush1.bf16.msra.mxu0 %v612
    %767 = vmatprep.subr.bf16.mxu0 %v617
    %768 = vmatpush1.bf16.msra.mxu0 %v616
    %769 = vmatprep.subr.bf16.mxu0 %v621
    %770 = vmatpush1.bf16.msra.mxu0 %v620
    %771 = vmatprep.subr.bf16.mxu0 %v625
    %772 = vmatpush1.bf16.msra.mxu0 %v624
    %773 = vmatprep.subr.bf16.mxu0 %v629
    %774 = vmatpush1.bf16.msra.mxu0 %v628
    %775 = vmatprep.subr.bf16.mxu0 %v633
    %776 = vmatpush1.bf16.msra.mxu0 %v632
    %777 = vmatprep.subr.bf16.mxu0 %v637
    %778 = vmatpush1.bf16.msra.mxu0 %v636
    %779 = vmatprep.subr.bf16.mxu0 %v641
    %780 = vmatpush1.bf16.msra.mxu0 %v640
    %781 = vmatprep.subr.bf16.mxu0 %v645
    %782 = vmatpush1.bf16.msra.mxu0 %v644
    %783 = vmatprep.mubr.bf16.mxu0 %v303
    %784 = vmatmul.mubr.bf16.gmra.mrb[0].mxu0 %v302
    %v785 = vpop.f32.mrb[0].mxu0
    %v786 = vadd.f32 %v381, %v785
    %v787 = vpop.f32.mrb[0].mxu0
    %v788 = vadd.f32 %v385, %v787
    %v789 = vpop.f32.mrb[0].mxu0
    %v790 = vpop.f32.mrb[0].mxu0
    %791 = vdwg.mxu0
    %vm792 = vcmp.ge.f32.partialorder %v745, 0.0
    %vm793 = vcmp.ge.f32.partialorder %v747, 0.0
    %vm794 = vcmp.ge.f32.partialorder %v786, 0.0
    %vm795 = vcmp.ge.f32.partialorder %v788, 0.0
    %v796 = vmul.f32 %v745, 0.2
    %v797 = vmul.f32 %v747, 0.2
    %v798 = vmul.f32 %v786, 0.2
    %v799 = vmul.f32 %v788, 0.2
    %v800 = vsel %vm792, %v745, %v796
    %v801 = vsel %vm793, %v747, %v797
    %v802 = vsel %vm794, %v786, %v798
    %v803 = vsel %vm795, %v788, %v799
    %v804 = vpack.c.bf16 %v800, %v800
    %v805 = vpack.c.bf16 %v801, %v801
    %v806 = vpack.c.bf16 %v802, %v802
    %v807 = vpack.c.bf16 %v803, %v803
    %v808 = vld [vmem:[#allocation11] sm:$0xff]
    %v809 = vld [vmem:[#allocation11 + $0x8] sm:$0xff]
    %v810 = vld [vmem:[#allocation11 + $0x10] sm:$0xff]
    %v811 = vld [vmem:[#allocation11 + $0x18] sm:$0xff]
    %v812 = vld [vmem:[#allocation11 + $0x20] sm:$0xff]
    %v813 = vld [vmem:[#allocation11 + $0x28] sm:$0xff]
    %v814 = vld [vmem:[#allocation11 + $0x30] sm:$0xff]
    %v815 = vld [vmem:[#allocation11 + $0x38] sm:$0xff]
    %v816 = vld [vmem:[#allocation11 + $0x40] sm:$0xff]
    %v817 = vld [vmem:[#allocation11 + $0x48] sm:$0xff]
    %v818 = vld [vmem:[#allocation11 + $0x50] sm:$0xff]
    %v819 = vld [vmem:[#allocation11 + $0x58] sm:$0xff]
    %v820 = vld [vmem:[#allocation11 + $0x60] sm:$0xff]
    %v821 = vld [vmem:[#allocation11 + $0x68] sm:$0xff]
    %v822 = vld [vmem:[#allocation11 + $0x70] sm:$0xff]
    %v823 = vld [vmem:[#allocation11 + $0x78] sm:$0xff]
    %v824 = vld [vmem:[#allocation11 + $0x80] sm:$0xff]
    %v825 = vld [vmem:[#allocation11 + $0x88] sm:$0xff]
    %v826 = vld [vmem:[#allocation11 + $0x90] sm:$0xff]
    %v827 = vld [vmem:[#allocation11 + $0x98] sm:$0xff]
    %v828 = vld [vmem:[#allocation11 + $0xa0] sm:$0xff]
    %v829 = vld [vmem:[#allocation11 + $0xa8] sm:$0xff]
    %v830 = vld [vmem:[#allocation11 + $0xb0] sm:$0xff]
    %v831 = vld [vmem:[#allocation11 + $0xb8] sm:$0xff]
    %v832 = vld [vmem:[#allocation11 + $0xc0] sm:$0xff]
    %v833 = vld [vmem:[#allocation11 + $0xc8] sm:$0xff]
    %v834 = vld [vmem:[#allocation11 + $0xd0] sm:$0xff]
    %v835 = vld [vmem:[#allocation11 + $0xd8] sm:$0xff]
    %v836 = vld [vmem:[#allocation11 + $0xe0] sm:$0xff]
    %v837 = vld [vmem:[#allocation11 + $0xe8] sm:$0xff]
    %v838 = vld [vmem:[#allocation11 + $0xf0] sm:$0xff]
    %v839 = vld [vmem:[#allocation11 + $0xf8] sm:$0xff]
    %v840 = vld [vmem:[#allocation11 + $0x100] sm:$0xff]
    %v841 = vld [vmem:[#allocation11 + $0x108] sm:$0xff]
    %v842 = vld [vmem:[#allocation11 + $0x110] sm:$0xff]
    %v843 = vld [vmem:[#allocation11 + $0x118] sm:$0xff]
    %v844 = vld [vmem:[#allocation11 + $0x120] sm:$0xff]
    %v845 = vld [vmem:[#allocation11 + $0x128] sm:$0xff]
    %v846 = vld [vmem:[#allocation11 + $0x130] sm:$0xff]
    %v847 = vld [vmem:[#allocation11 + $0x138] sm:$0xff]
    %v848 = vld [vmem:[#allocation11 + $0x140] sm:$0xff]
    %v849 = vld [vmem:[#allocation11 + $0x148] sm:$0xff]
    %v850 = vld [vmem:[#allocation11 + $0x150] sm:$0xff]
    %v851 = vld [vmem:[#allocation11 + $0x158] sm:$0xff]
    %v852 = vld [vmem:[#allocation11 + $0x160] sm:$0xff]
    %v853 = vld [vmem:[#allocation11 + $0x168] sm:$0xff]
    %v854 = vld [vmem:[#allocation11 + $0x170] sm:$0xff]
    %v855 = vld [vmem:[#allocation11 + $0x178] sm:$0xff]
    %v856 = vld [vmem:[#allocation11 + $0x180] sm:$0xff]
    %v857 = vld [vmem:[#allocation11 + $0x188] sm:$0xff]
    %v858 = vld [vmem:[#allocation11 + $0x190] sm:$0xff]
    %v859 = vld [vmem:[#allocation11 + $0x198] sm:$0xff]
    %v860 = vld [vmem:[#allocation11 + $0x1a0] sm:$0xff]
    %v861 = vld [vmem:[#allocation11 + $0x1a8] sm:$0xff]
    %v862 = vld [vmem:[#allocation11 + $0x1b0] sm:$0xff]
    %v863 = vld [vmem:[#allocation11 + $0x1b8] sm:$0xff]
    %v864 = vld [vmem:[#allocation11 + $0x1c0] sm:$0xff]
    %v865 = vld [vmem:[#allocation11 + $0x1c8] sm:$0xff]
    %v866 = vld [vmem:[#allocation11 + $0x1d0] sm:$0xff]
    %v867 = vld [vmem:[#allocation11 + $0x1d8] sm:$0xff]
    %v868 = vld [vmem:[#allocation11 + $0x1e0] sm:$0xff]
    %v869 = vld [vmem:[#allocation11 + $0x1e8] sm:$0xff]
    %v870 = vld [vmem:[#allocation11 + $0x1f0] sm:$0xff]
    %v871 = vld [vmem:[#allocation11 + $0x1f8] sm:$0xff]
    %v872 = vld [vmem:[#allocation11 + $0x200] sm:$0xff]
    %v873 = vld [vmem:[#allocation11 + $0x208] sm:$0xff]
    %v874 = vld [vmem:[#allocation11 + $0x210] sm:$0xff]
    %v875 = vld [vmem:[#allocation11 + $0x218] sm:$0xff]
    %v876 = vld [vmem:[#allocation11 + $0x220] sm:$0xff]
    %v877 = vld [vmem:[#allocation11 + $0x228] sm:$0xff]
    %v878 = vld [vmem:[#allocation11 + $0x230] sm:$0xff]
    %v879 = vld [vmem:[#allocation11 + $0x238] sm:$0xff]
    %v880 = vld [vmem:[#allocation11 + $0x240] sm:$0xff]
    %v881 = vld [vmem:[#allocation11 + $0x248] sm:$0xff]
    %v882 = vld [vmem:[#allocation11 + $0x250] sm:$0xff]
    %v883 = vld [vmem:[#allocation11 + $0x258] sm:$0xff]
    %v884 = vld [vmem:[#allocation11 + $0x260] sm:$0xff]
    %v885 = vld [vmem:[#allocation11 + $0x268] sm:$0xff]
    %v886 = vld [vmem:[#allocation11 + $0x270] sm:$0xff]
    %v887 = vld [vmem:[#allocation11 + $0x278] sm:$0xff]
    %v888 = vld [vmem:[#allocation11 + $0x280] sm:$0xff]
    %v889 = vld [vmem:[#allocation11 + $0x288] sm:$0xff]
    %v890 = vld [vmem:[#allocation11 + $0x290] sm:$0xff]
    %v891 = vld [vmem:[#allocation11 + $0x298] sm:$0xff]
    %v892 = vld [vmem:[#allocation11 + $0x2a0] sm:$0xff]
    %v893 = vld [vmem:[#allocation11 + $0x2a8] sm:$0xff]
    %v894 = vld [vmem:[#allocation11 + $0x2b0] sm:$0xff]
    %v895 = vld [vmem:[#allocation11 + $0x2b8] sm:$0xff]
    %v896 = vld [vmem:[#allocation11 + $0x2c0] sm:$0xff]
    %v897 = vld [vmem:[#allocation11 + $0x2c8] sm:$0xff]
    %v898 = vld [vmem:[#allocation11 + $0x2d0] sm:$0xff]
    %v899 = vld [vmem:[#allocation11 + $0x2d8] sm:$0xff]
    %v900 = vld [vmem:[#allocation11 + $0x2e0] sm:$0xff]
    %v901 = vld [vmem:[#allocation11 + $0x2e8] sm:$0xff]
    %v902 = vld [vmem:[#allocation11 + $0x2f0] sm:$0xff]
    %v903 = vld [vmem:[#allocation11 + $0x2f8] sm:$0xff]
    %v904 = vld [vmem:[#allocation11 + $0x300] sm:$0xff]
    %v905 = vld [vmem:[#allocation11 + $0x308] sm:$0xff]
    %v906 = vld [vmem:[#allocation11 + $0x310] sm:$0xff]
    %v907 = vld [vmem:[#allocation11 + $0x318] sm:$0xff]
    %v908 = vld [vmem:[#allocation11 + $0x320] sm:$0xff]
    %v909 = vld [vmem:[#allocation11 + $0x328] sm:$0xff]
    %v910 = vld [vmem:[#allocation11 + $0x330] sm:$0xff]
    %v911 = vld [vmem:[#allocation11 + $0x338] sm:$0xff]
    %v912 = vld [vmem:[#allocation11 + $0x340] sm:$0xff]
    %v913 = vld [vmem:[#allocation11 + $0x348] sm:$0xff]
    %v914 = vld [vmem:[#allocation11 + $0x350] sm:$0xff]
    %v915 = vld [vmem:[#allocation11 + $0x358] sm:$0xff]
    %v916 = vld [vmem:[#allocation11 + $0x360] sm:$0xff]
    %v917 = vld [vmem:[#allocation11 + $0x368] sm:$0xff]
    %v918 = vld [vmem:[#allocation11 + $0x370] sm:$0xff]
    %v919 = vld [vmem:[#allocation11 + $0x378] sm:$0xff]
    %v920 = vld [vmem:[#allocation11 + $0x380] sm:$0xff]
    %v921 = vld [vmem:[#allocation11 + $0x388] sm:$0xff]
    %v922 = vld [vmem:[#allocation11 + $0x390] sm:$0xff]
    %v923 = vld [vmem:[#allocation11 + $0x398] sm:$0xff]
    %v924 = vld [vmem:[#allocation11 + $0x3a0] sm:$0xff]
    %v925 = vld [vmem:[#allocation11 + $0x3a8] sm:$0xff]
    %v926 = vld [vmem:[#allocation11 + $0x3b0] sm:$0xff]
    %v927 = vld [vmem:[#allocation11 + $0x3b8] sm:$0xff]
    %v928 = vld [vmem:[#allocation11 + $0x3c0] sm:$0xff]
    %v929 = vld [vmem:[#allocation11 + $0x3c8] sm:$0xff]
    %v930 = vld [vmem:[#allocation11 + $0x3d0] sm:$0xff]
    %v931 = vld [vmem:[#allocation11 + $0x3d8] sm:$0xff]
    %v932 = vld [vmem:[#allocation11 + $0x3e0] sm:$0xff]
    %v933 = vld [vmem:[#allocation11 + $0x3e8] sm:$0xff]
    %v934 = vld [vmem:[#allocation11 + $0x3f0] sm:$0xff]
    %v935 = vld [vmem:[#allocation11 + $0x3f8] sm:$0xff]
    %v936 = vld [vmem:[#allocation11 + $0x400] sm:$0xff]
    %v937 = vld [vmem:[#allocation11 + $0x408] sm:$0xff]
    %v938 = vld [vmem:[#allocation11 + $0x410] sm:$0xff]
    %v939 = vld [vmem:[#allocation11 + $0x418] sm:$0xff]
    %v940 = vld [vmem:[#allocation11 + $0x420] sm:$0xff]
    %v941 = vld [vmem:[#allocation11 + $0x428] sm:$0xff]
    %v942 = vld [vmem:[#allocation11 + $0x430] sm:$0xff]
    %v943 = vld [vmem:[#allocation11 + $0x438] sm:$0xff]
    %v944 = vld [vmem:[#allocation11 + $0x440] sm:$0xff]
    %v945 = vld [vmem:[#allocation11 + $0x448] sm:$0xff]
    %v946 = vld [vmem:[#allocation11 + $0x450] sm:$0xff]
    %v947 = vld [vmem:[#allocation11 + $0x458] sm:$0xff]
    %v948 = vld [vmem:[#allocation11 + $0x460] sm:$0xff]
    %v949 = vld [vmem:[#allocation11 + $0x468] sm:$0xff]
    %v950 = vld [vmem:[#allocation11 + $0x470] sm:$0xff]
    %v951 = vld [vmem:[#allocation11 + $0x478] sm:$0xff]
    %v952 = vld [vmem:[#allocation11 + $0x480] sm:$0xff]
    %v953 = vld [vmem:[#allocation11 + $0x488] sm:$0xff]
    %v954 = vld [vmem:[#allocation11 + $0x490] sm:$0xff]
    %v955 = vld [vmem:[#allocation11 + $0x498] sm:$0xff]
    %v956 = vld [vmem:[#allocation11 + $0x4a0] sm:$0xff]
    %v957 = vld [vmem:[#allocation11 + $0x4a8] sm:$0xff]
    %v958 = vld [vmem:[#allocation11 + $0x4b0] sm:$0xff]
    %v959 = vld [vmem:[#allocation11 + $0x4b8] sm:$0xff]
    %v960 = vld [vmem:[#allocation11 + $0x4c0] sm:$0xff]
    %v961 = vld [vmem:[#allocation11 + $0x4c8] sm:$0xff]
    %v962 = vld [vmem:[#allocation11 + $0x4d0] sm:$0xff]
    %v963 = vld [vmem:[#allocation11 + $0x4d8] sm:$0xff]
    %v964 = vld [vmem:[#allocation11 + $0x4e0] sm:$0xff]
    %v965 = vld [vmem:[#allocation11 + $0x4e8] sm:$0xff]
    %v966 = vld [vmem:[#allocation11 + $0x4f0] sm:$0xff]
    %v967 = vld [vmem:[#allocation11 + $0x4f8] sm:$0xff]
    %v968 = vld [vmem:[#allocation11 + $0x500] sm:$0xff]
    %v969 = vld [vmem:[#allocation11 + $0x508] sm:$0xff]
    %v970 = vld [vmem:[#allocation11 + $0x510] sm:$0xff]
    %v971 = vld [vmem:[#allocation11 + $0x518] sm:$0xff]
    %v972 = vld [vmem:[#allocation11 + $0x520] sm:$0xff]
    %v973 = vld [vmem:[#allocation11 + $0x528] sm:$0xff]
    %v974 = vld [vmem:[#allocation11 + $0x530] sm:$0xff]
    %v975 = vld [vmem:[#allocation11 + $0x538] sm:$0xff]
    %v976 = vld [vmem:[#allocation11 + $0x540] sm:$0xff]
    %v977 = vld [vmem:[#allocation11 + $0x548] sm:$0xff]
    %v978 = vld [vmem:[#allocation11 + $0x550] sm:$0xff]
    %v979 = vld [vmem:[#allocation11 + $0x558] sm:$0xff]
    %v980 = vld [vmem:[#allocation11 + $0x560] sm:$0xff]
    %v981 = vld [vmem:[#allocation11 + $0x568] sm:$0xff]
    %v982 = vld [vmem:[#allocation11 + $0x570] sm:$0xff]
    %v983 = vld [vmem:[#allocation11 + $0x578] sm:$0xff]
    %v984 = vld [vmem:[#allocation11 + $0x580] sm:$0xff]
    %v985 = vld [vmem:[#allocation11 + $0x588] sm:$0xff]
    %v986 = vld [vmem:[#allocation11 + $0x590] sm:$0xff]
    %v987 = vld [vmem:[#allocation11 + $0x598] sm:$0xff]
    %v988 = vld [vmem:[#allocation11 + $0x5a0] sm:$0xff]
    %v989 = vld [vmem:[#allocation11 + $0x5a8] sm:$0xff]
    %v990 = vld [vmem:[#allocation11 + $0x5b0] sm:$0xff]
    %v991 = vld [vmem:[#allocation11 + $0x5b8] sm:$0xff]
    %v992 = vld [vmem:[#allocation11 + $0x5c0] sm:$0xff]
    %v993 = vld [vmem:[#allocation11 + $0x5c8] sm:$0xff]
    %v994 = vld [vmem:[#allocation11 + $0x5d0] sm:$0xff]
    %v995 = vld [vmem:[#allocation11 + $0x5d8] sm:$0xff]
    %v996 = vld [vmem:[#allocation11 + $0x5e0] sm:$0xff]
    %v997 = vld [vmem:[#allocation11 + $0x5e8] sm:$0xff]
    %v998 = vld [vmem:[#allocation11 + $0x5f0] sm:$0xff]
    %v999 = vld [vmem:[#allocation11 + $0x5f8] sm:$0xff]
    %v1000 = vld [vmem:[#allocation11 + $0x600] sm:$0xff]
    %v1001 = vld [vmem:[#allocation11 + $0x608] sm:$0xff]
    %v1002 = vld [vmem:[#allocation11 + $0x610] sm:$0xff]
    %v1003 = vld [vmem:[#allocation11 + $0x618] sm:$0xff]
    %v1004 = vld [vmem:[#allocation11 + $0x620] sm:$0xff]
    %v1005 = vld [vmem:[#allocation11 + $0x628] sm:$0xff]
    %v1006 = vld [vmem:[#allocation11 + $0x630] sm:$0xff]
    %v1007 = vld [vmem:[#allocation11 + $0x638] sm:$0xff]
    %v1008 = vld [vmem:[#allocation11 + $0x640] sm:$0xff]
    %v1009 = vld [vmem:[#allocation11 + $0x648] sm:$0xff]
    %v1010 = vld [vmem:[#allocation11 + $0x650] sm:$0xff]
    %v1011 = vld [vmem:[#allocation11 + $0x658] sm:$0xff]
    %v1012 = vld [vmem:[#allocation11 + $0x660] sm:$0xff]
    %v1013 = vld [vmem:[#allocation11 + $0x668] sm:$0xff]
    %v1014 = vld [vmem:[#allocation11 + $0x670] sm:$0xff]
    %v1015 = vld [vmem:[#allocation11 + $0x678] sm:$0xff]
    %v1016 = vld [vmem:[#allocation11 + $0x680] sm:$0xff]
    %v1017 = vld [vmem:[#allocation11 + $0x688] sm:$0xff]
    %v1018 = vld [vmem:[#allocation11 + $0x690] sm:$0xff]
    %v1019 = vld [vmem:[#allocation11 + $0x698] sm:$0xff]
    %v1020 = vld [vmem:[#allocation11 + $0x6a0] sm:$0xff]
    %v1021 = vld [vmem:[#allocation11 + $0x6a8] sm:$0xff]
    %v1022 = vld [vmem:[#allocation11 + $0x6b0] sm:$0xff]
    %v1023 = vld [vmem:[#allocation11 + $0x6b8] sm:$0xff]
    %v1024 = vld [vmem:[#allocation11 + $0x6c0] sm:$0xff]
    %v1025 = vld [vmem:[#allocation11 + $0x6c8] sm:$0xff]
    %v1026 = vld [vmem:[#allocation11 + $0x6d0] sm:$0xff]
    %v1027 = vld [vmem:[#allocation11 + $0x6d8] sm:$0xff]
    %v1028 = vld [vmem:[#allocation11 + $0x6e0] sm:$0xff]
    %v1029 = vld [vmem:[#allocation11 + $0x6e8] sm:$0xff]
    %v1030 = vld [vmem:[#allocation11 + $0x6f0] sm:$0xff]
    %v1031 = vld [vmem:[#allocation11 + $0x6f8] sm:$0xff]
    %v1032 = vld [vmem:[#allocation11 + $0x700] sm:$0xff]
    %v1033 = vld [vmem:[#allocation11 + $0x708] sm:$0xff]
    %v1034 = vld [vmem:[#allocation11 + $0x710] sm:$0xff]
    %v1035 = vld [vmem:[#allocation11 + $0x718] sm:$0xff]
    %v1036 = vld [vmem:[#allocation11 + $0x720] sm:$0xff]
    %v1037 = vld [vmem:[#allocation11 + $0x728] sm:$0xff]
    %v1038 = vld [vmem:[#allocation11 + $0x730] sm:$0xff]
    %v1039 = vld [vmem:[#allocation11 + $0x738] sm:$0xff]
    %v1040 = vld [vmem:[#allocation11 + $0x740] sm:$0xff]
    %v1041 = vld [vmem:[#allocation11 + $0x748] sm:$0xff]
    %v1042 = vld [vmem:[#allocation11 + $0x750] sm:$0xff]
    %v1043 = vld [vmem:[#allocation11 + $0x758] sm:$0xff]
    %v1044 = vld [vmem:[#allocation11 + $0x760] sm:$0xff]
    %v1045 = vld [vmem:[#allocation11 + $0x768] sm:$0xff]
    %v1046 = vld [vmem:[#allocation11 + $0x770] sm:$0xff]
    %v1047 = vld [vmem:[#allocation11 + $0x778] sm:$0xff]
    %v1048 = vld [vmem:[#allocation11 + $0x780] sm:$0xff]
    %v1049 = vld [vmem:[#allocation11 + $0x788] sm:$0xff]
    %v1050 = vld [vmem:[#allocation11 + $0x790] sm:$0xff]
    %v1051 = vld [vmem:[#allocation11 + $0x798] sm:$0xff]
    %v1052 = vld [vmem:[#allocation11 + $0x7a0] sm:$0xff]
    %v1053 = vld [vmem:[#allocation11 + $0x7a8] sm:$0xff]
    %v1054 = vld [vmem:[#allocation11 + $0x7b0] sm:$0xff]
    %v1055 = vld [vmem:[#allocation11 + $0x7b8] sm:$0xff]
    %v1056 = vld [vmem:[#allocation11 + $0x7c0] sm:$0xff]
    %v1057 = vld [vmem:[#allocation11 + $0x7c8] sm:$0xff]
    %v1058 = vld [vmem:[#allocation11 + $0x7d0] sm:$0xff]
    %v1059 = vld [vmem:[#allocation11 + $0x7d8] sm:$0xff]
    %v1060 = vld [vmem:[#allocation11 + $0x7e0] sm:$0xff]
    %v1061 = vld [vmem:[#allocation11 + $0x7e8] sm:$0xff]
    %v1062 = vld [vmem:[#allocation11 + $0x7f0] sm:$0xff]
    %v1063 = vld [vmem:[#allocation11 + $0x7f8] sm:$0xff]
    %v1064 = vld [vmem:[#allocation13] sm:$0xff]
    %v1066 = vlaneseq
    %v1067 = vshrl.u32 %v1066, 7
    %v1068 = vsub.s32 0, %v1067
    %v1069 = vrot.slane %v1064, %v1068
    %v1070 = vlaneseq
    %v1071 = vshrl.u32 %v1070, 7
    %v1072 = vsub.s32 1, %v1071
    %v1073 = vrot.slane %v1064, %v1072
    %v1074 = vlaneseq
    %v1075 = vshrl.u32 %v1074, 7
    %v1076 = vsub.s32 2, %v1075
    %v1077 = vrot.slane %v1064, %v1076
    %v1078 = vlaneseq
    %v1079 = vshrl.u32 %v1078, 7
    %v1080 = vsub.s32 3, %v1079
    %v1081 = vrot.slane %v1064, %v1080
    %v1082 = vlaneseq
    %v1083 = vshrl.u32 %v1082, 7
    %v1084 = vsub.s32 4, %v1083
    %v1085 = vrot.slane %v1064, %v1084
    %v1086 = vlaneseq
    %v1087 = vshrl.u32 %v1086, 7
    %v1088 = vsub.s32 5, %v1087
    %v1089 = vrot.slane %v1064, %v1088
    %v1090 = vlaneseq
    %v1091 = vshrl.u32 %v1090, 7
    %v1092 = vsub.s32 6, %v1091
    %v1093 = vrot.slane %v1064, %v1092
    %v1094 = vlaneseq
    %v1095 = vshrl.u32 %v1094, 7
    %v1096 = vsub.s32 7, %v1095
    %v1097 = vrot.slane %v1064, %v1096
    %v1362 = vunpack.c.l.b16 %v808
    %v1363 = vunpack.c.h.b16 %v808
    %v1364 = vunpack.c.l.b16 %v809
    %v1365 = vunpack.c.h.b16 %v809
    %v1366 = vunpack.c.l.b16 %v810
    %v1367 = vunpack.c.h.b16 %v810
    %v1368 = vunpack.c.l.b16 %v811
    %v1369 = vunpack.c.h.b16 %v811
    %v1370 = vunpack.c.l.b16 %v812
    %v1371 = vunpack.c.h.b16 %v812
    %v1372 = vunpack.c.l.b16 %v813
    %v1373 = vunpack.c.h.b16 %v813
    %v1374 = vunpack.c.l.b16 %v814
    %v1375 = vunpack.c.h.b16 %v814
    %v1376 = vunpack.c.l.b16 %v815
    %v1377 = vunpack.c.h.b16 %v815
    %v1378 = vunpack.c.l.b16 %v816
    %v1379 = vunpack.c.h.b16 %v816
    %v1380 = vunpack.c.l.b16 %v817
    %v1381 = vunpack.c.h.b16 %v817
    %v1382 = vunpack.c.l.b16 %v818
    %v1383 = vunpack.c.h.b16 %v818
    %v1384 = vunpack.c.l.b16 %v819
    %v1385 = vunpack.c.h.b16 %v819
    %v1386 = vunpack.c.l.b16 %v820
    %v1387 = vunpack.c.h.b16 %v820
    %v1388 = vunpack.c.l.b16 %v821
    %v1389 = vunpack.c.h.b16 %v821
    %v1390 = vunpack.c.l.b16 %v822
    %v1391 = vunpack.c.h.b16 %v822
    %v1392 = vunpack.c.l.b16 %v823
    %v1393 = vunpack.c.h.b16 %v823
    %v1394 = vunpack.c.l.b16 %v824
    %v1395 = vunpack.c.h.b16 %v824
    %v1396 = vunpack.c.l.b16 %v825
    %v1397 = vunpack.c.h.b16 %v825
    %v1398 = vunpack.c.l.b16 %v826
    %v1399 = vunpack.c.h.b16 %v826
    %v1400 = vunpack.c.l.b16 %v827
    %v1401 = vunpack.c.h.b16 %v827
    %v1402 = vunpack.c.l.b16 %v828
    %v1403 = vunpack.c.h.b16 %v828
    %v1404 = vunpack.c.l.b16 %v829
    %v1405 = vunpack.c.h.b16 %v829
    %v1406 = vunpack.c.l.b16 %v830
    %v1407 = vunpack.c.h.b16 %v830
    %v1408 = vunpack.c.l.b16 %v831
    %v1409 = vunpack.c.h.b16 %v831
    %v1410 = vunpack.c.l.b16 %v832
    %v1411 = vunpack.c.h.b16 %v832
    %v1412 = vunpack.c.l.b16 %v833
    %v1413 = vunpack.c.h.b16 %v833
    %v1414 = vunpack.c.l.b16 %v834
    %v1415 = vunpack.c.h.b16 %v834
    %v1416 = vunpack.c.l.b16 %v835
    %v1417 = vunpack.c.h.b16 %v835
    %v1418 = vunpack.c.l.b16 %v836
    %v1419 = vunpack.c.h.b16 %v836
    %v1420 = vunpack.c.l.b16 %v837
    %v1421 = vunpack.c.h.b16 %v837
    %v1422 = vunpack.c.l.b16 %v838
    %v1423 = vunpack.c.h.b16 %v838
    %v1424 = vunpack.c.l.b16 %v839
    %v1425 = vunpack.c.h.b16 %v839
    %v1426 = vunpack.c.l.b16 %v840
    %v1427 = vunpack.c.h.b16 %v840
    %v1428 = vunpack.c.l.b16 %v841
    %v1429 = vunpack.c.h.b16 %v841
    %v1430 = vunpack.c.l.b16 %v842
    %v1431 = vunpack.c.h.b16 %v842
    %v1432 = vunpack.c.l.b16 %v843
    %v1433 = vunpack.c.h.b16 %v843
    %v1434 = vunpack.c.l.b16 %v844
    %v1435 = vunpack.c.h.b16 %v844
    %v1436 = vunpack.c.l.b16 %v845
    %v1437 = vunpack.c.h.b16 %v845
    %v1438 = vunpack.c.l.b16 %v846
    %v1439 = vunpack.c.h.b16 %v846
    %v1440 = vunpack.c.l.b16 %v847
    %v1441 = vunpack.c.h.b16 %v847
    %v1442 = vunpack.c.l.b16 %v848
    %v1443 = vunpack.c.h.b16 %v848
    %v1444 = vunpack.c.l.b16 %v849
    %v1445 = vunpack.c.h.b16 %v849
    %v1446 = vunpack.c.l.b16 %v850
    %v1447 = vunpack.c.h.b16 %v850
    %v1448 = vunpack.c.l.b16 %v851
    %v1449 = vunpack.c.h.b16 %v851
    %v1450 = vunpack.c.l.b16 %v852
    %v1451 = vunpack.c.h.b16 %v852
    %v1452 = vunpack.c.l.b16 %v853
    %v1453 = vunpack.c.h.b16 %v853
    %v1454 = vunpack.c.l.b16 %v854
    %v1455 = vunpack.c.h.b16 %v854
    %v1456 = vunpack.c.l.b16 %v855
    %v1457 = vunpack.c.h.b16 %v855
    %v1458 = vunpack.c.l.b16 %v856
    %v1459 = vunpack.c.h.b16 %v856
    %v1460 = vunpack.c.l.b16 %v857
    %v1461 = vunpack.c.h.b16 %v857
    %v1462 = vunpack.c.l.b16 %v858
    %v1463 = vunpack.c.h.b16 %v858
    %v1464 = vunpack.c.l.b16 %v859
    %v1465 = vunpack.c.h.b16 %v859
    %v1466 = vunpack.c.l.b16 %v860
    %v1467 = vunpack.c.h.b16 %v860
    %v1468 = vunpack.c.l.b16 %v861
    %v1469 = vunpack.c.h.b16 %v861
    %v1470 = vunpack.c.l.b16 %v862
    %v1471 = vunpack.c.h.b16 %v862
    %v1472 = vunpack.c.l.b16 %v863
    %v1473 = vunpack.c.h.b16 %v863
    %v1474 = vunpack.c.l.b16 %v864
    %v1475 = vunpack.c.h.b16 %v864
    %v1476 = vunpack.c.l.b16 %v865
    %v1477 = vunpack.c.h.b16 %v865
    %v1478 = vunpack.c.l.b16 %v866
    %v1479 = vunpack.c.h.b16 %v866
    %v1480 = vunpack.c.l.b16 %v867
    %v1481 = vunpack.c.h.b16 %v867
    %v1482 = vunpack.c.l.b16 %v868
    %v1483 = vunpack.c.h.b16 %v868
    %v1484 = vunpack.c.l.b16 %v869
    %v1485 = vunpack.c.h.b16 %v869
    %v1486 = vunpack.c.l.b16 %v870
    %v1487 = vunpack.c.h.b16 %v870
    %v1488 = vunpack.c.l.b16 %v871
    %v1489 = vunpack.c.h.b16 %v871
    %v1490 = vunpack.c.l.b16 %v872
    %v1491 = vunpack.c.h.b16 %v872
    %v1492 = vunpack.c.l.b16 %v873
    %v1493 = vunpack.c.h.b16 %v873
    %v1494 = vunpack.c.l.b16 %v874
    %v1495 = vunpack.c.h.b16 %v874
    %v1496 = vunpack.c.l.b16 %v875
    %v1497 = vunpack.c.h.b16 %v875
    %v1498 = vunpack.c.l.b16 %v876
    %v1499 = vunpack.c.h.b16 %v876
    %v1500 = vunpack.c.l.b16 %v877
    %v1501 = vunpack.c.h.b16 %v877
    %v1502 = vunpack.c.l.b16 %v878
    %v1503 = vunpack.c.h.b16 %v878
    %v1504 = vunpack.c.l.b16 %v879
    %v1505 = vunpack.c.h.b16 %v879
    %v1506 = vunpack.c.l.b16 %v880
    %v1507 = vunpack.c.h.b16 %v880
    %v1508 = vunpack.c.l.b16 %v881
    %v1509 = vunpack.c.h.b16 %v881
    %v1510 = vunpack.c.l.b16 %v882
    %v1511 = vunpack.c.h.b16 %v882
    %v1512 = vunpack.c.l.b16 %v883
    %v1513 = vunpack.c.h.b16 %v883
    %v1514 = vunpack.c.l.b16 %v884
    %v1515 = vunpack.c.h.b16 %v884
    %v1516 = vunpack.c.l.b16 %v885
    %v1517 = vunpack.c.h.b16 %v885
    %v1518 = vunpack.c.l.b16 %v886
    %v1519 = vunpack.c.h.b16 %v886
    %v1520 = vunpack.c.l.b16 %v887
    %v1521 = vunpack.c.h.b16 %v887
    %v1522 = vunpack.c.l.b16 %v888
    %v1523 = vunpack.c.h.b16 %v888
    %v1524 = vunpack.c.l.b16 %v889
    %v1525 = vunpack.c.h.b16 %v889
    %v1526 = vunpack.c.l.b16 %v890
    %v1527 = vunpack.c.h.b16 %v890
    %v1528 = vunpack.c.l.b16 %v891
    %v1529 = vunpack.c.h.b16 %v891
    %v1530 = vunpack.c.l.b16 %v892
    %v1531 = vunpack.c.h.b16 %v892
    %v1532 = vunpack.c.l.b16 %v893
    %v1533 = vunpack.c.h.b16 %v893
    %v1534 = vunpack.c.l.b16 %v894
    %v1535 = vunpack.c.h.b16 %v894
    %v1536 = vunpack.c.l.b16 %v895
    %v1537 = vunpack.c.h.b16 %v895
    %v1538 = vunpack.c.l.b16 %v896
    %v1539 = vunpack.c.h.b16 %v896
    %v1540 = vunpack.c.l.b16 %v897
    %v1541 = vunpack.c.h.b16 %v897
    %v1542 = vunpack.c.l.b16 %v898
    %v1543 = vunpack.c.h.b16 %v898
    %v1544 = vunpack.c.l.b16 %v899
    %v1545 = vunpack.c.h.b16 %v899
    %v1546 = vunpack.c.l.b16 %v900
    %v1547 = vunpack.c.h.b16 %v900
    %v1548 = vunpack.c.l.b16 %v901
    %v1549 = vunpack.c.h.b16 %v901
    %v1550 = vunpack.c.l.b16 %v902
    %v1551 = vunpack.c.h.b16 %v902
    %v1552 = vunpack.c.l.b16 %v903
    %v1553 = vunpack.c.h.b16 %v903
    %v1554 = vunpack.c.l.b16 %v904
    %v1555 = vunpack.c.h.b16 %v904
    %v1556 = vunpack.c.l.b16 %v905
    %v1557 = vunpack.c.h.b16 %v905
    %v1558 = vunpack.c.l.b16 %v906
    %v1559 = vunpack.c.h.b16 %v906
    %v1560 = vunpack.c.l.b16 %v907
    %v1561 = vunpack.c.h.b16 %v907
    %v1562 = vunpack.c.l.b16 %v908
    %v1563 = vunpack.c.h.b16 %v908
    %v1564 = vunpack.c.l.b16 %v909
    %v1565 = vunpack.c.h.b16 %v909
    %v1566 = vunpack.c.l.b16 %v910
    %v1567 = vunpack.c.h.b16 %v910
    %v1568 = vunpack.c.l.b16 %v911
    %v1569 = vunpack.c.h.b16 %v911
    %v1570 = vunpack.c.l.b16 %v912
    %v1571 = vunpack.c.h.b16 %v912
    %v1572 = vunpack.c.l.b16 %v913
    %v1573 = vunpack.c.h.b16 %v913
    %v1574 = vunpack.c.l.b16 %v914
    %v1575 = vunpack.c.h.b16 %v914
    %v1576 = vunpack.c.l.b16 %v915
    %v1577 = vunpack.c.h.b16 %v915
    %v1578 = vunpack.c.l.b16 %v916
    %v1579 = vunpack.c.h.b16 %v916
    %v1580 = vunpack.c.l.b16 %v917
    %v1581 = vunpack.c.h.b16 %v917
    %v1582 = vunpack.c.l.b16 %v918
    %v1583 = vunpack.c.h.b16 %v918
    %v1584 = vunpack.c.l.b16 %v919
    %v1585 = vunpack.c.h.b16 %v919
    %v1586 = vunpack.c.l.b16 %v920
    %v1587 = vunpack.c.h.b16 %v920
    %v1588 = vunpack.c.l.b16 %v921
    %v1589 = vunpack.c.h.b16 %v921
    %v1590 = vunpack.c.l.b16 %v922
    %v1591 = vunpack.c.h.b16 %v922
    %v1592 = vunpack.c.l.b16 %v923
    %v1593 = vunpack.c.h.b16 %v923
    %v1594 = vunpack.c.l.b16 %v924
    %v1595 = vunpack.c.h.b16 %v924
    %v1596 = vunpack.c.l.b16 %v925
    %v1597 = vunpack.c.h.b16 %v925
    %v1598 = vunpack.c.l.b16 %v926
    %v1599 = vunpack.c.h.b16 %v926
    %v1600 = vunpack.c.l.b16 %v927
    %v1601 = vunpack.c.h.b16 %v927
    %v1602 = vunpack.c.l.b16 %v928
    %v1603 = vunpack.c.h.b16 %v928
    %v1604 = vunpack.c.l.b16 %v929
    %v1605 = vunpack.c.h.b16 %v929
    %v1606 = vunpack.c.l.b16 %v930
    %v1607 = vunpack.c.h.b16 %v930
    %v1608 = vunpack.c.l.b16 %v931
    %v1609 = vunpack.c.h.b16 %v931
    %v1610 = vunpack.c.l.b16 %v932
    %v1611 = vunpack.c.h.b16 %v932
    %v1612 = vunpack.c.l.b16 %v933
    %v1613 = vunpack.c.h.b16 %v933
    %v1614 = vunpack.c.l.b16 %v934
    %v1615 = vunpack.c.h.b16 %v934
    %v1616 = vunpack.c.l.b16 %v935
    %v1617 = vunpack.c.h.b16 %v935
    %v1618 = vunpack.c.l.b16 %v936
    %v1619 = vunpack.c.h.b16 %v936
    %v1620 = vunpack.c.l.b16 %v937
    %v1621 = vunpack.c.h.b16 %v937
    %v1622 = vunpack.c.l.b16 %v938
    %v1623 = vunpack.c.h.b16 %v938
    %v1624 = vunpack.c.l.b16 %v939
    %v1625 = vunpack.c.h.b16 %v939
    %v1626 = vunpack.c.l.b16 %v940
    %v1627 = vunpack.c.h.b16 %v940
    %v1628 = vunpack.c.l.b16 %v941
    %v1629 = vunpack.c.h.b16 %v941
    %v1630 = vunpack.c.l.b16 %v942
    %v1631 = vunpack.c.h.b16 %v942
    %v1632 = vunpack.c.l.b16 %v943
    %v1633 = vunpack.c.h.b16 %v943
    %v1634 = vunpack.c.l.b16 %v944
    %v1635 = vunpack.c.h.b16 %v944
    %v1636 = vunpack.c.l.b16 %v945
    %v1637 = vunpack.c.h.b16 %v945
    %v1638 = vunpack.c.l.b16 %v946
    %v1639 = vunpack.c.h.b16 %v946
    %v1640 = vunpack.c.l.b16 %v947
    %v1641 = vunpack.c.h.b16 %v947
    %v1642 = vunpack.c.l.b16 %v948
    %v1643 = vunpack.c.h.b16 %v948
    %v1644 = vunpack.c.l.b16 %v949
    %v1645 = vunpack.c.h.b16 %v949
    %v1646 = vunpack.c.l.b16 %v950
    %v1647 = vunpack.c.h.b16 %v950
    %v1648 = vunpack.c.l.b16 %v951
    %v1649 = vunpack.c.h.b16 %v951
    %v1650 = vunpack.c.l.b16 %v952
    %v1651 = vunpack.c.h.b16 %v952
    %v1652 = vunpack.c.l.b16 %v953
    %v1653 = vunpack.c.h.b16 %v953
    %v1654 = vunpack.c.l.b16 %v954
    %v1655 = vunpack.c.h.b16 %v954
    %v1656 = vunpack.c.l.b16 %v955
    %v1657 = vunpack.c.h.b16 %v955
    %v1658 = vunpack.c.l.b16 %v956
    %v1659 = vunpack.c.h.b16 %v956
    %v1660 = vunpack.c.l.b16 %v957
    %v1661 = vunpack.c.h.b16 %v957
    %v1662 = vunpack.c.l.b16 %v958
    %v1663 = vunpack.c.h.b16 %v958
    %v1664 = vunpack.c.l.b16 %v959
    %v1665 = vunpack.c.h.b16 %v959
    %v1666 = vunpack.c.l.b16 %v960
    %v1667 = vunpack.c.h.b16 %v960
    %v1668 = vunpack.c.l.b16 %v961
    %v1669 = vunpack.c.h.b16 %v961
    %v1670 = vunpack.c.l.b16 %v962
    %v1671 = vunpack.c.h.b16 %v962
    %v1672 = vunpack.c.l.b16 %v963
    %v1673 = vunpack.c.h.b16 %v963
    %v1674 = vunpack.c.l.b16 %v964
    %v1675 = vunpack.c.h.b16 %v964
    %v1676 = vunpack.c.l.b16 %v965
    %v1677 = vunpack.c.h.b16 %v965
    %v1678 = vunpack.c.l.b16 %v966
    %v1679 = vunpack.c.h.b16 %v966
    %v1680 = vunpack.c.l.b16 %v967
    %v1681 = vunpack.c.h.b16 %v967
    %v1682 = vunpack.c.l.b16 %v968
    %v1683 = vunpack.c.h.b16 %v968
    %v1684 = vunpack.c.l.b16 %v969
    %v1685 = vunpack.c.h.b16 %v969
    %v1686 = vunpack.c.l.b16 %v970
    %v1687 = vunpack.c.h.b16 %v970
    %v1688 = vunpack.c.l.b16 %v971
    %v1689 = vunpack.c.h.b16 %v971
    %v1690 = vunpack.c.l.b16 %v972
    %v1691 = vunpack.c.h.b16 %v972
    %v1692 = vunpack.c.l.b16 %v973
    %v1693 = vunpack.c.h.b16 %v973
    %v1694 = vunpack.c.l.b16 %v974
    %v1695 = vunpack.c.h.b16 %v974
    %v1696 = vunpack.c.l.b16 %v975
    %v1697 = vunpack.c.h.b16 %v975
    %v1698 = vunpack.c.l.b16 %v976
    %v1699 = vunpack.c.h.b16 %v976
    %v1700 = vunpack.c.l.b16 %v977
    %v1701 = vunpack.c.h.b16 %v977
    %v1702 = vunpack.c.l.b16 %v978
    %v1703 = vunpack.c.h.b16 %v978
    %v1704 = vunpack.c.l.b16 %v979
    %v1705 = vunpack.c.h.b16 %v979
    %v1706 = vunpack.c.l.b16 %v980
    %v1707 = vunpack.c.h.b16 %v980
    %v1708 = vunpack.c.l.b16 %v981
    %v1709 = vunpack.c.h.b16 %v981
    %v1710 = vunpack.c.l.b16 %v982
    %v1711 = vunpack.c.h.b16 %v982
    %v1712 = vunpack.c.l.b16 %v983
    %v1713 = vunpack.c.h.b16 %v983
    %v1714 = vunpack.c.l.b16 %v984
    %v1715 = vunpack.c.h.b16 %v984
    %v1716 = vunpack.c.l.b16 %v985
    %v1717 = vunpack.c.h.b16 %v985
    %v1718 = vunpack.c.l.b16 %v986
    %v1719 = vunpack.c.h.b16 %v986
    %v1720 = vunpack.c.l.b16 %v987
    %v1721 = vunpack.c.h.b16 %v987
    %v1722 = vunpack.c.l.b16 %v988
    %v1723 = vunpack.c.h.b16 %v988
    %v1724 = vunpack.c.l.b16 %v989
    %v1725 = vunpack.c.h.b16 %v989
    %v1726 = vunpack.c.l.b16 %v990
    %v1727 = vunpack.c.h.b16 %v990
    %v1728 = vunpack.c.l.b16 %v991
    %v1729 = vunpack.c.h.b16 %v991
    %v1730 = vunpack.c.l.b16 %v992
    %v1731 = vunpack.c.h.b16 %v992
    %v1732 = vunpack.c.l.b16 %v993
    %v1733 = vunpack.c.h.b16 %v993
    %v1734 = vunpack.c.l.b16 %v994
    %v1735 = vunpack.c.h.b16 %v994
    %v1736 = vunpack.c.l.b16 %v995
    %v1737 = vunpack.c.h.b16 %v995
    %v1738 = vunpack.c.l.b16 %v996
    %v1739 = vunpack.c.h.b16 %v996
    %v1740 = vunpack.c.l.b16 %v997
    %v1741 = vunpack.c.h.b16 %v997
    %v1742 = vunpack.c.l.b16 %v998
    %v1743 = vunpack.c.h.b16 %v998
    %v1744 = vunpack.c.l.b16 %v999
    %v1745 = vunpack.c.h.b16 %v999
    %v1746 = vunpack.c.l.b16 %v1000
    %v1747 = vunpack.c.h.b16 %v1000
    %v1748 = vunpack.c.l.b16 %v1001
    %v1749 = vunpack.c.h.b16 %v1001
    %v1750 = vunpack.c.l.b16 %v1002
    %v1751 = vunpack.c.h.b16 %v1002
    %v1752 = vunpack.c.l.b16 %v1003
    %v1753 = vunpack.c.h.b16 %v1003
    %v1754 = vunpack.c.l.b16 %v1004
    %v1755 = vunpack.c.h.b16 %v1004
    %v1756 = vunpack.c.l.b16 %v1005
    %v1757 = vunpack.c.h.b16 %v1005
    %v1758 = vunpack.c.l.b16 %v1006
    %v1759 = vunpack.c.h.b16 %v1006
    %v1760 = vunpack.c.l.b16 %v1007
    %v1761 = vunpack.c.h.b16 %v1007
    %v1762 = vunpack.c.l.b16 %v1008
    %v1763 = vunpack.c.h.b16 %v1008
    %v1764 = vunpack.c.l.b16 %v1009
    %v1765 = vunpack.c.h.b16 %v1009
    %v1766 = vunpack.c.l.b16 %v1010
    %v1767 = vunpack.c.h.b16 %v1010
    %v1768 = vunpack.c.l.b16 %v1011
    %v1769 = vunpack.c.h.b16 %v1011
    %v1770 = vunpack.c.l.b16 %v1012
    %v1771 = vunpack.c.h.b16 %v1012
    %v1772 = vunpack.c.l.b16 %v1013
    %v1773 = vunpack.c.h.b16 %v1013
    %v1774 = vunpack.c.l.b16 %v1014
    %v1775 = vunpack.c.h.b16 %v1014
    %v1776 = vunpack.c.l.b16 %v1015
    %v1777 = vunpack.c.h.b16 %v1015
    %v1778 = vunpack.c.l.b16 %v1016
    %v1779 = vunpack.c.h.b16 %v1016
    %v1780 = vunpack.c.l.b16 %v1017
    %v1781 = vunpack.c.h.b16 %v1017
    %v1782 = vunpack.c.l.b16 %v1018
    %v1783 = vunpack.c.h.b16 %v1018
    %v1784 = vunpack.c.l.b16 %v1019
    %v1785 = vunpack.c.h.b16 %v1019
    %v1786 = vunpack.c.l.b16 %v1020
    %v1787 = vunpack.c.h.b16 %v1020
    %v1788 = vunpack.c.l.b16 %v1021
    %v1789 = vunpack.c.h.b16 %v1021
    %v1790 = vunpack.c.l.b16 %v1022
    %v1791 = vunpack.c.h.b16 %v1022
    %v1792 = vunpack.c.l.b16 %v1023
    %v1793 = vunpack.c.h.b16 %v1023
    %v1794 = vunpack.c.l.b16 %v1024
    %v1795 = vunpack.c.h.b16 %v1024
    %v1796 = vunpack.c.l.b16 %v1025
    %v1797 = vunpack.c.h.b16 %v1025
    %v1798 = vunpack.c.l.b16 %v1026
    %v1799 = vunpack.c.h.b16 %v1026
    %v1800 = vunpack.c.l.b16 %v1027
    %v1801 = vunpack.c.h.b16 %v1027
    %v1802 = vunpack.c.l.b16 %v1028
    %v1803 = vunpack.c.h.b16 %v1028
    %v1804 = vunpack.c.l.b16 %v1029
    %v1805 = vunpack.c.h.b16 %v1029
    %v1806 = vunpack.c.l.b16 %v1030
    %v1807 = vunpack.c.h.b16 %v1030
    %v1808 = vunpack.c.l.b16 %v1031
    %v1809 = vunpack.c.h.b16 %v1031
    %v1810 = vunpack.c.l.b16 %v1032
    %v1811 = vunpack.c.h.b16 %v1032
    %v1812 = vunpack.c.l.b16 %v1033
    %v1813 = vunpack.c.h.b16 %v1033
    %v1814 = vunpack.c.l.b16 %v1034
    %v1815 = vunpack.c.h.b16 %v1034
    %v1816 = vunpack.c.l.b16 %v1035
    %v1817 = vunpack.c.h.b16 %v1035
    %v1818 = vunpack.c.l.b16 %v1036
    %v1819 = vunpack.c.h.b16 %v1036
    %v1820 = vunpack.c.l.b16 %v1037
    %v1821 = vunpack.c.h.b16 %v1037
    %v1822 = vunpack.c.l.b16 %v1038
    %v1823 = vunpack.c.h.b16 %v1038
    %v1824 = vunpack.c.l.b16 %v1039
    %v1825 = vunpack.c.h.b16 %v1039
    %v1826 = vunpack.c.l.b16 %v1040
    %v1827 = vunpack.c.h.b16 %v1040
    %v1828 = vunpack.c.l.b16 %v1041
    %v1829 = vunpack.c.h.b16 %v1041
    %v1830 = vunpack.c.l.b16 %v1042
    %v1831 = vunpack.c.h.b16 %v1042
    %v1832 = vunpack.c.l.b16 %v1043
    %v1833 = vunpack.c.h.b16 %v1043
    %v1834 = vunpack.c.l.b16 %v1044
    %v1835 = vunpack.c.h.b16 %v1044
    %v1836 = vunpack.c.l.b16 %v1045
    %v1837 = vunpack.c.h.b16 %v1045
    %v1838 = vunpack.c.l.b16 %v1046
    %v1839 = vunpack.c.h.b16 %v1046
    %v1840 = vunpack.c.l.b16 %v1047
    %v1841 = vunpack.c.h.b16 %v1047
    %v1842 = vunpack.c.l.b16 %v1048
    %v1843 = vunpack.c.h.b16 %v1048
    %v1844 = vunpack.c.l.b16 %v1049
    %v1845 = vunpack.c.h.b16 %v1049
    %v1846 = vunpack.c.l.b16 %v1050
    %v1847 = vunpack.c.h.b16 %v1050
    %v1848 = vunpack.c.l.b16 %v1051
    %v1849 = vunpack.c.h.b16 %v1051
    %v1850 = vunpack.c.l.b16 %v1052
    %v1851 = vunpack.c.h.b16 %v1052
    %v1852 = vunpack.c.l.b16 %v1053
    %v1853 = vunpack.c.h.b16 %v1053
    %v1854 = vunpack.c.l.b16 %v1054
    %v1855 = vunpack.c.h.b16 %v1054
    %v1856 = vunpack.c.l.b16 %v1055
    %v1857 = vunpack.c.h.b16 %v1055
    %v1858 = vunpack.c.l.b16 %v1056
    %v1859 = vunpack.c.h.b16 %v1056
    %v1860 = vunpack.c.l.b16 %v1057
    %v1861 = vunpack.c.h.b16 %v1057
    %v1862 = vunpack.c.l.b16 %v1058
    %v1863 = vunpack.c.h.b16 %v1058
    %v1864 = vunpack.c.l.b16 %v1059
    %v1865 = vunpack.c.h.b16 %v1059
    %v1866 = vunpack.c.l.b16 %v1060
    %v1867 = vunpack.c.h.b16 %v1060
    %v1868 = vunpack.c.l.b16 %v1061
    %v1869 = vunpack.c.h.b16 %v1061
    %v1870 = vunpack.c.l.b16 %v1062
    %v1871 = vunpack.c.h.b16 %v1062
    %v1872 = vunpack.c.l.b16 %v1063
    %v1873 = vunpack.c.h.b16 %v1063
    %v1874 = vpack.c.b16 %v1370, %v1362
    %v1875 = vpack.c.b16 %v1371, %v1363
    %v1876 = vpack.c.b16 %v1372, %v1364
    %v1877 = vpack.c.b16 %v1373, %v1365
    %v1878 = vpack.c.b16 %v1374, %v1366
    %v1879 = vpack.c.b16 %v1375, %v1367
    %v1880 = vpack.c.b16 %v1376, %v1368
    %v1881 = vpack.c.b16 %v1377, %v1369
    %v1882 = vpack.c.b16 %v1386, %v1378
    %v1883 = vpack.c.b16 %v1387, %v1379
    %v1884 = vpack.c.b16 %v1388, %v1380
    %v1885 = vpack.c.b16 %v1389, %v1381
    %v1886 = vpack.c.b16 %v1390, %v1382
    %v1887 = vpack.c.b16 %v1391, %v1383
    %v1888 = vpack.c.b16 %v1392, %v1384
    %v1889 = vpack.c.b16 %v1393, %v1385
    %v1890 = vpack.c.b16 %v1402, %v1394
    %v1891 = vpack.c.b16 %v1403, %v1395
    %v1892 = vpack.c.b16 %v1404, %v1396
    %v1893 = vpack.c.b16 %v1405, %v1397
    %v1894 = vpack.c.b16 %v1406, %v1398
    %v1895 = vpack.c.b16 %v1407, %v1399
    %v1896 = vpack.c.b16 %v1408, %v1400
    %v1897 = vpack.c.b16 %v1409, %v1401
    %v1898 = vpack.c.b16 %v1418, %v1410
    %v1899 = vpack.c.b16 %v1419, %v1411
    %v1900 = vpack.c.b16 %v1420, %v1412
    %v1901 = vpack.c.b16 %v1421, %v1413
    %v1902 = vpack.c.b16 %v1422, %v1414
    %v1903 = vpack.c.b16 %v1423, %v1415
    %v1904 = vpack.c.b16 %v1424, %v1416
    %v1905 = vpack.c.b16 %v1425, %v1417
    %v1906 = vpack.c.b16 %v1434, %v1426
    %v1907 = vpack.c.b16 %v1435, %v1427
    %v1908 = vpack.c.b16 %v1436, %v1428
    %v1909 = vpack.c.b16 %v1437, %v1429
    %v1910 = vpack.c.b16 %v1438, %v1430
    %v1911 = vpack.c.b16 %v1439, %v1431
    %v1912 = vpack.c.b16 %v1440, %v1432
    %v1913 = vpack.c.b16 %v1441, %v1433
    %v1914 = vpack.c.b16 %v1450, %v1442
    %v1915 = vpack.c.b16 %v1451, %v1443
    %v1916 = vpack.c.b16 %v1452, %v1444
    %v1917 = vpack.c.b16 %v1453, %v1445
    %v1918 = vpack.c.b16 %v1454, %v1446
    %v1919 = vpack.c.b16 %v1455, %v1447
    %v1920 = vpack.c.b16 %v1456, %v1448
    %v1921 = vpack.c.b16 %v1457, %v1449
    %v1922 = vpack.c.b16 %v1466, %v1458
    %v1923 = vpack.c.b16 %v1467, %v1459
    %v1924 = vpack.c.b16 %v1468, %v1460
    %v1925 = vpack.c.b16 %v1469, %v1461
    %v1926 = vpack.c.b16 %v1470, %v1462
    %v1927 = vpack.c.b16 %v1471, %v1463
    %v1928 = vpack.c.b16 %v1472, %v1464
    %v1929 = vpack.c.b16 %v1473, %v1465
    %v1930 = vpack.c.b16 %v1482, %v1474
    %v1931 = vpack.c.b16 %v1483, %v1475
    %v1932 = vpack.c.b16 %v1484, %v1476
    %v1933 = vpack.c.b16 %v1485, %v1477
    %v1934 = vpack.c.b16 %v1486, %v1478
    %v1935 = vpack.c.b16 %v1487, %v1479
    %v1936 = vpack.c.b16 %v1488, %v1480
    %v1937 = vpack.c.b16 %v1489, %v1481
    %v1938 = vpack.c.b16 %v1498, %v1490
    %v1939 = vpack.c.b16 %v1499, %v1491
    %v1940 = vpack.c.b16 %v1500, %v1492
    %v1941 = vpack.c.b16 %v1501, %v1493
    %v1942 = vpack.c.b16 %v1502, %v1494
    %v1943 = vpack.c.b16 %v1503, %v1495
    %v1944 = vpack.c.b16 %v1504, %v1496
    %v1945 = vpack.c.b16 %v1505, %v1497
    %v1946 = vpack.c.b16 %v1514, %v1506
    %v1947 = vpack.c.b16 %v1515, %v1507
    %v1948 = vpack.c.b16 %v1516, %v1508
    %v1949 = vpack.c.b16 %v1517, %v1509
    %v1950 = vpack.c.b16 %v1518, %v1510
    %v1951 = vpack.c.b16 %v1519, %v1511
    %v1952 = vpack.c.b16 %v1520, %v1512
    %v1953 = vpack.c.b16 %v1521, %v1513
    %v1954 = vpack.c.b16 %v1530, %v1522
    %v1955 = vpack.c.b16 %v1531, %v1523
    %v1956 = vpack.c.b16 %v1532, %v1524
    %v1957 = vpack.c.b16 %v1533, %v1525
    %v1958 = vpack.c.b16 %v1534, %v1526
    %v1959 = vpack.c.b16 %v1535, %v1527
    %v1960 = vpack.c.b16 %v1536, %v1528
    %v1961 = vpack.c.b16 %v1537, %v1529
    %v1962 = vpack.c.b16 %v1546, %v1538
    %v1963 = vpack.c.b16 %v1547, %v1539
    %v1964 = vpack.c.b16 %v1548, %v1540
    %v1965 = vpack.c.b16 %v1549, %v1541
    %v1966 = vpack.c.b16 %v1550, %v1542
    %v1967 = vpack.c.b16 %v1551, %v1543
    %v1968 = vpack.c.b16 %v1552, %v1544
    %v1969 = vpack.c.b16 %v1553, %v1545
    %v1970 = vpack.c.b16 %v1562, %v1554
    %v1971 = vpack.c.b16 %v1563, %v1555
    %v1972 = vpack.c.b16 %v1564, %v1556
    %v1973 = vpack.c.b16 %v1565, %v1557
    %v1974 = vpack.c.b16 %v1566, %v1558
    %v1975 = vpack.c.b16 %v1567, %v1559
    %v1976 = vpack.c.b16 %v1568, %v1560
    %v1977 = vpack.c.b16 %v1569, %v1561
    %v1978 = vpack.c.b16 %v1578, %v1570
    %v1979 = vpack.c.b16 %v1579, %v1571
    %v1980 = vpack.c.b16 %v1580, %v1572
    %v1981 = vpack.c.b16 %v1581, %v1573
    %v1982 = vpack.c.b16 %v1582, %v1574
    %v1983 = vpack.c.b16 %v1583, %v1575
    %v1984 = vpack.c.b16 %v1584, %v1576
    %v1985 = vpack.c.b16 %v1585, %v1577
    %v1986 = vpack.c.b16 %v1594, %v1586
    %v1987 = vpack.c.b16 %v1595, %v1587
    %v1988 = vpack.c.b16 %v1596, %v1588
    %v1989 = vpack.c.b16 %v1597, %v1589
    %v1990 = vpack.c.b16 %v1598, %v1590
    %v1991 = vpack.c.b16 %v1599, %v1591
    %v1992 = vpack.c.b16 %v1600, %v1592
    %v1993 = vpack.c.b16 %v1601, %v1593
    %v1994 = vpack.c.b16 %v1610, %v1602
    %v1995 = vpack.c.b16 %v1611, %v1603
    %v1996 = vpack.c.b16 %v1612, %v1604
    %v1997 = vpack.c.b16 %v1613, %v1605
    %v1998 = vpack.c.b16 %v1614, %v1606
    %v1999 = vpack.c.b16 %v1615, %v1607
    %v2000 = vpack.c.b16 %v1616, %v1608
    %v2001 = vpack.c.b16 %v1617, %v1609
    %v2002 = vpack.c.b16 %v1626, %v1618
    %v2003 = vpack.c.b16 %v1627, %v1619
    %v2004 = vpack.c.b16 %v1628, %v1620
    %v2005 = vpack.c.b16 %v1629, %v1621
    %v2006 = vpack.c.b16 %v1630, %v1622
    %v2007 = vpack.c.b16 %v1631, %v1623
    %v2008 = vpack.c.b16 %v1632, %v1624
    %v2009 = vpack.c.b16 %v1633, %v1625
    %v2010 = vpack.c.b16 %v1642, %v1634
    %v2011 = vpack.c.b16 %v1643, %v1635
    %v2012 = vpack.c.b16 %v1644, %v1636
    %v2013 = vpack.c.b16 %v1645, %v1637
    %v2014 = vpack.c.b16 %v1646, %v1638
    %v2015 = vpack.c.b16 %v1647, %v1639
    %v2016 = vpack.c.b16 %v1648, %v1640
    %v2017 = vpack.c.b16 %v1649, %v1641
    %v2018 = vpack.c.b16 %v1658, %v1650
    %v2019 = vpack.c.b16 %v1659, %v1651
    %v2020 = vpack.c.b16 %v1660, %v1652
    %v2021 = vpack.c.b16 %v1661, %v1653
    %v2022 = vpack.c.b16 %v1662, %v1654
    %v2023 = vpack.c.b16 %v1663, %v1655
    %v2024 = vpack.c.b16 %v1664, %v1656
    %v2025 = vpack.c.b16 %v1665, %v1657
    %v2026 = vpack.c.b16 %v1674, %v1666
    %v2027 = vpack.c.b16 %v1675, %v1667
    %v2028 = vpack.c.b16 %v1676, %v1668
    %v2029 = vpack.c.b16 %v1677, %v1669
    %v2030 = vpack.c.b16 %v1678, %v1670
    %v2031 = vpack.c.b16 %v1679, %v1671
    %v2032 = vpack.c.b16 %v1680, %v1672
    %v2033 = vpack.c.b16 %v1681, %v1673
    %v2034 = vpack.c.b16 %v1690, %v1682
    %v2035 = vpack.c.b16 %v1691, %v1683
    %v2036 = vpack.c.b16 %v1692, %v1684
    %v2037 = vpack.c.b16 %v1693, %v1685
    %v2038 = vpack.c.b16 %v1694, %v1686
    %v2039 = vpack.c.b16 %v1695, %v1687
    %v2040 = vpack.c.b16 %v1696, %v1688
    %v2041 = vpack.c.b16 %v1697, %v1689
    %v2042 = vpack.c.b16 %v1706, %v1698
    %v2043 = vpack.c.b16 %v1707, %v1699
    %v2044 = vpack.c.b16 %v1708, %v1700
    %v2045 = vpack.c.b16 %v1709, %v1701
    %v2046 = vpack.c.b16 %v1710, %v1702
    %v2047 = vpack.c.b16 %v1711, %v1703
    %v2048 = vpack.c.b16 %v1712, %v1704
    %v2049 = vpack.c.b16 %v1713, %v1705
    %v2050 = vpack.c.b16 %v1722, %v1714
    %v2051 = vpack.c.b16 %v1723, %v1715
    %v2052 = vpack.c.b16 %v1724, %v1716
    %v2053 = vpack.c.b16 %v1725, %v1717
    %v2054 = vpack.c.b16 %v1726, %v1718
    %v2055 = vpack.c.b16 %v1727, %v1719
    %v2056 = vpack.c.b16 %v1728, %v1720
    %v2057 = vpack.c.b16 %v1729, %v1721
    %v2058 = vpack.c.b16 %v1738, %v1730
    %v2059 = vpack.c.b16 %v1739, %v1731
    %v2060 = vpack.c.b16 %v1740, %v1732
    %v2061 = vpack.c.b16 %v1741, %v1733
    %v2062 = vpack.c.b16 %v1742, %v1734
    %v2063 = vpack.c.b16 %v1743, %v1735
    %v2064 = vpack.c.b16 %v1744, %v1736
    %v2065 = vpack.c.b16 %v1745, %v1737
    %v2066 = vpack.c.b16 %v1754, %v1746
    %v2067 = vpack.c.b16 %v1755, %v1747
    %v2068 = vpack.c.b16 %v1756, %v1748
    %v2069 = vpack.c.b16 %v1757, %v1749
    %v2070 = vpack.c.b16 %v1758, %v1750
    %v2071 = vpack.c.b16 %v1759, %v1751
    %v2072 = vpack.c.b16 %v1760, %v1752
    %v2073 = vpack.c.b16 %v1761, %v1753
    %v2074 = vpack.c.b16 %v1770, %v1762
    %v2075 = vpack.c.b16 %v1771, %v1763
    %v2076 = vpack.c.b16 %v1772, %v1764
    %v2077 = vpack.c.b16 %v1773, %v1765
    %v2078 = vpack.c.b16 %v1774, %v1766
    %v2079 = vpack.c.b16 %v1775, %v1767
    %v2080 = vpack.c.b16 %v1776, %v1768
    %v2081 = vpack.c.b16 %v1777, %v1769
    %v2082 = vpack.c.b16 %v1786, %v1778
    %v2083 = vpack.c.b16 %v1787, %v1779
    %v2084 = vpack.c.b16 %v1788, %v1780
    %v2085 = vpack.c.b16 %v1789, %v1781
    %v2086 = vpack.c.b16 %v1790, %v1782
    %v2087 = vpack.c.b16 %v1791, %v1783
    %v2088 = vpack.c.b16 %v1792, %v1784
    %v2089 = vpack.c.b16 %v1793, %v1785
    %v2090 = vpack.c.b16 %v1802, %v1794
    %v2091 = vpack.c.b16 %v1803, %v1795
    %v2092 = vpack.c.b16 %v1804, %v1796
    %v2093 = vpack.c.b16 %v1805, %v1797
    %v2094 = vpack.c.b16 %v1806, %v1798
    %v2095 = vpack.c.b16 %v1807, %v1799
    %v2096 = vpack.c.b16 %v1808, %v1800
    %v2097 = vpack.c.b16 %v1809, %v1801
    %v2098 = vpack.c.b16 %v1818, %v1810
    %v2099 = vpack.c.b16 %v1819, %v1811
    %v2100 = vpack.c.b16 %v1820, %v1812
    %v2101 = vpack.c.b16 %v1821, %v1813
    %v2102 = vpack.c.b16 %v1822, %v1814
    %v2103 = vpack.c.b16 %v1823, %v1815
    %v2104 = vpack.c.b16 %v1824, %v1816
    %v2105 = vpack.c.b16 %v1825, %v1817
    %v2106 = vpack.c.b16 %v1834, %v1826
    %v2107 = vpack.c.b16 %v1835, %v1827
    %v2108 = vpack.c.b16 %v1836, %v1828
    %v2109 = vpack.c.b16 %v1837, %v1829
    %v2110 = vpack.c.b16 %v1838, %v1830
    %v2111 = vpack.c.b16 %v1839, %v1831
    %v2112 = vpack.c.b16 %v1840, %v1832
    %v2113 = vpack.c.b16 %v1841, %v1833
    %v2114 = vpack.c.b16 %v1850, %v1842
    %v2115 = vpack.c.b16 %v1851, %v1843
    %v2116 = vpack.c.b16 %v1852, %v1844
    %v2117 = vpack.c.b16 %v1853, %v1845
    %v2118 = vpack.c.b16 %v1854, %v1846
    %v2119 = vpack.c.b16 %v1855, %v1847
    %v2120 = vpack.c.b16 %v1856, %v1848
    %v2121 = vpack.c.b16 %v1857, %v1849
    %v2122 = vpack.c.b16 %v1866, %v1858
    %v2123 = vpack.c.b16 %v1867, %v1859
    %v2124 = vpack.c.b16 %v1868, %v1860
    %v2125 = vpack.c.b16 %v1869, %v1861
    %v2126 = vpack.c.b16 %v1870, %v1862
    %v2127 = vpack.c.b16 %v1871, %v1863
    %v2128 = vpack.c.b16 %v1872, %v1864
    %v2129 = vpack.c.b16 %v1873, %v1865
    %2386 = vmatprep.subr.bf16.mxu0 %v1875
    %2387 = vmatpush1.bf16.msra.mxu0 %v1874
    %2388 = vmatprep.subr.bf16.mxu0 %v1883
    %2389 = vmatpush1.bf16.msra.mxu0 %v1882
    %2390 = vmatprep.subr.bf16.mxu0 %v1891
    %2391 = vmatpush1.bf16.msra.mxu0 %v1890
    %2392 = vmatprep.subr.bf16.mxu0 %v1899
    %2393 = vmatpush1.bf16.msra.mxu0 %v1898
    %2394 = vmatprep.subr.bf16.mxu0 %v1907
    %2395 = vmatpush1.bf16.msra.mxu0 %v1906
    %2396 = vmatprep.subr.bf16.mxu0 %v1915
    %2397 = vmatpush1.bf16.msra.mxu0 %v1914
    %2398 = vmatprep.subr.bf16.mxu0 %v1923
    %2399 = vmatpush1.bf16.msra.mxu0 %v1922
    %2400 = vmatprep.subr.bf16.mxu0 %v1931
    %2401 = vmatpush1.bf16.msra.mxu0 %v1930
    %2402 = vmatprep.subr.bf16.mxu0 %v1939
    %2403 = vmatpush1.bf16.msra.mxu0 %v1938
    %2404 = vmatprep.subr.bf16.mxu0 %v1947
    %2405 = vmatpush1.bf16.msra.mxu0 %v1946
    %2406 = vmatprep.subr.bf16.mxu0 %v1955
    %2407 = vmatpush1.bf16.msra.mxu0 %v1954
    %2408 = vmatprep.subr.bf16.mxu0 %v1963
    %2409 = vmatpush1.bf16.msra.mxu0 %v1962
    %2410 = vmatprep.subr.bf16.mxu0 %v1971
    %2411 = vmatpush1.bf16.msra.mxu0 %v1970
    %2412 = vmatprep.subr.bf16.mxu0 %v1979
    %2413 = vmatpush1.bf16.msra.mxu0 %v1978
    %2414 = vmatprep.subr.bf16.mxu0 %v1987
    %2415 = vmatpush1.bf16.msra.mxu0 %v1986
    %2416 = vmatprep.subr.bf16.mxu0 %v1995
    %2417 = vmatpush1.bf16.msra.mxu0 %v1994
    %2418 = vmatprep.mubr.bf16.mxu0 %v805
    %2419 = vmatmul.mubr.bf16.gmra.mrb[0].mxu0 %v804
    %v2420 = vpop.f32.mrb[0].mxu0
    %v2421 = vadd.f32 %v1069, %v2420
    %v2422 = vpop.f32.mrb[0].mxu0
    %v2423 = vadd.f32 %v1073, %v2422
    %v2424 = vpop.f32.mrb[0].mxu0
    %v2425 = vpop.f32.mrb[0].mxu0
    %2426 = vdwg.mxu0
    %2427 = vmatprep.subr.bf16.mxu0 %v2003
    %2428 = vmatpush1.bf16.msra.mxu0 %v2002
    %2429 = vmatprep.subr.bf16.mxu0 %v2011
    %2430 = vmatpush1.bf16.msra.mxu0 %v2010
    %2431 = vmatprep.subr.bf16.mxu0 %v2019
    %2432 = vmatpush1.bf16.msra.mxu0 %v2018
    %2433 = vmatprep.subr.bf16.mxu0 %v2027
    %2434 = vmatpush1.bf16.msra.mxu0 %v2026
    %2435 = vmatprep.subr.bf16.mxu0 %v2035
    %2436 = vmatpush1.bf16.msra.mxu0 %v2034
    %2437 = vmatprep.subr.bf16.mxu0 %v2043
    %2438 = vmatpush1.bf16.msra.mxu0 %v2042
    %2439 = vmatprep.subr.bf16.mxu0 %v2051
    %2440 = vmatpush1.bf16.msra.mxu0 %v2050
    %2441 = vmatprep.subr.bf16.mxu0 %v2059
    %2442 = vmatpush1.bf16.msra.mxu0 %v2058
    %2443 = vmatprep.subr.bf16.mxu0 %v2067
    %2444 = vmatpush1.bf16.msra.mxu0 %v2066
    %2445 = vmatprep.subr.bf16.mxu0 %v2075
    %2446 = vmatpush1.bf16.msra.mxu0 %v2074
    %2447 = vmatprep.subr.bf16.mxu0 %v2083
    %2448 = vmatpush1.bf16.msra.mxu0 %v2082
    %2449 = vmatprep.subr.bf16.mxu0 %v2091
    %2450 = vmatpush1.bf16.msra.mxu0 %v2090
    %2451 = vmatprep.subr.bf16.mxu0 %v2099
    %2452 = vmatpush1.bf16.msra.mxu0 %v2098
    %2453 = vmatprep.subr.bf16.mxu0 %v2107
    %2454 = vmatpush1.bf16.msra.mxu0 %v2106
    %2455 = vmatprep.subr.bf16.mxu0 %v2115
    %2456 = vmatpush1.bf16.msra.mxu0 %v2114
    %2457 = vmatprep.subr.bf16.mxu0 %v2123
    %2458 = vmatpush1.bf16.msra.mxu0 %v2122
    %2459 = vmatprep.mubr.bf16.mxu0 %v807
    %2460 = vmatmul.mubr.bf16.gmra.mrb[0].mxu0 %v806
    %v2461 = vpop.f32.mrb[0].mxu0
    %v2462 = vadd.f32 %v2421, %v2461
    %v2463 = vpop.f32.mrb[0].mxu0
    %v2464 = vadd.f32 %v2423, %v2463
    %v2465 = vpop.f32.mrb[0].mxu0
    %v2466 = vpop.f32.mrb[0].mxu0
    %2467 = vdwg.mxu0
    %2468 = vmatprep.subr.bf16.mxu0 %v1877
    %2469 = vmatpush1.bf16.msra.mxu0 %v1876
    %2470 = vmatprep.subr.bf16.mxu0 %v1885
    %2471 = vmatpush1.bf16.msra.mxu0 %v1884
    %2472 = vmatprep.subr.bf16.mxu0 %v1893
    %2473 = vmatpush1.bf16.msra.mxu0 %v1892
    %2474 = vmatprep.subr.bf16.mxu0 %v1901
    %2475 = vmatpush1.bf16.msra.mxu0 %v1900
    %2476 = vmatprep.subr.bf16.mxu0 %v1909
    %2477 = vmatpush1.bf16.msra.mxu0 %v1908
    %2478 = vmatprep.subr.bf16.mxu0 %v1917
    %2479 = vmatpush1.bf16.msra.mxu0 %v1916
    %2480 = vmatprep.subr.bf16.mxu0 %v1925
    %2481 = vmatpush1.bf16.msra.mxu0 %v1924
    %2482 = vmatprep.subr.bf16.mxu0 %v1933
    %2483 = vmatpush1.bf16.msra.mxu0 %v1932
    %2484 = vmatprep.subr.bf16.mxu0 %v1941
    %2485 = vmatpush1.bf16.msra.mxu0 %v1940
    %2486 = vmatprep.subr.bf16.mxu0 %v1949
    %2487 = vmatpush1.bf16.msra.mxu0 %v1948
    %2488 = vmatprep.subr.bf16.mxu0 %v1957
    %2489 = vmatpush1.bf16.msra.mxu0 %v1956
    %2490 = vmatprep.subr.bf16.mxu0 %v1965
    %2491 = vmatpush1.bf16.msra.mxu0 %v1964
    %2492 = vmatprep.subr.bf16.mxu0 %v1973
    %2493 = vmatpush1.bf16.msra.mxu0 %v1972
    %2494 = vmatprep.subr.bf16.mxu0 %v1981
    %2495 = vmatpush1.bf16.msra.mxu0 %v1980
    %2496 = vmatprep.subr.bf16.mxu0 %v1989
    %2497 = vmatpush1.bf16.msra.mxu0 %v1988
    %2498 = vmatprep.subr.bf16.mxu0 %v1997
    %2499 = vmatpush1.bf16.msra.mxu0 %v1996
    %2500 = vmatprep.mubr.bf16.mxu0 %v805
    %2501 = vmatmul.mubr.bf16.gmra.mrb[0].mxu0 %v804
    %v2502 = vpop.f32.mrb[0].mxu0
    %v2503 = vadd.f32 %v1077, %v2502
    %v2504 = vpop.f32.mrb[0].mxu0
    %v2505 = vadd.f32 %v1081, %v2504
    %v2506 = vpop.f32.mrb[0].mxu0
    %v2507 = vpop.f32.mrb[0].mxu0
    %2508 = vdwg.mxu0
    %2509 = vmatprep.subr.bf16.mxu0 %v2005
    %2510 = vmatpush1.bf16.msra.mxu0 %v2004
    %2511 = vmatprep.subr.bf16.mxu0 %v2013
    %2512 = vmatpush1.bf16.msra.mxu0 %v2012
    %2513 = vmatprep.subr.bf16.mxu0 %v2021
    %2514 = vmatpush1.bf16.msra.mxu0 %v2020
    %2515 = vmatprep.subr.bf16.mxu0 %v2029
    %2516 = vmatpush1.bf16.msra.mxu0 %v2028
    %2517 = vmatprep.subr.bf16.mxu0 %v2037
    %2518 = vmatpush1.bf16.msra.mxu0 %v2036
    %2519 = vmatprep.subr.bf16.mxu0 %v2045
    %2520 = vmatpush1.bf16.msra.mxu0 %v2044
    %2521 = vmatprep.subr.bf16.mxu0 %v2053
    %2522 = vmatpush1.bf16.msra.mxu0 %v2052
    %2523 = vmatprep.subr.bf16.mxu0 %v2061
    %2524 = vmatpush1.bf16.msra.mxu0 %v2060
    %2525 = vmatprep.subr.bf16.mxu0 %v2069
    %2526 = vmatpush1.bf16.msra.mxu0 %v2068
    %2527 = vmatprep.subr.bf16.mxu0 %v2077
    %2528 = vmatpush1.bf16.msra.mxu0 %v2076
    %2529 = vmatprep.subr.bf16.mxu0 %v2085
    %2530 = vmatpush1.bf16.msra.mxu0 %v2084
    %2531 = vmatprep.subr.bf16.mxu0 %v2093
    %2532 = vmatpush1.bf16.msra.mxu0 %v2092
    %2533 = vmatprep.subr.bf16.mxu0 %v2101
    %2534 = vmatpush1.bf16.msra.mxu0 %v2100
    %2535 = vmatprep.subr.bf16.mxu0 %v2109
    %2536 = vmatpush1.bf16.msra.mxu0 %v2108
    %2537 = vmatprep.subr.bf16.mxu0 %v2117
    %2538 = vmatpush1.bf16.msra.mxu0 %v2116
    %2539 = vmatprep.subr.bf16.mxu0 %v2125
    %2540 = vmatpush1.bf16.msra.mxu0 %v2124
    %2541 = vmatprep.mubr.bf16.mxu0 %v807
    %2542 = vmatmul.mubr.bf16.gmra.mrb[0].mxu0 %v806
    %v2543 = vpop.f32.mrb[0].mxu0
    %v2544 = vadd.f32 %v2503, %v2543
    %v2545 = vpop.f32.mrb[0].mxu0
    %v2546 = vadd.f32 %v2505, %v2545
    %v2547 = vpop.f32.mrb[0].mxu0
    %v2548 = vpop.f32.mrb[0].mxu0
    %2549 = vdwg.mxu0
    %2550 = vmatprep.subr.bf16.mxu0 %v1879
    %2551 = vmatpush1.bf16.msra.mxu0 %v1878
    %2552 = vmatprep.subr.bf16.mxu0 %v1887
    %2553 = vmatpush1.bf16.msra.mxu0 %v1886
    %2554 = vmatprep.subr.bf16.mxu0 %v1895
    %2555 = vmatpush1.bf16.msra.mxu0 %v1894
    %2556 = vmatprep.subr.bf16.mxu0 %v1903
    %2557 = vmatpush1.bf16.msra.mxu0 %v1902
    %2558 = vmatprep.subr.bf16.mxu0 %v1911
    %2559 = vmatpush1.bf16.msra.mxu0 %v1910
    %2560 = vmatprep.subr.bf16.mxu0 %v1919
    %2561 = vmatpush1.bf16.msra.mxu0 %v1918
    %2562 = vmatprep.subr.bf16.mxu0 %v1927
    %2563 = vmatpush1.bf16.msra.mxu0 %v1926
    %2564 = vmatprep.subr.bf16.mxu0 %v1935
    %2565 = vmatpush1.bf16.msra.mxu0 %v1934
    %2566 = vmatprep.subr.bf16.mxu0 %v1943
    %2567 = vmatpush1.bf16.msra.mxu0 %v1942
    %2568 = vmatprep.subr.bf16.mxu0 %v1951
    %2569 = vmatpush1.bf16.msra.mxu0 %v1950
    %2570 = vmatprep.subr.bf16.mxu0 %v1959
    %2571 = vmatpush1.bf16.msra.mxu0 %v1958
    %2572 = vmatprep.subr.bf16.mxu0 %v1967
    %2573 = vmatpush1.bf16.msra.mxu0 %v1966
    %2574 = vmatprep.subr.bf16.mxu0 %v1975
    %2575 = vmatpush1.bf16.msra.mxu0 %v1974
    %2576 = vmatprep.subr.bf16.mxu0 %v1983
    %2577 = vmatpush1.bf16.msra.mxu0 %v1982
    %2578 = vmatprep.subr.bf16.mxu0 %v1991
    %2579 = vmatpush1.bf16.msra.mxu0 %v1990
    %2580 = vmatprep.subr.bf16.mxu0 %v1999
    %2581 = vmatpush1.bf16.msra.mxu0 %v1998
    %2582 = vmatprep.mubr.bf16.mxu0 %v805
    %2583 = vmatmul.mubr.bf16.gmra.mrb[0].mxu0 %v804
    %v2584 = vpop.f32.mrb[0].mxu0
    %v2585 = vadd.f32 %v1085, %v2584
    %v2586 = vpop.f32.mrb[0].mxu0
    %v2587 = vadd.f32 %v1089, %v2586
    %v2588 = vpop.f32.mrb[0].mxu0
    %v2589 = vpop.f32.mrb[0].mxu0
    %2590 = vdwg.mxu0
    %2591 = vmatprep.subr.bf16.mxu0 %v2007
    %2592 = vmatpush1.bf16.msra.mxu0 %v2006
    %2593 = vmatprep.subr.bf16.mxu0 %v2015
    %2594 = vmatpush1.bf16.msra.mxu0 %v2014
    %2595 = vmatprep.subr.bf16.mxu0 %v2023
    %2596 = vmatpush1.bf16.msra.mxu0 %v2022
    %2597 = vmatprep.subr.bf16.mxu0 %v2031
    %2598 = vmatpush1.bf16.msra.mxu0 %v2030
    %2599 = vmatprep.subr.bf16.mxu0 %v2039
    %2600 = vmatpush1.bf16.msra.mxu0 %v2038
    %2601 = vmatprep.subr.bf16.mxu0 %v2047
    %2602 = vmatpush1.bf16.msra.mxu0 %v2046
    %2603 = vmatprep.subr.bf16.mxu0 %v2055
    %2604 = vmatpush1.bf16.msra.mxu0 %v2054
    %2605 = vmatprep.subr.bf16.mxu0 %v2063
    %2606 = vmatpush1.bf16.msra.mxu0 %v2062
    %2607 = vmatprep.subr.bf16.mxu0 %v2071
    %2608 = vmatpush1.bf16.msra.mxu0 %v2070
    %2609 = vmatprep.subr.bf16.mxu0 %v2079
    %2610 = vmatpush1.bf16.msra.mxu0 %v2078
    %2611 = vmatprep.subr.bf16.mxu0 %v2087
    %2612 = vmatpush1.bf16.msra.mxu0 %v2086
    %2613 = vmatprep.subr.bf16.mxu0 %v2095
    %2614 = vmatpush1.bf16.msra.mxu0 %v2094
    %2615 = vmatprep.subr.bf16.mxu0 %v2103
    %2616 = vmatpush1.bf16.msra.mxu0 %v2102
    %2617 = vmatprep.subr.bf16.mxu0 %v2111
    %2618 = vmatpush1.bf16.msra.mxu0 %v2110
    %2619 = vmatprep.subr.bf16.mxu0 %v2119
    %2620 = vmatpush1.bf16.msra.mxu0 %v2118
    %2621 = vmatprep.subr.bf16.mxu0 %v2127
    %2622 = vmatpush1.bf16.msra.mxu0 %v2126
    %2623 = vmatprep.mubr.bf16.mxu0 %v807
    %2624 = vmatmul.mubr.bf16.gmra.mrb[0].mxu0 %v806
    %v2625 = vpop.f32.mrb[0].mxu0
    %v2626 = vadd.f32 %v2585, %v2625
    %v2627 = vpop.f32.mrb[0].mxu0
    %v2628 = vadd.f32 %v2587, %v2627
    %v2629 = vpop.f32.mrb[0].mxu0
    %v2630 = vpop.f32.mrb[0].mxu0
    %2631 = vdwg.mxu0
    %2632 = vmatprep.subr.bf16.mxu0 %v1881
    %2633 = vmatpush1.bf16.msra.mxu0 %v1880
    %2634 = vmatprep.subr.bf16.mxu0 %v1889
    %2635 = vmatpush1.bf16.msra.mxu0 %v1888
    %2636 = vmatprep.subr.bf16.mxu0 %v1897
    %2637 = vmatpush1.bf16.msra.mxu0 %v1896
    %2638 = vmatprep.subr.bf16.mxu0 %v1905
    %2639 = vmatpush1.bf16.msra.mxu0 %v1904
    %2640 = vmatprep.subr.bf16.mxu0 %v1913
    %2641 = vmatpush1.bf16.msra.mxu0 %v1912
    %2642 = vmatprep.subr.bf16.mxu0 %v1921
    %2643 = vmatpush1.bf16.msra.mxu0 %v1920
    %2644 = vmatprep.subr.bf16.mxu0 %v1929
    %2645 = vmatpush1.bf16.msra.mxu0 %v1928
    %2646 = vmatprep.subr.bf16.mxu0 %v1937
    %2647 = vmatpush1.bf16.msra.mxu0 %v1936
    %2648 = vmatprep.subr.bf16.mxu0 %v1945
    %2649 = vmatpush1.bf16.msra.mxu0 %v1944
    %2650 = vmatprep.subr.bf16.mxu0 %v1953
    %2651 = vmatpush1.bf16.msra.mxu0 %v1952
    %2652 = vmatprep.subr.bf16.mxu0 %v1961
    %2653 = vmatpush1.bf16.msra.mxu0 %v1960
    %2654 = vmatprep.subr.bf16.mxu0 %v1969
    %2655 = vmatpush1.bf16.msra.mxu0 %v1968
    %2656 = vmatprep.subr.bf16.mxu0 %v1977
    %2657 = vmatpush1.bf16.msra.mxu0 %v1976
    %2658 = vmatprep.subr.bf16.mxu0 %v1985
    %2659 = vmatpush1.bf16.msra.mxu0 %v1984
    %2660 = vmatprep.subr.bf16.mxu0 %v1993
    %2661 = vmatpush1.bf16.msra.mxu0 %v1992
    %2662 = vmatprep.subr.bf16.mxu0 %v2001
    %2663 = vmatpush1.bf16.msra.mxu0 %v2000
    %2664 = vmatprep.mubr.bf16.mxu0 %v805
    %2665 = vmatmul.mubr.bf16.gmra.mrb[0].mxu0 %v804
    %v2666 = vpop.f32.mrb[0].mxu0
    %v2667 = vadd.f32 %v1093, %v2666
    %v2668 = vpop.f32.mrb[0].mxu0
    %v2669 = vadd.f32 %v1097, %v2668
    %v2670 = vpop.f32.mrb[0].mxu0
    %v2671 = vpop.f32.mrb[0].mxu0
    %2672 = vdwg.mxu0
    %2673 = vmatprep.subr.bf16.mxu0 %v2009
    %2674 = vmatpush1.bf16.msra.mxu0 %v2008
    %2675 = vmatprep.subr.bf16.mxu0 %v2017
    %2676 = vmatpush1.bf16.msra.mxu0 %v2016
    %2677 = vmatprep.subr.bf16.mxu0 %v2025
    %2678 = vmatpush1.bf16.msra.mxu0 %v2024
    %2679 = vmatprep.subr.bf16.mxu0 %v2033
    %2680 = vmatpush1.bf16.msra.mxu0 %v2032
    %2681 = vmatprep.subr.bf16.mxu0 %v2041
    %2682 = vmatpush1.bf16.msra.mxu0 %v2040
    %2683 = vmatprep.subr.bf16.mxu0 %v2049
    %2684 = vmatpush1.bf16.msra.mxu0 %v2048
    %2685 = vmatprep.subr.bf16.mxu0 %v2057
    %2686 = vmatpush1.bf16.msra.mxu0 %v2056
    %2687 = vmatprep.subr.bf16.mxu0 %v2065
    %2688 = vmatpush1.bf16.msra.mxu0 %v2064
    %2689 = vmatprep.subr.bf16.mxu0 %v2073
    %2690 = vmatpush1.bf16.msra.mxu0 %v2072
    %2691 = vmatprep.subr.bf16.mxu0 %v2081
    %2692 = vmatpush1.bf16.msra.mxu0 %v2080
    %2693 = vmatprep.subr.bf16.mxu0 %v2089
    %2694 = vmatpush1.bf16.msra.mxu0 %v2088
    %2695 = vmatprep.subr.bf16.mxu0 %v2097
    %2696 = vmatpush1.bf16.msra.mxu0 %v2096
    %2697 = vmatprep.subr.bf16.mxu0 %v2105
    %2698 = vmatpush1.bf16.msra.mxu0 %v2104
    %2699 = vmatprep.subr.bf16.mxu0 %v2113
    %2700 = vmatpush1.bf16.msra.mxu0 %v2112
    %2701 = vmatprep.subr.bf16.mxu0 %v2121
    %2702 = vmatpush1.bf16.msra.mxu0 %v2120
    %2703 = vmatprep.subr.bf16.mxu0 %v2129
    %2704 = vmatpush1.bf16.msra.mxu0 %v2128
    %2705 = vmatprep.mubr.bf16.mxu0 %v807
    %2706 = vmatmul.mubr.bf16.gmra.mrb[0].mxu0 %v806
    %v2707 = vpop.f32.mrb[0].mxu0
    %v2708 = vadd.f32 %v2667, %v2707
    %v2709 = vpop.f32.mrb[0].mxu0
    %v2710 = vadd.f32 %v2669, %v2709
    %v2711 = vpop.f32.mrb[0].mxu0
    %v2712 = vpop.f32.mrb[0].mxu0
    %2713 = vdwg.mxu0
    %vm2714 = vcmp.ge.f32.partialorder %v2462, 0.0
    %vm2715 = vcmp.ge.f32.partialorder %v2464, 0.0
    %vm2716 = vcmp.ge.f32.partialorder %v2544, 0.0
    %vm2717 = vcmp.ge.f32.partialorder %v2546, 0.0
    %vm2718 = vcmp.ge.f32.partialorder %v2626, 0.0
    %vm2719 = vcmp.ge.f32.partialorder %v2628, 0.0
    %vm2720 = vcmp.ge.f32.partialorder %v2708, 0.0
    %vm2721 = vcmp.ge.f32.partialorder %v2710, 0.0
    %v2722 = vmul.f32 %v2462, 0.2
    %v2723 = vmul.f32 %v2464, 0.2
    %v2724 = vmul.f32 %v2544, 0.2
    %v2725 = vmul.f32 %v2546, 0.2
    %v2726 = vmul.f32 %v2626, 0.2
    %v2727 = vmul.f32 %v2628, 0.2
    %v2728 = vmul.f32 %v2708, 0.2
    %v2729 = vmul.f32 %v2710, 0.2
    %v2730 = vsel %vm2714, %v2462, %v2722
    %v2731 = vsel %vm2715, %v2464, %v2723
    %v2732 = vsel %vm2716, %v2544, %v2724
    %v2733 = vsel %vm2717, %v2546, %v2725
    %v2734 = vsel %vm2718, %v2626, %v2726
    %v2735 = vsel %vm2719, %v2628, %v2727
    %v2736 = vsel %vm2720, %v2708, %v2728
    %v2737 = vsel %vm2721, %v2710, %v2729
    %v2738 = vpack.c.bf16 %v2730, %v2730
    %v2739 = vpack.c.bf16 %v2731, %v2731
    %v2740 = vpack.c.bf16 %v2732, %v2732
    %v2741 = vpack.c.bf16 %v2733, %v2733
    %v2742 = vpack.c.bf16 %v2734, %v2734
    %v2743 = vpack.c.bf16 %v2735, %v2735
    %v2744 = vpack.c.bf16 %v2736, %v2736
    %v2745 = vpack.c.bf16 %v2737, %v2737
    %v2746 = vld [vmem:[#allocation14] sm:$0xff]
    %v2747 = vld [vmem:[#allocation14 + $0x8] sm:$0xff]
    %v2748 = vld [vmem:[#allocation14 + $0x10] sm:$0xff]
    %v2749 = vld [vmem:[#allocation14 + $0x18] sm:$0xf]
    %v2750 = vld [vmem:[#allocation14 + $0x1c] sm:$0xff]
    %v2751 = vld [vmem:[#allocation14 + $0x24] sm:$0xff]
    %v2752 = vld [vmem:[#allocation14 + $0x2c] sm:$0xff]
    %v2753 = vld [vmem:[#allocation14 + $0x34] sm:$0xf]
    %v2754 = vld [vmem:[#allocation14 + $0x38] sm:$0xff]
    %v2755 = vld [vmem:[#allocation14 + $0x40] sm:$0xff]
    %v2756 = vld [vmem:[#allocation14 + $0x48] sm:$0xff]
    %v2757 = vld [vmem:[#allocation14 + $0x50] sm:$0xf]
    %v2758 = vld [vmem:[#allocation14 + $0x54] sm:$0xff]
    %v2759 = vld [vmem:[#allocation14 + $0x5c] sm:$0xff]
    %v2760 = vld [vmem:[#allocation14 + $0x64] sm:$0xff]
    %v2761 = vld [vmem:[#allocation14 + $0x6c] sm:$0xf]
    %v2762 = vld [vmem:[#allocation14 + $0x70] sm:$0xff]
    %v2763 = vld [vmem:[#allocation14 + $0x78] sm:$0xff]
    %v2764 = vld [vmem:[#allocation14 + $0x80] sm:$0xff]
    %v2765 = vld [vmem:[#allocation14 + $0x88] sm:$0xf]
    %v2766 = vld [vmem:[#allocation14 + $0x8c] sm:$0xff]
    %v2767 = vld [vmem:[#allocation14 + $0x94] sm:$0xff]
    %v2768 = vld [vmem:[#allocation14 + $0x9c] sm:$0xff]
    %v2769 = vld [vmem:[#allocation14 + $0xa4] sm:$0xf]
    %v2770 = vld [vmem:[#allocation14 + $0xa8] sm:$0xff]
    %v2771 = vld [vmem:[#allocation14 + $0xb0] sm:$0xff]
    %v2772 = vld [vmem:[#allocation14 + $0xb8] sm:$0xff]
    %v2773 = vld [vmem:[#allocation14 + $0xc0] sm:$0xf]
    %v2774 = vld [vmem:[#allocation14 + $0xc4] sm:$0xff]
    %v2775 = vld [vmem:[#allocation14 + $0xcc] sm:$0xff]
    %v2776 = vld [vmem:[#allocation14 + $0xd4] sm:$0xff]
    %v2777 = vld [vmem:[#allocation14 + $0xdc] sm:$0xf]
    %v2778 = vld [vmem:[#allocation14 + $0xe0] sm:$0xff]
    %v2779 = vld [vmem:[#allocation14 + $0xe8] sm:$0xff]
    %v2780 = vld [vmem:[#allocation14 + $0xf0] sm:$0xff]
    %v2781 = vld [vmem:[#allocation14 + $0xf8] sm:$0xf]
    %v2782 = vld [vmem:[#allocation14 + $0xfc] sm:$0xff]
    %v2783 = vld [vmem:[#allocation14 + $0x104] sm:$0xff]
    %v2784 = vld [vmem:[#allocation14 + $0x10c] sm:$0xff]
    %v2785 = vld [vmem:[#allocation14 + $0x114] sm:$0xf]
    %v2786 = vld [vmem:[#allocation14 + $0x118] sm:$0xff]
    %v2787 = vld [vmem:[#allocation14 + $0x120] sm:$0xff]
    %v2788 = vld [vmem:[#allocation14 + $0x128] sm:$0xff]
    %v2789 = vld [vmem:[#allocation14 + $0x130] sm:$0xf]
    %v2790 = vld [vmem:[#allocation14 + $0x134] sm:$0xff]
    %v2791 = vld [vmem:[#allocation14 + $0x13c] sm:$0xff]
    %v2792 = vld [vmem:[#allocation14 + $0x144] sm:$0xff]
    %v2793 = vld [vmem:[#allocation14 + $0x14c] sm:$0xf]
    %v2794 = vld [vmem:[#allocation14 + $0x150] sm:$0xff]
    %v2795 = vld [vmem:[#allocation14 + $0x158] sm:$0xff]
    %v2796 = vld [vmem:[#allocation14 + $0x160] sm:$0xff]
    %v2797 = vld [vmem:[#allocation14 + $0x168] sm:$0xf]
    %v2798 = vld [vmem:[#allocation14 + $0x16c] sm:$0xff]
    %v2799 = vld [vmem:[#allocation14 + $0x174] sm:$0xff]
    %v2800 = vld [vmem:[#allocation14 + $0x17c] sm:$0xff]
    %v2801 = vld [vmem:[#allocation14 + $0x184] sm:$0xf]
    %v2802 = vld [vmem:[#allocation14 + $0x188] sm:$0xff]
    %v2803 = vld [vmem:[#allocation14 + $0x190] sm:$0xff]
    %v2804 = vld [vmem:[#allocation14 + $0x198] sm:$0xff]
    %v2805 = vld [vmem:[#allocation14 + $0x1a0] sm:$0xf]
    %v2806 = vld [vmem:[#allocation14 + $0x1a4] sm:$0xff]
    %v2807 = vld [vmem:[#allocation14 + $0x1ac] sm:$0xff]
    %v2808 = vld [vmem:[#allocation14 + $0x1b4] sm:$0xff]
    %v2809 = vld [vmem:[#allocation14 + $0x1bc] sm:$0xf]
    %v2810 = vld [vmem:[#allocation14 + $0x1c0] sm:$0xff]
    %v2811 = vld [vmem:[#allocation14 + $0x1c8] sm:$0xff]
    %v2812 = vld [vmem:[#allocation14 + $0x1d0] sm:$0xff]
    %v2813 = vld [vmem:[#allocation14 + $0x1d8] sm:$0xf]
    %v2814 = vld [vmem:[#allocation14 + $0x1dc] sm:$0xff]
    %v2815 = vld [vmem:[#allocation14 + $0x1e4] sm:$0xff]
    %v2816 = vld [vmem:[#allocation14 + $0x1ec] sm:$0xff]
    %v2817 = vld [vmem:[#allocation14 + $0x1f4] sm:$0xf]
    %v2818 = vld [vmem:[#allocation14 + $0x1f8] sm:$0xff]
    %v2819 = vld [vmem:[#allocation14 + $0x200] sm:$0xff]
    %v2820 = vld [vmem:[#allocation14 + $0x208] sm:$0xff]
    %v2821 = vld [vmem:[#allocation14 + $0x210] sm:$0xf]
    %v2822 = vld [vmem:[#allocation14 + $0x214] sm:$0xff]
    %v2823 = vld [vmem:[#allocation14 + $0x21c] sm:$0xff]
    %v2824 = vld [vmem:[#allocation14 + $0x224] sm:$0xff]
    %v2825 = vld [vmem:[#allocation14 + $0x22c] sm:$0xf]
    %v2826 = vld [vmem:[#allocation14 + $0x230] sm:$0xff]
    %v2827 = vld [vmem:[#allocation14 + $0x238] sm:$0xff]
    %v2828 = vld [vmem:[#allocation14 + $0x240] sm:$0xff]
    %v2829 = vld [vmem:[#allocation14 + $0x248] sm:$0xf]
    %v2830 = vld [vmem:[#allocation14 + $0x24c] sm:$0xff]
    %v2831 = vld [vmem:[#allocation14 + $0x254] sm:$0xff]
    %v2832 = vld [vmem:[#allocation14 + $0x25c] sm:$0xff]
    %v2833 = vld [vmem:[#allocation14 + $0x264] sm:$0xf]
    %v2834 = vld [vmem:[#allocation14 + $0x268] sm:$0xff]
    %v2835 = vld [vmem:[#allocation14 + $0x270] sm:$0xff]
    %v2836 = vld [vmem:[#allocation14 + $0x278] sm:$0xff]
    %v2837 = vld [vmem:[#allocation14 + $0x280] sm:$0xf]
    %v2838 = vld [vmem:[#allocation14 + $0x284] sm:$0xff]
    %v2839 = vld [vmem:[#allocation14 + $0x28c] sm:$0xff]
    %v2840 = vld [vmem:[#allocation14 + $0x294] sm:$0xff]
    %v2841 = vld [vmem:[#allocation14 + $0x29c] sm:$0xf]
    %v2842 = vld [vmem:[#allocation14 + $0x2a0] sm:$0xff]
    %v2843 = vld [vmem:[#allocation14 + $0x2a8] sm:$0xff]
    %v2844 = vld [vmem:[#allocation14 + $0x2b0] sm:$0xff]
    %v2845 = vld [vmem:[#allocation14 + $0x2b8] sm:$0xf]
    %v2846 = vld [vmem:[#allocation14 + $0x2bc] sm:$0xff]
    %v2847 = vld [vmem:[#allocation14 + $0x2c4] sm:$0xff]
    %v2848 = vld [vmem:[#allocation14 + $0x2cc] sm:$0xff]
    %v2849 = vld [vmem:[#allocation14 + $0x2d4] sm:$0xf]
    %v2850 = vld [vmem:[#allocation14 + $0x2d8] sm:$0xff]
    %v2851 = vld [vmem:[#allocation14 + $0x2e0] sm:$0xff]
    %v2852 = vld [vmem:[#allocation14 + $0x2e8] sm:$0xff]
    %v2853 = vld [vmem:[#allocation14 + $0x2f0] sm:$0xf]
    %v2854 = vld [vmem:[#allocation14 + $0x2f4] sm:$0xff]
    %v2855 = vld [vmem:[#allocation14 + $0x2fc] sm:$0xff]
    %v2856 = vld [vmem:[#allocation14 + $0x304] sm:$0xff]
    %v2857 = vld [vmem:[#allocation14 + $0x30c] sm:$0xf]
    %v2858 = vld [vmem:[#allocation14 + $0x310] sm:$0xff]
    %v2859 = vld [vmem:[#allocation14 + $0x318] sm:$0xff]
    %v2860 = vld [vmem:[#allocation14 + $0x320] sm:$0xff]
    %v2861 = vld [vmem:[#allocation14 + $0x328] sm:$0xf]
    %v2862 = vld [vmem:[#allocation14 + $0x32c] sm:$0xff]
    %v2863 = vld [vmem:[#allocation14 + $0x334] sm:$0xff]
    %v2864 = vld [vmem:[#allocation14 + $0x33c] sm:$0xff]
    %v2865 = vld [vmem:[#allocation14 + $0x344] sm:$0xf]
    %v2866 = vld [vmem:[#allocation14 + $0x348] sm:$0xff]
    %v2867 = vld [vmem:[#allocation14 + $0x350] sm:$0xff]
    %v2868 = vld [vmem:[#allocation14 + $0x358] sm:$0xff]
    %v2869 = vld [vmem:[#allocation14 + $0x360] sm:$0xf]
    %v2870 = vld [vmem:[#allocation14 + $0x364] sm:$0xff]
    %v2871 = vld [vmem:[#allocation14 + $0x36c] sm:$0xff]
    %v2872 = vld [vmem:[#allocation14 + $0x374] sm:$0xff]
    %v2873 = vld [vmem:[#allocation14 + $0x37c] sm:$0xf]
    %v2874 = vld [vmem:[#allocation14 + $0x380] sm:$0xff]
    %v2875 = vld [vmem:[#allocation14 + $0x388] sm:$0xff]
    %v2876 = vld [vmem:[#allocation14 + $0x390] sm:$0xff]
    %v2877 = vld [vmem:[#allocation14 + $0x398] sm:$0xf]
    %v2878 = vld [vmem:[#allocation14 + $0x39c] sm:$0xff]
    %v2879 = vld [vmem:[#allocation14 + $0x3a4] sm:$0xff]
    %v2880 = vld [vmem:[#allocation14 + $0x3ac] sm:$0xff]
    %v2881 = vld [vmem:[#allocation14 + $0x3b4] sm:$0xf]
    %v2882 = vld [vmem:[#allocation14 + $0x3b8] sm:$0xff]
    %v2883 = vld [vmem:[#allocation14 + $0x3c0] sm:$0xff]
    %v2884 = vld [vmem:[#allocation14 + $0x3c8] sm:$0xff]
    %v2885 = vld [vmem:[#allocation14 + $0x3d0] sm:$0xf]
    %v2886 = vld [vmem:[#allocation14 + $0x3d4] sm:$0xff]
    %v2887 = vld [vmem:[#allocation14 + $0x3dc] sm:$0xff]
    %v2888 = vld [vmem:[#allocation14 + $0x3e4] sm:$0xff]
    %v2889 = vld [vmem:[#allocation14 + $0x3ec] sm:$0xf]
    %v2890 = vld [vmem:[#allocation14 + $0x3f0] sm:$0xff]
    %v2891 = vld [vmem:[#allocation14 + $0x3f8] sm:$0xff]
    %v2892 = vld [vmem:[#allocation14 + $0x400] sm:$0xff]
    %v2893 = vld [vmem:[#allocation14 + $0x408] sm:$0xf]
    %v2894 = vld [vmem:[#allocation14 + $0x40c] sm:$0xff]
    %v2895 = vld [vmem:[#allocation14 + $0x414] sm:$0xff]
    %v2896 = vld [vmem:[#allocation14 + $0x41c] sm:$0xff]
    %v2897 = vld [vmem:[#allocation14 + $0x424] sm:$0xf]
    %v2898 = vld [vmem:[#allocation14 + $0x428] sm:$0xff]
    %v2899 = vld [vmem:[#allocation14 + $0x430] sm:$0xff]
    %v2900 = vld [vmem:[#allocation14 + $0x438] sm:$0xff]
    %v2901 = vld [vmem:[#allocation14 + $0x440] sm:$0xf]
    %v2902 = vld [vmem:[#allocation14 + $0x444] sm:$0xff]
    %v2903 = vld [vmem:[#allocation14 + $0x44c] sm:$0xff]
    %v2904 = vld [vmem:[#allocation14 + $0x454] sm:$0xff]
    %v2905 = vld [vmem:[#allocation14 + $0x45c] sm:$0xf]
    %v2906 = vld [vmem:[#allocation14 + $0x460] sm:$0xff]
    %v2907 = vld [vmem:[#allocation14 + $0x468] sm:$0xff]
    %v2908 = vld [vmem:[#allocation14 + $0x470] sm:$0xff]
    %v2909 = vld [vmem:[#allocation14 + $0x478] sm:$0xf]
    %v2910 = vld [vmem:[#allocation14 + $0x47c] sm:$0xff]
    %v2911 = vld [vmem:[#allocation14 + $0x484] sm:$0xff]
    %v2912 = vld [vmem:[#allocation14 + $0x48c] sm:$0xff]
    %v2913 = vld [vmem:[#allocation14 + $0x494] sm:$0xf]
    %v2914 = vld [vmem:[#allocation14 + $0x498] sm:$0xff]
    %v2915 = vld [vmem:[#allocation14 + $0x4a0] sm:$0xff]
    %v2916 = vld [vmem:[#allocation14 + $0x4a8] sm:$0xff]
    %v2917 = vld [vmem:[#allocation14 + $0x4b0] sm:$0xf]
    %v2918 = vld [vmem:[#allocation14 + $0x4b4] sm:$0xff]
    %v2919 = vld [vmem:[#allocation14 + $0x4bc] sm:$0xff]
    %v2920 = vld [vmem:[#allocation14 + $0x4c4] sm:$0xff]
    %v2921 = vld [vmem:[#allocation14 + $0x4cc] sm:$0xf]
    %v2922 = vld [vmem:[#allocation14 + $0x4d0] sm:$0xff]
    %v2923 = vld [vmem:[#allocation14 + $0x4d8] sm:$0xff]
    %v2924 = vld [vmem:[#allocation14 + $0x4e0] sm:$0xff]
    %v2925 = vld [vmem:[#allocation14 + $0x4e8] sm:$0xf]
    %v2926 = vld [vmem:[#allocation14 + $0x4ec] sm:$0xff]
    %v2927 = vld [vmem:[#allocation14 + $0x4f4] sm:$0xff]
    %v2928 = vld [vmem:[#allocation14 + $0x4fc] sm:$0xff]
    %v2929 = vld [vmem:[#allocation14 + $0x504] sm:$0xf]
    %v2930 = vld [vmem:[#allocation14 + $0x508] sm:$0xff]
    %v2931 = vld [vmem:[#allocation14 + $0x510] sm:$0xff]
    %v2932 = vld [vmem:[#allocation14 + $0x518] sm:$0xff]
    %v2933 = vld [vmem:[#allocation14 + $0x520] sm:$0xf]
    %v2934 = vld [vmem:[#allocation14 + $0x524] sm:$0xff]
    %v2935 = vld [vmem:[#allocation14 + $0x52c] sm:$0xff]
    %v2936 = vld [vmem:[#allocation14 + $0x534] sm:$0xff]
    %v2937 = vld [vmem:[#allocation14 + $0x53c] sm:$0xf]
    %v2938 = vld [vmem:[#allocation14 + $0x540] sm:$0xff]
    %v2939 = vld [vmem:[#allocation14 + $0x548] sm:$0xff]
    %v2940 = vld [vmem:[#allocation14 + $0x550] sm:$0xff]
    %v2941 = vld [vmem:[#allocation14 + $0x558] sm:$0xf]
    %v2942 = vld [vmem:[#allocation14 + $0x55c] sm:$0xff]
    %v2943 = vld [vmem:[#allocation14 + $0x564] sm:$0xff]
    %v2944 = vld [vmem:[#allocation14 + $0x56c] sm:$0xff]
    %v2945 = vld [vmem:[#allocation14 + $0x574] sm:$0xf]
    %v2946 = vld [vmem:[#allocation14 + $0x578] sm:$0xff]
    %v2947 = vld [vmem:[#allocation14 + $0x580] sm:$0xff]
    %v2948 = vld [vmem:[#allocation14 + $0x588] sm:$0xff]
    %v2949 = vld [vmem:[#allocation14 + $0x590] sm:$0xf]
    %v2950 = vld [vmem:[#allocation14 + $0x594] sm:$0xff]
    %v2951 = vld [vmem:[#allocation14 + $0x59c] sm:$0xff]
    %v2952 = vld [vmem:[#allocation14 + $0x5a4] sm:$0xff]
    %v2953 = vld [vmem:[#allocation14 + $0x5ac] sm:$0xf]
    %v2954 = vld [vmem:[#allocation14 + $0x5b0] sm:$0xff]
    %v2955 = vld [vmem:[#allocation14 + $0x5b8] sm:$0xff]
    %v2956 = vld [vmem:[#allocation14 + $0x5c0] sm:$0xff]
    %v2957 = vld [vmem:[#allocation14 + $0x5c8] sm:$0xf]
    %v2958 = vld [vmem:[#allocation14 + $0x5cc] sm:$0xff]
    %v2959 = vld [vmem:[#allocation14 + $0x5d4] sm:$0xff]
    %v2960 = vld [vmem:[#allocation14 + $0x5dc] sm:$0xff]
    %v2961 = vld [vmem:[#allocation14 + $0x5e4] sm:$0xf]
    %v2962 = vld [vmem:[#allocation14 + $0x5e8] sm:$0xff]
    %v2963 = vld [vmem:[#allocation14 + $0x5f0] sm:$0xff]
    %v2964 = vld [vmem:[#allocation14 + $0x5f8] sm:$0xff]
    %v2965 = vld [vmem:[#allocation14 + $0x600] sm:$0xf]
    %v2966 = vld [vmem:[#allocation14 + $0x604] sm:$0xff]
    %v2967 = vld [vmem:[#allocation14 + $0x60c] sm:$0xff]
    %v2968 = vld [vmem:[#allocation14 + $0x614] sm:$0xff]
    %v2969 = vld [vmem:[#allocation14 + $0x61c] sm:$0xf]
    %v2970 = vld [vmem:[#allocation14 + $0x620] sm:$0xff]
    %v2971 = vld [vmem:[#allocation14 + $0x628] sm:$0xff]
    %v2972 = vld [vmem:[#allocation14 + $0x630] sm:$0xff]
    %v2973 = vld [vmem:[#allocation14 + $0x638] sm:$0xf]
    %v2974 = vld [vmem:[#allocation14 + $0x63c] sm:$0xff]
    %v2975 = vld [vmem:[#allocation14 + $0x644] sm:$0xff]
    %v2976 = vld [vmem:[#allocation14 + $0x64c] sm:$0xff]
    %v2977 = vld [vmem:[#allocation14 + $0x654] sm:$0xf]
    %v2978 = vld [vmem:[#allocation14 + $0x658] sm:$0xff]
    %v2979 = vld [vmem:[#allocation14 + $0x660] sm:$0xff]
    %v2980 = vld [vmem:[#allocation14 + $0x668] sm:$0xff]
    %v2981 = vld [vmem:[#allocation14 + $0x670] sm:$0xf]
    %v2982 = vld [vmem:[#allocation14 + $0x674] sm:$0xff]
    %v2983 = vld [vmem:[#allocation14 + $0x67c] sm:$0xff]
    %v2984 = vld [vmem:[#allocation14 + $0x684] sm:$0xff]
    %v2985 = vld [vmem:[#allocation14 + $0x68c] sm:$0xf]
    %v2986 = vld [vmem:[#allocation14 + $0x690] sm:$0xff]
    %v2987 = vld [vmem:[#allocation14 + $0x698] sm:$0xff]
    %v2988 = vld [vmem:[#allocation14 + $0x6a0] sm:$0xff]
    %v2989 = vld [vmem:[#allocation14 + $0x6a8] sm:$0xf]
    %v2990 = vld [vmem:[#allocation14 + $0x6ac] sm:$0xff]
    %v2991 = vld [vmem:[#allocation14 + $0x6b4] sm:$0xff]
    %v2992 = vld [vmem:[#allocation14 + $0x6bc] sm:$0xff]
    %v2993 = vld [vmem:[#allocation14 + $0x6c4] sm:$0xf]
    %v2994 = vld [vmem:[#allocation14 + $0x6c8] sm:$0xff]
    %v2995 = vld [vmem:[#allocation14 + $0x6d0] sm:$0xff]
    %v2996 = vld [vmem:[#allocation14 + $0x6d8] sm:$0xff]
    %v2997 = vld [vmem:[#allocation14 + $0x6e0] sm:$0xf]
    %v2998 = vld [vmem:[#allocation14 + $0x6e4] sm:$0xff]
    %v2999 = vld [vmem:[#allocation14 + $0x6ec] sm:$0xff]
    %v3000 = vld [vmem:[#allocation14 + $0x6f4] sm:$0xff]
    %v3001 = vld [vmem:[#allocation14 + $0x6fc] sm:$0xf]
    %v3002 = vld [vmem:[#allocation14 + $0x700] sm:$0xff]
    %v3003 = vld [vmem:[#allocation14 + $0x708] sm:$0xff]
    %v3004 = vld [vmem:[#allocation14 + $0x710] sm:$0xff]
    %v3005 = vld [vmem:[#allocation14 + $0x718] sm:$0xf]
    %v3006 = vld [vmem:[#allocation14 + $0x71c] sm:$0xff]
    %v3007 = vld [vmem:[#allocation14 + $0x724] sm:$0xff]
    %v3008 = vld [vmem:[#allocation14 + $0x72c] sm:$0xff]
    %v3009 = vld [vmem:[#allocation14 + $0x734] sm:$0xf]
    %v3010 = vld [vmem:[#allocation14 + $0x738] sm:$0xff]
    %v3011 = vld [vmem:[#allocation14 + $0x740] sm:$0xff]
    %v3012 = vld [vmem:[#allocation14 + $0x748] sm:$0xff]
    %v3013 = vld [vmem:[#allocation14 + $0x750] sm:$0xf]
    %v3014 = vld [vmem:[#allocation14 + $0x754] sm:$0xff]
    %v3015 = vld [vmem:[#allocation14 + $0x75c] sm:$0xff]
    %v3016 = vld [vmem:[#allocation14 + $0x764] sm:$0xff]
    %v3017 = vld [vmem:[#allocation14 + $0x76c] sm:$0xf]
    %v3018 = vld [vmem:[#allocation14 + $0x770] sm:$0xff]
    %v3019 = vld [vmem:[#allocation14 + $0x778] sm:$0xff]
    %v3020 = vld [vmem:[#allocation14 + $0x780] sm:$0xff]
    %v3021 = vld [vmem:[#allocation14 + $0x788] sm:$0xf]
    %v3022 = vld [vmem:[#allocation14 + $0x78c] sm:$0xff]
    %v3023 = vld [vmem:[#allocation14 + $0x794] sm:$0xff]
    %v3024 = vld [vmem:[#allocation14 + $0x79c] sm:$0xff]
    %v3025 = vld [vmem:[#allocation14 + $0x7a4] sm:$0xf]
    %v3026 = vld [vmem:[#allocation14 + $0x7a8] sm:$0xff]
    %v3027 = vld [vmem:[#allocation14 + $0x7b0] sm:$0xff]
    %v3028 = vld [vmem:[#allocation14 + $0x7b8] sm:$0xff]
    %v3029 = vld [vmem:[#allocation14 + $0x7c0] sm:$0xf]
    %v3030 = vld [vmem:[#allocation14 + $0x7c4] sm:$0xff]
    %v3031 = vld [vmem:[#allocation14 + $0x7cc] sm:$0xff]
    %v3032 = vld [vmem:[#allocation14 + $0x7d4] sm:$0xff]
    %v3033 = vld [vmem:[#allocation14 + $0x7dc] sm:$0xf]
    %v3034 = vld [vmem:[#allocation14 + $0x7e0] sm:$0xff]
    %v3035 = vld [vmem:[#allocation14 + $0x7e8] sm:$0xff]
    %v3036 = vld [vmem:[#allocation14 + $0x7f0] sm:$0xff]
    %v3037 = vld [vmem:[#allocation14 + $0x7f8] sm:$0xf]
    %v3038 = vld [vmem:[#allocation14 + $0x7fc] sm:$0xff]
    %v3039 = vld [vmem:[#allocation14 + $0x804] sm:$0xff]
    %v3040 = vld [vmem:[#allocation14 + $0x80c] sm:$0xff]
    %v3041 = vld [vmem:[#allocation14 + $0x814] sm:$0xf]
    %v3042 = vld [vmem:[#allocation14 + $0x818] sm:$0xff]
    %v3043 = vld [vmem:[#allocation14 + $0x820] sm:$0xff]
    %v3044 = vld [vmem:[#allocation14 + $0x828] sm:$0xff]
    %v3045 = vld [vmem:[#allocation14 + $0x830] sm:$0xf]
    %v3046 = vld [vmem:[#allocation14 + $0x834] sm:$0xff]
    %v3047 = vld [vmem:[#allocation14 + $0x83c] sm:$0xff]
    %v3048 = vld [vmem:[#allocation14 + $0x844] sm:$0xff]
    %v3049 = vld [vmem:[#allocation14 + $0x84c] sm:$0xf]
    %v3050 = vld [vmem:[#allocation14 + $0x850] sm:$0xff]
    %v3051 = vld [vmem:[#allocation14 + $0x858] sm:$0xff]
    %v3052 = vld [vmem:[#allocation14 + $0x860] sm:$0xff]
    %v3053 = vld [vmem:[#allocation14 + $0x868] sm:$0xf]
    %v3054 = vld [vmem:[#allocation14 + $0x86c] sm:$0xff]
    %v3055 = vld [vmem:[#allocation14 + $0x874] sm:$0xff]
    %v3056 = vld [vmem:[#allocation14 + $0x87c] sm:$0xff]
    %v3057 = vld [vmem:[#allocation14 + $0x884] sm:$0xf]
    %v3058 = vld [vmem:[#allocation14 + $0x888] sm:$0xff]
    %v3059 = vld [vmem:[#allocation14 + $0x890] sm:$0xff]
    %v3060 = vld [vmem:[#allocation14 + $0x898] sm:$0xff]
    %v3061 = vld [vmem:[#allocation14 + $0x8a0] sm:$0xf]
    %v3062 = vld [vmem:[#allocation14 + $0x8a4] sm:$0xff]
    %v3063 = vld [vmem:[#allocation14 + $0x8ac] sm:$0xff]
    %v3064 = vld [vmem:[#allocation14 + $0x8b4] sm:$0xff]
    %v3065 = vld [vmem:[#allocation14 + $0x8bc] sm:$0xf]
    %v3066 = vld [vmem:[#allocation14 + $0x8c0] sm:$0xff]
    %v3067 = vld [vmem:[#allocation14 + $0x8c8] sm:$0xff]
    %v3068 = vld [vmem:[#allocation14 + $0x8d0] sm:$0xff]
    %v3069 = vld [vmem:[#allocation14 + $0x8d8] sm:$0xf]
    %v3070 = vld [vmem:[#allocation14 + $0x8dc] sm:$0xff]
    %v3071 = vld [vmem:[#allocation14 + $0x8e4] sm:$0xff]
    %v3072 = vld [vmem:[#allocation14 + $0x8ec] sm:$0xff]
    %v3073 = vld [vmem:[#allocation14 + $0x8f4] sm:$0xf]
    %v3074 = vld [vmem:[#allocation14 + $0x8f8] sm:$0xff]
    %v3075 = vld [vmem:[#allocation14 + $0x900] sm:$0xff]
    %v3076 = vld [vmem:[#allocation14 + $0x908] sm:$0xff]
    %v3077 = vld [vmem:[#allocation14 + $0x910] sm:$0xf]
    %v3078 = vld [vmem:[#allocation14 + $0x914] sm:$0xff]
    %v3079 = vld [vmem:[#allocation14 + $0x91c] sm:$0xff]
    %v3080 = vld [vmem:[#allocation14 + $0x924] sm:$0xff]
    %v3081 = vld [vmem:[#allocation14 + $0x92c] sm:$0xf]
    %v3082 = vld [vmem:[#allocation14 + $0x930] sm:$0xff]
    %v3083 = vld [vmem:[#allocation14 + $0x938] sm:$0xff]
    %v3084 = vld [vmem:[#allocation14 + $0x940] sm:$0xff]
    %v3085 = vld [vmem:[#allocation14 + $0x948] sm:$0xf]
    %v3086 = vld [vmem:[#allocation14 + $0x94c] sm:$0xff]
    %v3087 = vld [vmem:[#allocation14 + $0x954] sm:$0xff]
    %v3088 = vld [vmem:[#allocation14 + $0x95c] sm:$0xff]
    %v3089 = vld [vmem:[#allocation14 + $0x964] sm:$0xf]
    %v3090 = vld [vmem:[#allocation14 + $0x968] sm:$0xff]
    %v3091 = vld [vmem:[#allocation14 + $0x970] sm:$0xff]
    %v3092 = vld [vmem:[#allocation14 + $0x978] sm:$0xff]
    %v3093 = vld [vmem:[#allocation14 + $0x980] sm:$0xf]
    %v3094 = vld [vmem:[#allocation14 + $0x984] sm:$0xff]
    %v3095 = vld [vmem:[#allocation14 + $0x98c] sm:$0xff]
    %v3096 = vld [vmem:[#allocation14 + $0x994] sm:$0xff]
    %v3097 = vld [vmem:[#allocation14 + $0x99c] sm:$0xf]
    %v3098 = vld [vmem:[#allocation14 + $0x9a0] sm:$0xff]
    %v3099 = vld [vmem:[#allocation14 + $0x9a8] sm:$0xff]
    %v3100 = vld [vmem:[#allocation14 + $0x9b0] sm:$0xff]
    %v3101 = vld [vmem:[#allocation14 + $0x9b8] sm:$0xf]
    %v3102 = vld [vmem:[#allocation14 + $0x9bc] sm:$0xff]
    %v3103 = vld [vmem:[#allocation14 + $0x9c4] sm:$0xff]
    %v3104 = vld [vmem:[#allocation14 + $0x9cc] sm:$0xff]
    %v3105 = vld [vmem:[#allocation14 + $0x9d4] sm:$0xf]
    %v3106 = vld [vmem:[#allocation14 + $0x9d8] sm:$0xff]
    %v3107 = vld [vmem:[#allocation14 + $0x9e0] sm:$0xff]
    %v3108 = vld [vmem:[#allocation14 + $0x9e8] sm:$0xff]
    %v3109 = vld [vmem:[#allocation14 + $0x9f0] sm:$0xf]
    %v3110 = vld [vmem:[#allocation14 + $0x9f4] sm:$0xff]
    %v3111 = vld [vmem:[#allocation14 + $0x9fc] sm:$0xff]
    %v3112 = vld [vmem:[#allocation14 + $0xa04] sm:$0xff]
    %v3113 = vld [vmem:[#allocation14 + $0xa0c] sm:$0xf]
    %v3114 = vld [vmem:[#allocation14 + $0xa10] sm:$0xff]
    %v3115 = vld [vmem:[#allocation14 + $0xa18] sm:$0xff]
    %v3116 = vld [vmem:[#allocation14 + $0xa20] sm:$0xff]
    %v3117 = vld [vmem:[#allocation14 + $0xa28] sm:$0xf]
    %v3118 = vld [vmem:[#allocation14 + $0xa2c] sm:$0xff]
    %v3119 = vld [vmem:[#allocation14 + $0xa34] sm:$0xff]
    %v3120 = vld [vmem:[#allocation14 + $0xa3c] sm:$0xff]
    %v3121 = vld [vmem:[#allocation14 + $0xa44] sm:$0xf]
    %v3122 = vld [vmem:[#allocation14 + $0xa48] sm:$0xff]
    %v3123 = vld [vmem:[#allocation14 + $0xa50] sm:$0xff]
    %v3124 = vld [vmem:[#allocation14 + $0xa58] sm:$0xff]
    %v3125 = vld [vmem:[#allocation14 + $0xa60] sm:$0xf]
    %v3126 = vld [vmem:[#allocation14 + $0xa64] sm:$0xff]
    %v3127 = vld [vmem:[#allocation14 + $0xa6c] sm:$0xff]
    %v3128 = vld [vmem:[#allocation14 + $0xa74] sm:$0xff]
    %v3129 = vld [vmem:[#allocation14 + $0xa7c] sm:$0xf]
    %v3130 = vld [vmem:[#allocation14 + $0xa80] sm:$0xff]
    %v3131 = vld [vmem:[#allocation14 + $0xa88] sm:$0xff]
    %v3132 = vld [vmem:[#allocation14 + $0xa90] sm:$0xff]
    %v3133 = vld [vmem:[#allocation14 + $0xa98] sm:$0xf]
    %v3134 = vld [vmem:[#allocation14 + $0xa9c] sm:$0xff]
    %v3135 = vld [vmem:[#allocation14 + $0xaa4] sm:$0xff]
    %v3136 = vld [vmem:[#allocation14 + $0xaac] sm:$0xff]
    %v3137 = vld [vmem:[#allocation14 + $0xab4] sm:$0xf]
    %v3138 = vld [vmem:[#allocation14 + $0xab8] sm:$0xff]
    %v3139 = vld [vmem:[#allocation14 + $0xac0] sm:$0xff]
    %v3140 = vld [vmem:[#allocation14 + $0xac8] sm:$0xff]
    %v3141 = vld [vmem:[#allocation14 + $0xad0] sm:$0xf]
    %v3142 = vld [vmem:[#allocation14 + $0xad4] sm:$0xff]
    %v3143 = vld [vmem:[#allocation14 + $0xadc] sm:$0xff]
    %v3144 = vld [vmem:[#allocation14 + $0xae4] sm:$0xff]
    %v3145 = vld [vmem:[#allocation14 + $0xaec] sm:$0xf]
    %v3146 = vld [vmem:[#allocation14 + $0xaf0] sm:$0xff]
    %v3147 = vld [vmem:[#allocation14 + $0xaf8] sm:$0xff]
    %v3148 = vld [vmem:[#allocation14 + $0xb00] sm:$0xff]
    %v3149 = vld [vmem:[#allocation14 + $0xb08] sm:$0xf]
    %v3150 = vld [vmem:[#allocation14 + $0xb0c] sm:$0xff]
    %v3151 = vld [vmem:[#allocation14 + $0xb14] sm:$0xff]
    %v3152 = vld [vmem:[#allocation14 + $0xb1c] sm:$0xff]
    %v3153 = vld [vmem:[#allocation14 + $0xb24] sm:$0xf]
    %v3154 = vld [vmem:[#allocation14 + $0xb28] sm:$0xff]
    %v3155 = vld [vmem:[#allocation14 + $0xb30] sm:$0xff]
    %v3156 = vld [vmem:[#allocation14 + $0xb38] sm:$0xff]
    %v3157 = vld [vmem:[#allocation14 + $0xb40] sm:$0xf]
    %v3158 = vld [vmem:[#allocation14 + $0xb44] sm:$0xff]
    %v3159 = vld [vmem:[#allocation14 + $0xb4c] sm:$0xff]
    %v3160 = vld [vmem:[#allocation14 + $0xb54] sm:$0xff]
    %v3161 = vld [vmem:[#allocation14 + $0xb5c] sm:$0xf]
    %v3162 = vld [vmem:[#allocation14 + $0xb60] sm:$0xff]
    %v3163 = vld [vmem:[#allocation14 + $0xb68] sm:$0xff]
    %v3164 = vld [vmem:[#allocation14 + $0xb70] sm:$0xff]
    %v3165 = vld [vmem:[#allocation14 + $0xb78] sm:$0xf]
    %v3166 = vld [vmem:[#allocation14 + $0xb7c] sm:$0xff]
    %v3167 = vld [vmem:[#allocation14 + $0xb84] sm:$0xff]
    %v3168 = vld [vmem:[#allocation14 + $0xb8c] sm:$0xff]
    %v3169 = vld [vmem:[#allocation14 + $0xb94] sm:$0xf]
    %v3170 = vld [vmem:[#allocation14 + $0xb98] sm:$0xff]
    %v3171 = vld [vmem:[#allocation14 + $0xba0] sm:$0xff]
    %v3172 = vld [vmem:[#allocation14 + $0xba8] sm:$0xff]
    %v3173 = vld [vmem:[#allocation14 + $0xbb0] sm:$0xf]
    %v3174 = vld [vmem:[#allocation14 + $0xbb4] sm:$0xff]
    %v3175 = vld [vmem:[#allocation14 + $0xbbc] sm:$0xff]
    %v3176 = vld [vmem:[#allocation14 + $0xbc4] sm:$0xff]
    %v3177 = vld [vmem:[#allocation14 + $0xbcc] sm:$0xf]
    %v3178 = vld [vmem:[#allocation14 + $0xbd0] sm:$0xff]
    %v3179 = vld [vmem:[#allocation14 + $0xbd8] sm:$0xff]
    %v3180 = vld [vmem:[#allocation14 + $0xbe0] sm:$0xff]
    %v3181 = vld [vmem:[#allocation14 + $0xbe8] sm:$0xf]
    %v3182 = vld [vmem:[#allocation14 + $0xbec] sm:$0xff]
    %v3183 = vld [vmem:[#allocation14 + $0xbf4] sm:$0xff]
    %v3184 = vld [vmem:[#allocation14 + $0xbfc] sm:$0xff]
    %v3185 = vld [vmem:[#allocation14 + $0xc04] sm:$0xf]
    %v3186 = vld [vmem:[#allocation14 + $0xc08] sm:$0xff]
    %v3187 = vld [vmem:[#allocation14 + $0xc10] sm:$0xff]
    %v3188 = vld [vmem:[#allocation14 + $0xc18] sm:$0xff]
    %v3189 = vld [vmem:[#allocation14 + $0xc20] sm:$0xf]
    %v3190 = vld [vmem:[#allocation14 + $0xc24] sm:$0xff]
    %v3191 = vld [vmem:[#allocation14 + $0xc2c] sm:$0xff]
    %v3192 = vld [vmem:[#allocation14 + $0xc34] sm:$0xff]
    %v3193 = vld [vmem:[#allocation14 + $0xc3c] sm:$0xf]
    %v3194 = vld [vmem:[#allocation14 + $0xc40] sm:$0xff]
    %v3195 = vld [vmem:[#allocation14 + $0xc48] sm:$0xff]
    %v3196 = vld [vmem:[#allocation14 + $0xc50] sm:$0xff]
    %v3197 = vld [vmem:[#allocation14 + $0xc58] sm:$0xf]
    %v3198 = vld [vmem:[#allocation14 + $0xc5c] sm:$0xff]
    %v3199 = vld [vmem:[#allocation14 + $0xc64] sm:$0xff]
    %v3200 = vld [vmem:[#allocation14 + $0xc6c] sm:$0xff]
    %v3201 = vld [vmem:[#allocation14 + $0xc74] sm:$0xf]
    %v3202 = vld [vmem:[#allocation14 + $0xc78] sm:$0xff]
    %v3203 = vld [vmem:[#allocation14 + $0xc80] sm:$0xff]
    %v3204 = vld [vmem:[#allocation14 + $0xc88] sm:$0xff]
    %v3205 = vld [vmem:[#allocation14 + $0xc90] sm:$0xf]
    %v3206 = vld [vmem:[#allocation14 + $0xc94] sm:$0xff]
    %v3207 = vld [vmem:[#allocation14 + $0xc9c] sm:$0xff]
    %v3208 = vld [vmem:[#allocation14 + $0xca4] sm:$0xff]
    %v3209 = vld [vmem:[#allocation14 + $0xcac] sm:$0xf]
    %v3210 = vld [vmem:[#allocation14 + $0xcb0] sm:$0xff]
    %v3211 = vld [vmem:[#allocation14 + $0xcb8] sm:$0xff]
    %v3212 = vld [vmem:[#allocation14 + $0xcc0] sm:$0xff]
    %v3213 = vld [vmem:[#allocation14 + $0xcc8] sm:$0xf]
    %v3214 = vld [vmem:[#allocation14 + $0xccc] sm:$0xff]
    %v3215 = vld [vmem:[#allocation14 + $0xcd4] sm:$0xff]
    %v3216 = vld [vmem:[#allocation14 + $0xcdc] sm:$0xff]
    %v3217 = vld [vmem:[#allocation14 + $0xce4] sm:$0xf]
    %v3218 = vld [vmem:[#allocation14 + $0xce8] sm:$0xff]
    %v3219 = vld [vmem:[#allocation14 + $0xcf0] sm:$0xff]
    %v3220 = vld [vmem:[#allocation14 + $0xcf8] sm:$0xff]
    %v3221 = vld [vmem:[#allocation14 + $0xd00] sm:$0xf]
    %v3222 = vld [vmem:[#allocation14 + $0xd04] sm:$0xff]
    %v3223 = vld [vmem:[#allocation14 + $0xd0c] sm:$0xff]
    %v3224 = vld [vmem:[#allocation14 + $0xd14] sm:$0xff]
    %v3225 = vld [vmem:[#allocation14 + $0xd1c] sm:$0xf]
    %v3226 = vld [vmem:[#allocation14 + $0xd20] sm:$0xff]
    %v3227 = vld [vmem:[#allocation14 + $0xd28] sm:$0xff]
    %v3228 = vld [vmem:[#allocation14 + $0xd30] sm:$0xff]
    %v3229 = vld [vmem:[#allocation14 + $0xd38] sm:$0xf]
    %v3230 = vld [vmem:[#allocation14 + $0xd3c] sm:$0xff]
    %v3231 = vld [vmem:[#allocation14 + $0xd44] sm:$0xff]
    %v3232 = vld [vmem:[#allocation14 + $0xd4c] sm:$0xff]
    %v3233 = vld [vmem:[#allocation14 + $0xd54] sm:$0xf]
    %v3234 = vld [vmem:[#allocation14 + $0xd58] sm:$0xff]
    %v3235 = vld [vmem:[#allocation14 + $0xd60] sm:$0xff]
    %v3236 = vld [vmem:[#allocation14 + $0xd68] sm:$0xff]
    %v3237 = vld [vmem:[#allocation14 + $0xd70] sm:$0xf]
    %v3238 = vld [vmem:[#allocation14 + $0xd74] sm:$0xff]
    %v3239 = vld [vmem:[#allocation14 + $0xd7c] sm:$0xff]
    %v3240 = vld [vmem:[#allocation14 + $0xd84] sm:$0xff]
    %v3241 = vld [vmem:[#allocation14 + $0xd8c] sm:$0xf]
    %v3242 = vld [vmem:[#allocation14 + $0xd90] sm:$0xff]
    %v3243 = vld [vmem:[#allocation14 + $0xd98] sm:$0xff]
    %v3244 = vld [vmem:[#allocation14 + $0xda0] sm:$0xff]
    %v3245 = vld [vmem:[#allocation14 + $0xda8] sm:$0xf]
    %v3246 = vld [vmem:[#allocation14 + $0xdac] sm:$0xff]
    %v3247 = vld [vmem:[#allocation14 + $0xdb4] sm:$0xff]
    %v3248 = vld [vmem:[#allocation14 + $0xdbc] sm:$0xff]
    %v3249 = vld [vmem:[#allocation14 + $0xdc4] sm:$0xf]
    %v3250 = vld [vmem:[#allocation14 + $0xdc8] sm:$0xff]
    %v3251 = vld [vmem:[#allocation14 + $0xdd0] sm:$0xff]
    %v3252 = vld [vmem:[#allocation14 + $0xdd8] sm:$0xff]
    %v3253 = vld [vmem:[#allocation14 + $0xde0] sm:$0xf]
    %v3254 = vld [vmem:[#allocation14 + $0xde4] sm:$0xff]
    %v3255 = vld [vmem:[#allocation14 + $0xdec] sm:$0xff]
    %v3256 = vld [vmem:[#allocation14 + $0xdf4] sm:$0xff]
    %v3257 = vld [vmem:[#allocation14 + $0xdfc] sm:$0xf]
    %v3258 = vld [vmem:[#allocation16] sm:$0xff]
    %v3260 = vlaneseq
    %v3261 = vshrl.u32 %v3260, 7
    %v3262 = vsub.s32 0, %v3261
    %v3263 = vrot.slane %v3258, %v3262
    %v3264 = vlaneseq
    %v3265 = vshrl.u32 %v3264, 7
    %v3266 = vsub.s32 1, %v3265
    %v3267 = vrot.slane %v3258, %v3266
    %v3268 = vlaneseq
    %v3269 = vshrl.u32 %v3268, 7
    %v3270 = vsub.s32 2, %v3269
    %v3271 = vrot.slane %v3258, %v3270
    %v3272 = vlaneseq
    %v3273 = vshrl.u32 %v3272, 7
    %v3274 = vsub.s32 3, %v3273
    %v3275 = vrot.slane %v3258, %v3274
    %v3276 = vlaneseq
    %v3277 = vshrl.u32 %v3276, 7
    %v3278 = vsub.s32 4, %v3277
    %v3279 = vrot.slane %v3258, %v3278
    %v3280 = vlaneseq
    %v3281 = vshrl.u32 %v3280, 7
    %v3282 = vsub.s32 5, %v3281
    %v3283 = vrot.slane %v3258, %v3282
    %v3284 = vlaneseq
    %v3285 = vshrl.u32 %v3284, 7
    %v3286 = vsub.s32 6, %v3285
    %v3287 = vrot.slane %v3258, %v3286
    %v3807 = vunpack.c.l.b16 %v2746
    %v3808 = vunpack.c.h.b16 %v2746
    %v3809 = vunpack.c.l.b16 %v2747
    %v3810 = vunpack.c.h.b16 %v2747
    %v3811 = vunpack.c.l.b16 %v2748
    %v3812 = vunpack.c.h.b16 %v2748
    %v3813 = vunpack.c.l.b16 %v2749
    %v3814 = vunpack.c.l.b16 %v2750
    %v3815 = vunpack.c.h.b16 %v2750
    %v3816 = vunpack.c.l.b16 %v2751
    %v3817 = vunpack.c.h.b16 %v2751
    %v3818 = vunpack.c.l.b16 %v2752
    %v3819 = vunpack.c.h.b16 %v2752
    %v3820 = vunpack.c.l.b16 %v2753
    %v3821 = vunpack.c.l.b16 %v2754
    %v3822 = vunpack.c.h.b16 %v2754
    %v3823 = vunpack.c.l.b16 %v2755
    %v3824 = vunpack.c.h.b16 %v2755
    %v3825 = vunpack.c.l.b16 %v2756
    %v3826 = vunpack.c.h.b16 %v2756
    %v3827 = vunpack.c.l.b16 %v2757
    %v3828 = vunpack.c.l.b16 %v2758
    %v3829 = vunpack.c.h.b16 %v2758
    %v3830 = vunpack.c.l.b16 %v2759
    %v3831 = vunpack.c.h.b16 %v2759
    %v3832 = vunpack.c.l.b16 %v2760
    %v3833 = vunpack.c.h.b16 %v2760
    %v3834 = vunpack.c.l.b16 %v2761
    %v3835 = vunpack.c.l.b16 %v2762
    %v3836 = vunpack.c.h.b16 %v2762
    %v3837 = vunpack.c.l.b16 %v2763
    %v3838 = vunpack.c.h.b16 %v2763
    %v3839 = vunpack.c.l.b16 %v2764
    %v3840 = vunpack.c.h.b16 %v2764
    %v3841 = vunpack.c.l.b16 %v2765
    %v3842 = vunpack.c.l.b16 %v2766
    %v3843 = vunpack.c.h.b16 %v2766
    %v3844 = vunpack.c.l.b16 %v2767
    %v3845 = vunpack.c.h.b16 %v2767
    %v3846 = vunpack.c.l.b16 %v2768
    %v3847 = vunpack.c.h.b16 %v2768
    %v3848 = vunpack.c.l.b16 %v2769
    %v3849 = vunpack.c.l.b16 %v2770
    %v3850 = vunpack.c.h.b16 %v2770
    %v3851 = vunpack.c.l.b16 %v2771
    %v3852 = vunpack.c.h.b16 %v2771
    %v3853 = vunpack.c.l.b16 %v2772
    %v3854 = vunpack.c.h.b16 %v2772
    %v3855 = vunpack.c.l.b16 %v2773
    %v3856 = vunpack.c.l.b16 %v2774
    %v3857 = vunpack.c.h.b16 %v2774
    %v3858 = vunpack.c.l.b16 %v2775
    %v3859 = vunpack.c.h.b16 %v2775
    %v3860 = vunpack.c.l.b16 %v2776
    %v3861 = vunpack.c.h.b16 %v2776
    %v3862 = vunpack.c.l.b16 %v2777
    %v3863 = vunpack.c.l.b16 %v2778
    %v3864 = vunpack.c.h.b16 %v2778
    %v3865 = vunpack.c.l.b16 %v2779
    %v3866 = vunpack.c.h.b16 %v2779
    %v3867 = vunpack.c.l.b16 %v2780
    %v3868 = vunpack.c.h.b16 %v2780
    %v3869 = vunpack.c.l.b16 %v2781
    %v3870 = vunpack.c.l.b16 %v2782
    %v3871 = vunpack.c.h.b16 %v2782
    %v3872 = vunpack.c.l.b16 %v2783
    %v3873 = vunpack.c.h.b16 %v2783
    %v3874 = vunpack.c.l.b16 %v2784
    %v3875 = vunpack.c.h.b16 %v2784
    %v3876 = vunpack.c.l.b16 %v2785
    %v3877 = vunpack.c.l.b16 %v2786
    %v3878 = vunpack.c.h.b16 %v2786
    %v3879 = vunpack.c.l.b16 %v2787
    %v3880 = vunpack.c.h.b16 %v2787
    %v3881 = vunpack.c.l.b16 %v2788
    %v3882 = vunpack.c.h.b16 %v2788
    %v3883 = vunpack.c.l.b16 %v2789
    %v3884 = vunpack.c.l.b16 %v2790
    %v3885 = vunpack.c.h.b16 %v2790
    %v3886 = vunpack.c.l.b16 %v2791
    %v3887 = vunpack.c.h.b16 %v2791
    %v3888 = vunpack.c.l.b16 %v2792
    %v3889 = vunpack.c.h.b16 %v2792
    %v3890 = vunpack.c.l.b16 %v2793
    %v3891 = vunpack.c.l.b16 %v2794
    %v3892 = vunpack.c.h.b16 %v2794
    %v3893 = vunpack.c.l.b16 %v2795
    %v3894 = vunpack.c.h.b16 %v2795
    %v3895 = vunpack.c.l.b16 %v2796
    %v3896 = vunpack.c.h.b16 %v2796
    %v3897 = vunpack.c.l.b16 %v2797
    %v3898 = vunpack.c.l.b16 %v2798
    %v3899 = vunpack.c.h.b16 %v2798
    %v3900 = vunpack.c.l.b16 %v2799
    %v3901 = vunpack.c.h.b16 %v2799
    %v3902 = vunpack.c.l.b16 %v2800
    %v3903 = vunpack.c.h.b16 %v2800
    %v3904 = vunpack.c.l.b16 %v2801
    %v3905 = vunpack.c.l.b16 %v2802
    %v3906 = vunpack.c.h.b16 %v2802
    %v3907 = vunpack.c.l.b16 %v2803
    %v3908 = vunpack.c.h.b16 %v2803
    %v3909 = vunpack.c.l.b16 %v2804
    %v3910 = vunpack.c.h.b16 %v2804
    %v3911 = vunpack.c.l.b16 %v2805
    %v3912 = vunpack.c.l.b16 %v2806
    %v3913 = vunpack.c.h.b16 %v2806
    %v3914 = vunpack.c.l.b16 %v2807
    %v3915 = vunpack.c.h.b16 %v2807
    %v3916 = vunpack.c.l.b16 %v2808
    %v3917 = vunpack.c.h.b16 %v2808
    %v3918 = vunpack.c.l.b16 %v2809
    %v3919 = vunpack.c.l.b16 %v2810
    %v3920 = vunpack.c.h.b16 %v2810
    %v3921 = vunpack.c.l.b16 %v2811
    %v3922 = vunpack.c.h.b16 %v2811
    %v3923 = vunpack.c.l.b16 %v2812
    %v3924 = vunpack.c.h.b16 %v2812
    %v3925 = vunpack.c.l.b16 %v2813
    %v3926 = vunpack.c.l.b16 %v2814
    %v3927 = vunpack.c.h.b16 %v2814
    %v3928 = vunpack.c.l.b16 %v2815
    %v3929 = vunpack.c.h.b16 %v2815
    %v3930 = vunpack.c.l.b16 %v2816
    %v3931 = vunpack.c.h.b16 %v2816
    %v3932 = vunpack.c.l.b16 %v2817
    %v3933 = vunpack.c.l.b16 %v2818
    %v3934 = vunpack.c.h.b16 %v2818
    %v3935 = vunpack.c.l.b16 %v2819
    %v3936 = vunpack.c.h.b16 %v2819
    %v3937 = vunpack.c.l.b16 %v2820
    %v3938 = vunpack.c.h.b16 %v2820
    %v3939 = vunpack.c.l.b16 %v2821
    %v3940 = vunpack.c.l.b16 %v2822
    %v3941 = vunpack.c.h.b16 %v2822
    %v3942 = vunpack.c.l.b16 %v2823
    %v3943 = vunpack.c.h.b16 %v2823
    %v3944 = vunpack.c.l.b16 %v2824
    %v3945 = vunpack.c.h.b16 %v2824
    %v3946 = vunpack.c.l.b16 %v2825
    %v3947 = vunpack.c.l.b16 %v2826
    %v3948 = vunpack.c.h.b16 %v2826
    %v3949 = vunpack.c.l.b16 %v2827
    %v3950 = vunpack.c.h.b16 %v2827
    %v3951 = vunpack.c.l.b16 %v2828
    %v3952 = vunpack.c.h.b16 %v2828
    %v3953 = vunpack.c.l.b16 %v2829
    %v3954 = vunpack.c.l.b16 %v2830
    %v3955 = vunpack.c.h.b16 %v2830
    %v3956 = vunpack.c.l.b16 %v2831
    %v3957 = vunpack.c.h.b16 %v2831
    %v3958 = vunpack.c.l.b16 %v2832
    %v3959 = vunpack.c.h.b16 %v2832
    %v3960 = vunpack.c.l.b16 %v2833
    %v3961 = vunpack.c.l.b16 %v2834
    %v3962 = vunpack.c.h.b16 %v2834
    %v3963 = vunpack.c.l.b16 %v2835
    %v3964 = vunpack.c.h.b16 %v2835
    %v3965 = vunpack.c.l.b16 %v2836
    %v3966 = vunpack.c.h.b16 %v2836
    %v3967 = vunpack.c.l.b16 %v2837
    %v3968 = vunpack.c.l.b16 %v2838
    %v3969 = vunpack.c.h.b16 %v2838
    %v3970 = vunpack.c.l.b16 %v2839
    %v3971 = vunpack.c.h.b16 %v2839
    %v3972 = vunpack.c.l.b16 %v2840
    %v3973 = vunpack.c.h.b16 %v2840
    %v3974 = vunpack.c.l.b16 %v2841
    %v3975 = vunpack.c.l.b16 %v2842
    %v3976 = vunpack.c.h.b16 %v2842
    %v3977 = vunpack.c.l.b16 %v2843
    %v3978 = vunpack.c.h.b16 %v2843
    %v3979 = vunpack.c.l.b16 %v2844
    %v3980 = vunpack.c.h.b16 %v2844
    %v3981 = vunpack.c.l.b16 %v2845
    %v3982 = vunpack.c.l.b16 %v2846
    %v3983 = vunpack.c.h.b16 %v2846
    %v3984 = vunpack.c.l.b16 %v2847
    %v3985 = vunpack.c.h.b16 %v2847
    %v3986 = vunpack.c.l.b16 %v2848
    %v3987 = vunpack.c.h.b16 %v2848
    %v3988 = vunpack.c.l.b16 %v2849
    %v3989 = vunpack.c.l.b16 %v2850
    %v3990 = vunpack.c.h.b16 %v2850
    %v3991 = vunpack.c.l.b16 %v2851
    %v3992 = vunpack.c.h.b16 %v2851
    %v3993 = vunpack.c.l.b16 %v2852
    %v3994 = vunpack.c.h.b16 %v2852
    %v3995 = vunpack.c.l.b16 %v2853
    %v3996 = vunpack.c.l.b16 %v2854
    %v3997 = vunpack.c.h.b16 %v2854
    %v3998 = vunpack.c.l.b16 %v2855
    %v3999 = vunpack.c.h.b16 %v2855
    %v4000 = vunpack.c.l.b16 %v2856
    %v4001 = vunpack.c.h.b16 %v2856
    %v4002 = vunpack.c.l.b16 %v2857
    %v4003 = vunpack.c.l.b16 %v2858
    %v4004 = vunpack.c.h.b16 %v2858
    %v4005 = vunpack.c.l.b16 %v2859
    %v4006 = vunpack.c.h.b16 %v2859
    %v4007 = vunpack.c.l.b16 %v2860
    %v4008 = vunpack.c.h.b16 %v2860
    %v4009 = vunpack.c.l.b16 %v2861
    %v4010 = vunpack.c.l.b16 %v2862
    %v4011 = vunpack.c.h.b16 %v2862
    %v4012 = vunpack.c.l.b16 %v2863
    %v4013 = vunpack.c.h.b16 %v2863
    %v4014 = vunpack.c.l.b16 %v2864
    %v4015 = vunpack.c.h.b16 %v2864
    %v4016 = vunpack.c.l.b16 %v2865
    %v4017 = vunpack.c.l.b16 %v2866
    %v4018 = vunpack.c.h.b16 %v2866
    %v4019 = vunpack.c.l.b16 %v2867
    %v4020 = vunpack.c.h.b16 %v2867
    %v4021 = vunpack.c.l.b16 %v2868
    %v4022 = vunpack.c.h.b16 %v2868
    %v4023 = vunpack.c.l.b16 %v2869
    %v4024 = vunpack.c.l.b16 %v2870
    %v4025 = vunpack.c.h.b16 %v2870
    %v4026 = vunpack.c.l.b16 %v2871
    %v4027 = vunpack.c.h.b16 %v2871
    %v4028 = vunpack.c.l.b16 %v2872
    %v4029 = vunpack.c.h.b16 %v2872
    %v4030 = vunpack.c.l.b16 %v2873
    %v4031 = vunpack.c.l.b16 %v2874
    %v4032 = vunpack.c.h.b16 %v2874
    %v4033 = vunpack.c.l.b16 %v2875
    %v4034 = vunpack.c.h.b16 %v2875
    %v4035 = vunpack.c.l.b16 %v2876
    %v4036 = vunpack.c.h.b16 %v2876
    %v4037 = vunpack.c.l.b16 %v2877
    %v4038 = vunpack.c.l.b16 %v2878
    %v4039 = vunpack.c.h.b16 %v2878
    %v4040 = vunpack.c.l.b16 %v2879
    %v4041 = vunpack.c.h.b16 %v2879
    %v4042 = vunpack.c.l.b16 %v2880
    %v4043 = vunpack.c.h.b16 %v2880
    %v4044 = vunpack.c.l.b16 %v2881
    %v4045 = vunpack.c.l.b16 %v2882
    %v4046 = vunpack.c.h.b16 %v2882
    %v4047 = vunpack.c.l.b16 %v2883
    %v4048 = vunpack.c.h.b16 %v2883
    %v4049 = vunpack.c.l.b16 %v2884
    %v4050 = vunpack.c.h.b16 %v2884
    %v4051 = vunpack.c.l.b16 %v2885
    %v4052 = vunpack.c.l.b16 %v2886
    %v4053 = vunpack.c.h.b16 %v2886
    %v4054 = vunpack.c.l.b16 %v2887
    %v4055 = vunpack.c.h.b16 %v2887
    %v4056 = vunpack.c.l.b16 %v2888
    %v4057 = vunpack.c.h.b16 %v2888
    %v4058 = vunpack.c.l.b16 %v2889
    %v4059 = vunpack.c.l.b16 %v2890
    %v4060 = vunpack.c.h.b16 %v2890
    %v4061 = vunpack.c.l.b16 %v2891
    %v4062 = vunpack.c.h.b16 %v2891
    %v4063 = vunpack.c.l.b16 %v2892
    %v4064 = vunpack.c.h.b16 %v2892
    %v4065 = vunpack.c.l.b16 %v2893
    %v4066 = vunpack.c.l.b16 %v2894
    %v4067 = vunpack.c.h.b16 %v2894
    %v4068 = vunpack.c.l.b16 %v2895
    %v4069 = vunpack.c.h.b16 %v2895
    %v4070 = vunpack.c.l.b16 %v2896
    %v4071 = vunpack.c.h.b16 %v2896
    %v4072 = vunpack.c.l.b16 %v2897
    %v4073 = vunpack.c.l.b16 %v2898
    %v4074 = vunpack.c.h.b16 %v2898
    %v4075 = vunpack.c.l.b16 %v2899
    %v4076 = vunpack.c.h.b16 %v2899
    %v4077 = vunpack.c.l.b16 %v2900
    %v4078 = vunpack.c.h.b16 %v2900
    %v4079 = vunpack.c.l.b16 %v2901
    %v4080 = vunpack.c.l.b16 %v2902
    %v4081 = vunpack.c.h.b16 %v2902
    %v4082 = vunpack.c.l.b16 %v2903
    %v4083 = vunpack.c.h.b16 %v2903
    %v4084 = vunpack.c.l.b16 %v2904
    %v4085 = vunpack.c.h.b16 %v2904
    %v4086 = vunpack.c.l.b16 %v2905
    %v4087 = vunpack.c.l.b16 %v2906
    %v4088 = vunpack.c.h.b16 %v2906
    %v4089 = vunpack.c.l.b16 %v2907
    %v4090 = vunpack.c.h.b16 %v2907
    %v4091 = vunpack.c.l.b16 %v2908
    %v4092 = vunpack.c.h.b16 %v2908
    %v4093 = vunpack.c.l.b16 %v2909
    %v4094 = vunpack.c.l.b16 %v2910
    %v4095 = vunpack.c.h.b16 %v2910
    %v4096 = vunpack.c.l.b16 %v2911
    %v4097 = vunpack.c.h.b16 %v2911
    %v4098 = vunpack.c.l.b16 %v2912
    %v4099 = vunpack.c.h.b16 %v2912
    %v4100 = vunpack.c.l.b16 %v2913
    %v4101 = vunpack.c.l.b16 %v2914
    %v4102 = vunpack.c.h.b16 %v2914
    %v4103 = vunpack.c.l.b16 %v2915
    %v4104 = vunpack.c.h.b16 %v2915
    %v4105 = vunpack.c.l.b16 %v2916
    %v4106 = vunpack.c.h.b16 %v2916
    %v4107 = vunpack.c.l.b16 %v2917
    %v4108 = vunpack.c.l.b16 %v2918
    %v4109 = vunpack.c.h.b16 %v2918
    %v4110 = vunpack.c.l.b16 %v2919
    %v4111 = vunpack.c.h.b16 %v2919
    %v4112 = vunpack.c.l.b16 %v2920
    %v4113 = vunpack.c.h.b16 %v2920
    %v4114 = vunpack.c.l.b16 %v2921
    %v4115 = vunpack.c.l.b16 %v2922
    %v4116 = vunpack.c.h.b16 %v2922
    %v4117 = vunpack.c.l.b16 %v2923
    %v4118 = vunpack.c.h.b16 %v2923
    %v4119 = vunpack.c.l.b16 %v2924
    %v4120 = vunpack.c.h.b16 %v2924
    %v4121 = vunpack.c.l.b16 %v2925
    %v4122 = vunpack.c.l.b16 %v2926
    %v4123 = vunpack.c.h.b16 %v2926
    %v4124 = vunpack.c.l.b16 %v2927
    %v4125 = vunpack.c.h.b16 %v2927
    %v4126 = vunpack.c.l.b16 %v2928
    %v4127 = vunpack.c.h.b16 %v2928
    %v4128 = vunpack.c.l.b16 %v2929
    %v4129 = vunpack.c.l.b16 %v2930
    %v4130 = vunpack.c.h.b16 %v2930
    %v4131 = vunpack.c.l.b16 %v2931
    %v4132 = vunpack.c.h.b16 %v2931
    %v4133 = vunpack.c.l.b16 %v2932
    %v4134 = vunpack.c.h.b16 %v2932
    %v4135 = vunpack.c.l.b16 %v2933
    %v4136 = vunpack.c.l.b16 %v2934
    %v4137 = vunpack.c.h.b16 %v2934
    %v4138 = vunpack.c.l.b16 %v2935
    %v4139 = vunpack.c.h.b16 %v2935
    %v4140 = vunpack.c.l.b16 %v2936
    %v4141 = vunpack.c.h.b16 %v2936
    %v4142 = vunpack.c.l.b16 %v2937
    %v4143 = vunpack.c.l.b16 %v2938
    %v4144 = vunpack.c.h.b16 %v2938
    %v4145 = vunpack.c.l.b16 %v2939
    %v4146 = vunpack.c.h.b16 %v2939
    %v4147 = vunpack.c.l.b16 %v2940
    %v4148 = vunpack.c.h.b16 %v2940
    %v4149 = vunpack.c.l.b16 %v2941
    %v4150 = vunpack.c.l.b16 %v2942
    %v4151 = vunpack.c.h.b16 %v2942
    %v4152 = vunpack.c.l.b16 %v2943
    %v4153 = vunpack.c.h.b16 %v2943
    %v4154 = vunpack.c.l.b16 %v2944
    %v4155 = vunpack.c.h.b16 %v2944
    %v4156 = vunpack.c.l.b16 %v2945
    %v4157 = vunpack.c.l.b16 %v2946
    %v4158 = vunpack.c.h.b16 %v2946
    %v4159 = vunpack.c.l.b16 %v2947
    %v4160 = vunpack.c.h.b16 %v2947
    %v4161 = vunpack.c.l.b16 %v2948
    %v4162 = vunpack.c.h.b16 %v2948
    %v4163 = vunpack.c.l.b16 %v2949
    %v4164 = vunpack.c.l.b16 %v2950
    %v4165 = vunpack.c.h.b16 %v2950
    %v4166 = vunpack.c.l.b16 %v2951
    %v4167 = vunpack.c.h.b16 %v2951
    %v4168 = vunpack.c.l.b16 %v2952
    %v4169 = vunpack.c.h.b16 %v2952
    %v4170 = vunpack.c.l.b16 %v2953
    %v4171 = vunpack.c.l.b16 %v2954
    %v4172 = vunpack.c.h.b16 %v2954
    %v4173 = vunpack.c.l.b16 %v2955
    %v4174 = vunpack.c.h.b16 %v2955
    %v4175 = vunpack.c.l.b16 %v2956
    %v4176 = vunpack.c.h.b16 %v2956
    %v4177 = vunpack.c.l.b16 %v2957
    %v4178 = vunpack.c.l.b16 %v2958
    %v4179 = vunpack.c.h.b16 %v2958
    %v4180 = vunpack.c.l.b16 %v2959
    %v4181 = vunpack.c.h.b16 %v2959
    %v4182 = vunpack.c.l.b16 %v2960
    %v4183 = vunpack.c.h.b16 %v2960
    %v4184 = vunpack.c.l.b16 %v2961
    %v4185 = vunpack.c.l.b16 %v2962
    %v4186 = vunpack.c.h.b16 %v2962
    %v4187 = vunpack.c.l.b16 %v2963
    %v4188 = vunpack.c.h.b16 %v2963
    %v4189 = vunpack.c.l.b16 %v2964
    %v4190 = vunpack.c.h.b16 %v2964
    %v4191 = vunpack.c.l.b16 %v2965
    %v4192 = vunpack.c.l.b16 %v2966
    %v4193 = vunpack.c.h.b16 %v2966
    %v4194 = vunpack.c.l.b16 %v2967
    %v4195 = vunpack.c.h.b16 %v2967
    %v4196 = vunpack.c.l.b16 %v2968
    %v4197 = vunpack.c.h.b16 %v2968
    %v4198 = vunpack.c.l.b16 %v2969
    %v4199 = vunpack.c.l.b16 %v2970
    %v4200 = vunpack.c.h.b16 %v2970
    %v4201 = vunpack.c.l.b16 %v2971
    %v4202 = vunpack.c.h.b16 %v2971
    %v4203 = vunpack.c.l.b16 %v2972
    %v4204 = vunpack.c.h.b16 %v2972
    %v4205 = vunpack.c.l.b16 %v2973
    %v4206 = vunpack.c.l.b16 %v2974
    %v4207 = vunpack.c.h.b16 %v2974
    %v4208 = vunpack.c.l.b16 %v2975
    %v4209 = vunpack.c.h.b16 %v2975
    %v4210 = vunpack.c.l.b16 %v2976
    %v4211 = vunpack.c.h.b16 %v2976
    %v4212 = vunpack.c.l.b16 %v2977
    %v4213 = vunpack.c.l.b16 %v2978
    %v4214 = vunpack.c.h.b16 %v2978
    %v4215 = vunpack.c.l.b16 %v2979
    %v4216 = vunpack.c.h.b16 %v2979
    %v4217 = vunpack.c.l.b16 %v2980
    %v4218 = vunpack.c.h.b16 %v2980
    %v4219 = vunpack.c.l.b16 %v2981
    %v4220 = vunpack.c.l.b16 %v2982
    %v4221 = vunpack.c.h.b16 %v2982
    %v4222 = vunpack.c.l.b16 %v2983
    %v4223 = vunpack.c.h.b16 %v2983
    %v4224 = vunpack.c.l.b16 %v2984
    %v4225 = vunpack.c.h.b16 %v2984
    %v4226 = vunpack.c.l.b16 %v2985
    %v4227 = vunpack.c.l.b16 %v2986
    %v4228 = vunpack.c.h.b16 %v2986
    %v4229 = vunpack.c.l.b16 %v2987
    %v4230 = vunpack.c.h.b16 %v2987
    %v4231 = vunpack.c.l.b16 %v2988
    %v4232 = vunpack.c.h.b16 %v2988
    %v4233 = vunpack.c.l.b16 %v2989
    %v4234 = vunpack.c.l.b16 %v2990
    %v4235 = vunpack.c.h.b16 %v2990
    %v4236 = vunpack.c.l.b16 %v2991
    %v4237 = vunpack.c.h.b16 %v2991
    %v4238 = vunpack.c.l.b16 %v2992
    %v4239 = vunpack.c.h.b16 %v2992
    %v4240 = vunpack.c.l.b16 %v2993
    %v4241 = vunpack.c.l.b16 %v2994
    %v4242 = vunpack.c.h.b16 %v2994
    %v4243 = vunpack.c.l.b16 %v2995
    %v4244 = vunpack.c.h.b16 %v2995
    %v4245 = vunpack.c.l.b16 %v2996
    %v4246 = vunpack.c.h.b16 %v2996
    %v4247 = vunpack.c.l.b16 %v2997
    %v4248 = vunpack.c.l.b16 %v2998
    %v4249 = vunpack.c.h.b16 %v2998
    %v4250 = vunpack.c.l.b16 %v2999
    %v4251 = vunpack.c.h.b16 %v2999
    %v4252 = vunpack.c.l.b16 %v3000
    %v4253 = vunpack.c.h.b16 %v3000
    %v4254 = vunpack.c.l.b16 %v3001
    %v4255 = vunpack.c.l.b16 %v3002
    %v4256 = vunpack.c.h.b16 %v3002
    %v4257 = vunpack.c.l.b16 %v3003
    %v4258 = vunpack.c.h.b16 %v3003
    %v4259 = vunpack.c.l.b16 %v3004
    %v4260 = vunpack.c.h.b16 %v3004
    %v4261 = vunpack.c.l.b16 %v3005
    %v4262 = vunpack.c.l.b16 %v3006
    %v4263 = vunpack.c.h.b16 %v3006
    %v4264 = vunpack.c.l.b16 %v3007
    %v4265 = vunpack.c.h.b16 %v3007
    %v4266 = vunpack.c.l.b16 %v3008
    %v4267 = vunpack.c.h.b16 %v3008
    %v4268 = vunpack.c.l.b16 %v3009
    %v4269 = vunpack.c.l.b16 %v3010
    %v4270 = vunpack.c.h.b16 %v3010
    %v4271 = vunpack.c.l.b16 %v3011
    %v4272 = vunpack.c.h.b16 %v3011
    %v4273 = vunpack.c.l.b16 %v3012
    %v4274 = vunpack.c.h.b16 %v3012
    %v4275 = vunpack.c.l.b16 %v3013
    %v4276 = vunpack.c.l.b16 %v3014
    %v4277 = vunpack.c.h.b16 %v3014
    %v4278 = vunpack.c.l.b16 %v3015
    %v4279 = vunpack.c.h.b16 %v3015
    %v4280 = vunpack.c.l.b16 %v3016
    %v4281 = vunpack.c.h.b16 %v3016
    %v4282 = vunpack.c.l.b16 %v3017
    %v4283 = vunpack.c.l.b16 %v3018
    %v4284 = vunpack.c.h.b16 %v3018
    %v4285 = vunpack.c.l.b16 %v3019
    %v4286 = vunpack.c.h.b16 %v3019
    %v4287 = vunpack.c.l.b16 %v3020
    %v4288 = vunpack.c.h.b16 %v3020
    %v4289 = vunpack.c.l.b16 %v3021
    %v4290 = vunpack.c.l.b16 %v3022
    %v4291 = vunpack.c.h.b16 %v3022
    %v4292 = vunpack.c.l.b16 %v3023
    %v4293 = vunpack.c.h.b16 %v3023
    %v4294 = vunpack.c.l.b16 %v3024
    %v4295 = vunpack.c.h.b16 %v3024
    %v4296 = vunpack.c.l.b16 %v3025
    %v4297 = vunpack.c.l.b16 %v3026
    %v4298 = vunpack.c.h.b16 %v3026
    %v4299 = vunpack.c.l.b16 %v3027
    %v4300 = vunpack.c.h.b16 %v3027
    %v4301 = vunpack.c.l.b16 %v3028
    %v4302 = vunpack.c.h.b16 %v3028
    %v4303 = vunpack.c.l.b16 %v3029
    %v4304 = vunpack.c.l.b16 %v3030
    %v4305 = vunpack.c.h.b16 %v3030
    %v4306 = vunpack.c.l.b16 %v3031
    %v4307 = vunpack.c.h.b16 %v3031
    %v4308 = vunpack.c.l.b16 %v3032
    %v4309 = vunpack.c.h.b16 %v3032
    %v4310 = vunpack.c.l.b16 %v3033
    %v4311 = vunpack.c.l.b16 %v3034
    %v4312 = vunpack.c.h.b16 %v3034
    %v4313 = vunpack.c.l.b16 %v3035
    %v4314 = vunpack.c.h.b16 %v3035
    %v4315 = vunpack.c.l.b16 %v3036
    %v4316 = vunpack.c.h.b16 %v3036
    %v4317 = vunpack.c.l.b16 %v3037
    %v4318 = vunpack.c.l.b16 %v3038
    %v4319 = vunpack.c.h.b16 %v3038
    %v4320 = vunpack.c.l.b16 %v3039
    %v4321 = vunpack.c.h.b16 %v3039
    %v4322 = vunpack.c.l.b16 %v3040
    %v4323 = vunpack.c.h.b16 %v3040
    %v4324 = vunpack.c.l.b16 %v3041
    %v4325 = vunpack.c.l.b16 %v3042
    %v4326 = vunpack.c.h.b16 %v3042
    %v4327 = vunpack.c.l.b16 %v3043
    %v4328 = vunpack.c.h.b16 %v3043
    %v4329 = vunpack.c.l.b16 %v3044
    %v4330 = vunpack.c.h.b16 %v3044
    %v4331 = vunpack.c.l.b16 %v3045
    %v4332 = vunpack.c.l.b16 %v3046
    %v4333 = vunpack.c.h.b16 %v3046
    %v4334 = vunpack.c.l.b16 %v3047
    %v4335 = vunpack.c.h.b16 %v3047
    %v4336 = vunpack.c.l.b16 %v3048
    %v4337 = vunpack.c.h.b16 %v3048
    %v4338 = vunpack.c.l.b16 %v3049
    %v4339 = vunpack.c.l.b16 %v3050
    %v4340 = vunpack.c.h.b16 %v3050
    %v4341 = vunpack.c.l.b16 %v3051
    %v4342 = vunpack.c.h.b16 %v3051
    %v4343 = vunpack.c.l.b16 %v3052
    %v4344 = vunpack.c.h.b16 %v3052
    %v4345 = vunpack.c.l.b16 %v3053
    %v4346 = vunpack.c.l.b16 %v3054
    %v4347 = vunpack.c.h.b16 %v3054
    %v4348 = vunpack.c.l.b16 %v3055
    %v4349 = vunpack.c.h.b16 %v3055
    %v4350 = vunpack.c.l.b16 %v3056
    %v4351 = vunpack.c.h.b16 %v3056
    %v4352 = vunpack.c.l.b16 %v3057
    %v4353 = vunpack.c.l.b16 %v3058
    %v4354 = vunpack.c.h.b16 %v3058
    %v4355 = vunpack.c.l.b16 %v3059
    %v4356 = vunpack.c.h.b16 %v3059
    %v4357 = vunpack.c.l.b16 %v3060
    %v4358 = vunpack.c.h.b16 %v3060
    %v4359 = vunpack.c.l.b16 %v3061
    %v4360 = vunpack.c.l.b16 %v3062
    %v4361 = vunpack.c.h.b16 %v3062
    %v4362 = vunpack.c.l.b16 %v3063
    %v4363 = vunpack.c.h.b16 %v3063
    %v4364 = vunpack.c.l.b16 %v3064
    %v4365 = vunpack.c.h.b16 %v3064
    %v4366 = vunpack.c.l.b16 %v3065
    %v4367 = vunpack.c.l.b16 %v3066
    %v4368 = vunpack.c.h.b16 %v3066
    %v4369 = vunpack.c.l.b16 %v3067
    %v4370 = vunpack.c.h.b16 %v3067
    %v4371 = vunpack.c.l.b16 %v3068
    %v4372 = vunpack.c.h.b16 %v3068
    %v4373 = vunpack.c.l.b16 %v3069
    %v4374 = vunpack.c.l.b16 %v3070
    %v4375 = vunpack.c.h.b16 %v3070
    %v4376 = vunpack.c.l.b16 %v3071
    %v4377 = vunpack.c.h.b16 %v3071
    %v4378 = vunpack.c.l.b16 %v3072
    %v4379 = vunpack.c.h.b16 %v3072
    %v4380 = vunpack.c.l.b16 %v3073
    %v4381 = vunpack.c.l.b16 %v3074
    %v4382 = vunpack.c.h.b16 %v3074
    %v4383 = vunpack.c.l.b16 %v3075
    %v4384 = vunpack.c.h.b16 %v3075
    %v4385 = vunpack.c.l.b16 %v3076
    %v4386 = vunpack.c.h.b16 %v3076
    %v4387 = vunpack.c.l.b16 %v3077
    %v4388 = vunpack.c.l.b16 %v3078
    %v4389 = vunpack.c.h.b16 %v3078
    %v4390 = vunpack.c.l.b16 %v3079
    %v4391 = vunpack.c.h.b16 %v3079
    %v4392 = vunpack.c.l.b16 %v3080
    %v4393 = vunpack.c.h.b16 %v3080
    %v4394 = vunpack.c.l.b16 %v3081
    %v4395 = vunpack.c.l.b16 %v3082
    %v4396 = vunpack.c.h.b16 %v3082
    %v4397 = vunpack.c.l.b16 %v3083
    %v4398 = vunpack.c.h.b16 %v3083
    %v4399 = vunpack.c.l.b16 %v3084
    %v4400 = vunpack.c.h.b16 %v3084
    %v4401 = vunpack.c.l.b16 %v3085
    %v4402 = vunpack.c.l.b16 %v3086
    %v4403 = vunpack.c.h.b16 %v3086
    %v4404 = vunpack.c.l.b16 %v3087
    %v4405 = vunpack.c.h.b16 %v3087
    %v4406 = vunpack.c.l.b16 %v3088
    %v4407 = vunpack.c.h.b16 %v3088
    %v4408 = vunpack.c.l.b16 %v3089
    %v4409 = vunpack.c.l.b16 %v3090
    %v4410 = vunpack.c.h.b16 %v3090
    %v4411 = vunpack.c.l.b16 %v3091
    %v4412 = vunpack.c.h.b16 %v3091
    %v4413 = vunpack.c.l.b16 %v3092
    %v4414 = vunpack.c.h.b16 %v3092
    %v4415 = vunpack.c.l.b16 %v3093
    %v4416 = vunpack.c.l.b16 %v3094
    %v4417 = vunpack.c.h.b16 %v3094
    %v4418 = vunpack.c.l.b16 %v3095
    %v4419 = vunpack.c.h.b16 %v3095
    %v4420 = vunpack.c.l.b16 %v3096
    %v4421 = vunpack.c.h.b16 %v3096
    %v4422 = vunpack.c.l.b16 %v3097
    %v4423 = vunpack.c.l.b16 %v3098
    %v4424 = vunpack.c.h.b16 %v3098
    %v4425 = vunpack.c.l.b16 %v3099
    %v4426 = vunpack.c.h.b16 %v3099
    %v4427 = vunpack.c.l.b16 %v3100
    %v4428 = vunpack.c.h.b16 %v3100
    %v4429 = vunpack.c.l.b16 %v3101
    %v4430 = vunpack.c.l.b16 %v3102
    %v4431 = vunpack.c.h.b16 %v3102
    %v4432 = vunpack.c.l.b16 %v3103
    %v4433 = vunpack.c.h.b16 %v3103
    %v4434 = vunpack.c.l.b16 %v3104
    %v4435 = vunpack.c.h.b16 %v3104
    %v4436 = vunpack.c.l.b16 %v3105
    %v4437 = vunpack.c.l.b16 %v3106
    %v4438 = vunpack.c.h.b16 %v3106
    %v4439 = vunpack.c.l.b16 %v3107
    %v4440 = vunpack.c.h.b16 %v3107
    %v4441 = vunpack.c.l.b16 %v3108
    %v4442 = vunpack.c.h.b16 %v3108
    %v4443 = vunpack.c.l.b16 %v3109
    %v4444 = vunpack.c.l.b16 %v3110
    %v4445 = vunpack.c.h.b16 %v3110
    %v4446 = vunpack.c.l.b16 %v3111
    %v4447 = vunpack.c.h.b16 %v3111
    %v4448 = vunpack.c.l.b16 %v3112
    %v4449 = vunpack.c.h.b16 %v3112
    %v4450 = vunpack.c.l.b16 %v3113
    %v4451 = vunpack.c.l.b16 %v3114
    %v4452 = vunpack.c.h.b16 %v3114
    %v4453 = vunpack.c.l.b16 %v3115
    %v4454 = vunpack.c.h.b16 %v3115
    %v4455 = vunpack.c.l.b16 %v3116
    %v4456 = vunpack.c.h.b16 %v3116
    %v4457 = vunpack.c.l.b16 %v3117
    %v4458 = vunpack.c.l.b16 %v3118
    %v4459 = vunpack.c.h.b16 %v3118
    %v4460 = vunpack.c.l.b16 %v3119
    %v4461 = vunpack.c.h.b16 %v3119
    %v4462 = vunpack.c.l.b16 %v3120
    %v4463 = vunpack.c.h.b16 %v3120
    %v4464 = vunpack.c.l.b16 %v3121
    %v4465 = vunpack.c.l.b16 %v3122
    %v4466 = vunpack.c.h.b16 %v3122
    %v4467 = vunpack.c.l.b16 %v3123
    %v4468 = vunpack.c.h.b16 %v3123
    %v4469 = vunpack.c.l.b16 %v3124
    %v4470 = vunpack.c.h.b16 %v3124
    %v4471 = vunpack.c.l.b16 %v3125
    %v4472 = vunpack.c.l.b16 %v3126
    %v4473 = vunpack.c.h.b16 %v3126
    %v4474 = vunpack.c.l.b16 %v3127
    %v4475 = vunpack.c.h.b16 %v3127
    %v4476 = vunpack.c.l.b16 %v3128
    %v4477 = vunpack.c.h.b16 %v3128
    %v4478 = vunpack.c.l.b16 %v3129
    %v4479 = vunpack.c.l.b16 %v3130
    %v4480 = vunpack.c.h.b16 %v3130
    %v4481 = vunpack.c.l.b16 %v3131
    %v4482 = vunpack.c.h.b16 %v3131
    %v4483 = vunpack.c.l.b16 %v3132
    %v4484 = vunpack.c.h.b16 %v3132
    %v4485 = vunpack.c.l.b16 %v3133
    %v4486 = vunpack.c.l.b16 %v3134
    %v4487 = vunpack.c.h.b16 %v3134
    %v4488 = vunpack.c.l.b16 %v3135
    %v4489 = vunpack.c.h.b16 %v3135
    %v4490 = vunpack.c.l.b16 %v3136
    %v4491 = vunpack.c.h.b16 %v3136
    %v4492 = vunpack.c.l.b16 %v3137
    %v4493 = vunpack.c.l.b16 %v3138
    %v4494 = vunpack.c.h.b16 %v3138
    %v4495 = vunpack.c.l.b16 %v3139
    %v4496 = vunpack.c.h.b16 %v3139
    %v4497 = vunpack.c.l.b16 %v3140
    %v4498 = vunpack.c.h.b16 %v3140
    %v4499 = vunpack.c.l.b16 %v3141
    %v4500 = vunpack.c.l.b16 %v3142
    %v4501 = vunpack.c.h.b16 %v3142
    %v4502 = vunpack.c.l.b16 %v3143
    %v4503 = vunpack.c.h.b16 %v3143
    %v4504 = vunpack.c.l.b16 %v3144
    %v4505 = vunpack.c.h.b16 %v3144
    %v4506 = vunpack.c.l.b16 %v3145
    %v4507 = vunpack.c.l.b16 %v3146
    %v4508 = vunpack.c.h.b16 %v3146
    %v4509 = vunpack.c.l.b16 %v3147
    %v4510 = vunpack.c.h.b16 %v3147
    %v4511 = vunpack.c.l.b16 %v3148
    %v4512 = vunpack.c.h.b16 %v3148
    %v4513 = vunpack.c.l.b16 %v3149
    %v4514 = vunpack.c.l.b16 %v3150
    %v4515 = vunpack.c.h.b16 %v3150
    %v4516 = vunpack.c.l.b16 %v3151
    %v4517 = vunpack.c.h.b16 %v3151
    %v4518 = vunpack.c.l.b16 %v3152
    %v4519 = vunpack.c.h.b16 %v3152
    %v4520 = vunpack.c.l.b16 %v3153
    %v4521 = vunpack.c.l.b16 %v3154
    %v4522 = vunpack.c.h.b16 %v3154
    %v4523 = vunpack.c.l.b16 %v3155
    %v4524 = vunpack.c.h.b16 %v3155
    %v4525 = vunpack.c.l.b16 %v3156
    %v4526 = vunpack.c.h.b16 %v3156
    %v4527 = vunpack.c.l.b16 %v3157
    %v4528 = vunpack.c.l.b16 %v3158
    %v4529 = vunpack.c.h.b16 %v3158
    %v4530 = vunpack.c.l.b16 %v3159
    %v4531 = vunpack.c.h.b16 %v3159
    %v4532 = vunpack.c.l.b16 %v3160
    %v4533 = vunpack.c.h.b16 %v3160
    %v4534 = vunpack.c.l.b16 %v3161
    %v4535 = vunpack.c.l.b16 %v3162
    %v4536 = vunpack.c.h.b16 %v3162
    %v4537 = vunpack.c.l.b16 %v3163
    %v4538 = vunpack.c.h.b16 %v3163
    %v4539 = vunpack.c.l.b16 %v3164
    %v4540 = vunpack.c.h.b16 %v3164
    %v4541 = vunpack.c.l.b16 %v3165
    %v4542 = vunpack.c.l.b16 %v3166
    %v4543 = vunpack.c.h.b16 %v3166
    %v4544 = vunpack.c.l.b16 %v3167
    %v4545 = vunpack.c.h.b16 %v3167
    %v4546 = vunpack.c.l.b16 %v3168
    %v4547 = vunpack.c.h.b16 %v3168
    %v4548 = vunpack.c.l.b16 %v3169
    %v4549 = vunpack.c.l.b16 %v3170
    %v4550 = vunpack.c.h.b16 %v3170
    %v4551 = vunpack.c.l.b16 %v3171
    %v4552 = vunpack.c.h.b16 %v3171
    %v4553 = vunpack.c.l.b16 %v3172
    %v4554 = vunpack.c.h.b16 %v3172
    %v4555 = vunpack.c.l.b16 %v3173
    %v4556 = vunpack.c.l.b16 %v3174
    %v4557 = vunpack.c.h.b16 %v3174
    %v4558 = vunpack.c.l.b16 %v3175
    %v4559 = vunpack.c.h.b16 %v3175
    %v4560 = vunpack.c.l.b16 %v3176
    %v4561 = vunpack.c.h.b16 %v3176
    %v4562 = vunpack.c.l.b16 %v3177
    %v4563 = vunpack.c.l.b16 %v3178
    %v4564 = vunpack.c.h.b16 %v3178
    %v4565 = vunpack.c.l.b16 %v3179
    %v4566 = vunpack.c.h.b16 %v3179
    %v4567 = vunpack.c.l.b16 %v3180
    %v4568 = vunpack.c.h.b16 %v3180
    %v4569 = vunpack.c.l.b16 %v3181
    %v4570 = vunpack.c.l.b16 %v3182
    %v4571 = vunpack.c.h.b16 %v3182
    %v4572 = vunpack.c.l.b16 %v3183
    %v4573 = vunpack.c.h.b16 %v3183
    %v4574 = vunpack.c.l.b16 %v3184
    %v4575 = vunpack.c.h.b16 %v3184
    %v4576 = vunpack.c.l.b16 %v3185
    %v4577 = vunpack.c.l.b16 %v3186
    %v4578 = vunpack.c.h.b16 %v3186
    %v4579 = vunpack.c.l.b16 %v3187
    %v4580 = vunpack.c.h.b16 %v3187
    %v4581 = vunpack.c.l.b16 %v3188
    %v4582 = vunpack.c.h.b16 %v3188
    %v4583 = vunpack.c.l.b16 %v3189
    %v4584 = vunpack.c.l.b16 %v3190
    %v4585 = vunpack.c.h.b16 %v3190
    %v4586 = vunpack.c.l.b16 %v3191
    %v4587 = vunpack.c.h.b16 %v3191
    %v4588 = vunpack.c.l.b16 %v3192
    %v4589 = vunpack.c.h.b16 %v3192
    %v4590 = vunpack.c.l.b16 %v3193
    %v4591 = vunpack.c.l.b16 %v3194
    %v4592 = vunpack.c.h.b16 %v3194
    %v4593 = vunpack.c.l.b16 %v3195
    %v4594 = vunpack.c.h.b16 %v3195
    %v4595 = vunpack.c.l.b16 %v3196
    %v4596 = vunpack.c.h.b16 %v3196
    %v4597 = vunpack.c.l.b16 %v3197
    %v4598 = vunpack.c.l.b16 %v3198
    %v4599 = vunpack.c.h.b16 %v3198
    %v4600 = vunpack.c.l.b16 %v3199
    %v4601 = vunpack.c.h.b16 %v3199
    %v4602 = vunpack.c.l.b16 %v3200
    %v4603 = vunpack.c.h.b16 %v3200
    %v4604 = vunpack.c.l.b16 %v3201
    %v4605 = vunpack.c.l.b16 %v3202
    %v4606 = vunpack.c.h.b16 %v3202
    %v4607 = vunpack.c.l.b16 %v3203
    %v4608 = vunpack.c.h.b16 %v3203
    %v4609 = vunpack.c.l.b16 %v3204
    %v4610 = vunpack.c.h.b16 %v3204
    %v4611 = vunpack.c.l.b16 %v3205
    %v4612 = vunpack.c.l.b16 %v3206
    %v4613 = vunpack.c.h.b16 %v3206
    %v4614 = vunpack.c.l.b16 %v3207
    %v4615 = vunpack.c.h.b16 %v3207
    %v4616 = vunpack.c.l.b16 %v3208
    %v4617 = vunpack.c.h.b16 %v3208
    %v4618 = vunpack.c.l.b16 %v3209
    %v4619 = vunpack.c.l.b16 %v3210
    %v4620 = vunpack.c.h.b16 %v3210
    %v4621 = vunpack.c.l.b16 %v3211
    %v4622 = vunpack.c.h.b16 %v3211
    %v4623 = vunpack.c.l.b16 %v3212
    %v4624 = vunpack.c.h.b16 %v3212
    %v4625 = vunpack.c.l.b16 %v3213
    %v4626 = vunpack.c.l.b16 %v3214
    %v4627 = vunpack.c.h.b16 %v3214
    %v4628 = vunpack.c.l.b16 %v3215
    %v4629 = vunpack.c.h.b16 %v3215
    %v4630 = vunpack.c.l.b16 %v3216
    %v4631 = vunpack.c.h.b16 %v3216
    %v4632 = vunpack.c.l.b16 %v3217
    %v4633 = vunpack.c.l.b16 %v3218
    %v4634 = vunpack.c.h.b16 %v3218
    %v4635 = vunpack.c.l.b16 %v3219
    %v4636 = vunpack.c.h.b16 %v3219
    %v4637 = vunpack.c.l.b16 %v3220
    %v4638 = vunpack.c.h.b16 %v3220
    %v4639 = vunpack.c.l.b16 %v3221
    %v4640 = vunpack.c.l.b16 %v3222
    %v4641 = vunpack.c.h.b16 %v3222
    %v4642 = vunpack.c.l.b16 %v3223
    %v4643 = vunpack.c.h.b16 %v3223
    %v4644 = vunpack.c.l.b16 %v3224
    %v4645 = vunpack.c.h.b16 %v3224
    %v4646 = vunpack.c.l.b16 %v3225
    %v4647 = vunpack.c.l.b16 %v3226
    %v4648 = vunpack.c.h.b16 %v3226
    %v4649 = vunpack.c.l.b16 %v3227
    %v4650 = vunpack.c.h.b16 %v3227
    %v4651 = vunpack.c.l.b16 %v3228
    %v4652 = vunpack.c.h.b16 %v3228
    %v4653 = vunpack.c.l.b16 %v3229
    %v4654 = vunpack.c.l.b16 %v3230
    %v4655 = vunpack.c.h.b16 %v3230
    %v4656 = vunpack.c.l.b16 %v3231
    %v4657 = vunpack.c.h.b16 %v3231
    %v4658 = vunpack.c.l.b16 %v3232
    %v4659 = vunpack.c.h.b16 %v3232
    %v4660 = vunpack.c.l.b16 %v3233
    %v4661 = vunpack.c.l.b16 %v3234
    %v4662 = vunpack.c.h.b16 %v3234
    %v4663 = vunpack.c.l.b16 %v3235
    %v4664 = vunpack.c.h.b16 %v3235
    %v4665 = vunpack.c.l.b16 %v3236
    %v4666 = vunpack.c.h.b16 %v3236
    %v4667 = vunpack.c.l.b16 %v3237
    %v4668 = vunpack.c.l.b16 %v3238
    %v4669 = vunpack.c.h.b16 %v3238
    %v4670 = vunpack.c.l.b16 %v3239
    %v4671 = vunpack.c.h.b16 %v3239
    %v4672 = vunpack.c.l.b16 %v3240
    %v4673 = vunpack.c.h.b16 %v3240
    %v4674 = vunpack.c.l.b16 %v3241
    %v4675 = vunpack.c.l.b16 %v3242
    %v4676 = vunpack.c.h.b16 %v3242
    %v4677 = vunpack.c.l.b16 %v3243
    %v4678 = vunpack.c.h.b16 %v3243
    %v4679 = vunpack.c.l.b16 %v3244
    %v4680 = vunpack.c.h.b16 %v3244
    %v4681 = vunpack.c.l.b16 %v3245
    %v4682 = vunpack.c.l.b16 %v3246
    %v4683 = vunpack.c.h.b16 %v3246
    %v4684 = vunpack.c.l.b16 %v3247
    %v4685 = vunpack.c.h.b16 %v3247
    %v4686 = vunpack.c.l.b16 %v3248
    %v4687 = vunpack.c.h.b16 %v3248
    %v4688 = vunpack.c.l.b16 %v3249
    %v4689 = vunpack.c.l.b16 %v3250
    %v4690 = vunpack.c.h.b16 %v3250
    %v4691 = vunpack.c.l.b16 %v3251
    %v4692 = vunpack.c.h.b16 %v3251
    %v4693 = vunpack.c.l.b16 %v3252
    %v4694 = vunpack.c.h.b16 %v3252
    %v4695 = vunpack.c.l.b16 %v3253
    %v4696 = vunpack.c.l.b16 %v3254
    %v4697 = vunpack.c.h.b16 %v3254
    %v4698 = vunpack.c.l.b16 %v3255
    %v4699 = vunpack.c.h.b16 %v3255
    %v4700 = vunpack.c.l.b16 %v3256
    %v4701 = vunpack.c.h.b16 %v3256
    %v4702 = vunpack.c.l.b16 %v3257
    %v4703 = vpack.c.b16 %v3814, %v3807
    %v4704 = vpack.c.b16 %v3815, %v3808
    %v4705 = vpack.c.b16 %v3816, %v3809
    %v4706 = vpack.c.b16 %v3817, %v3810
    %v4707 = vpack.c.b16 %v3818, %v3811
    %v4708 = vpack.c.b16 %v3819, %v3812
    %v4709 = vpack.c.b16 %v3820, %v3813
    %v4710 = vpack.c.b16 %v3828, %v3821
    %v4711 = vpack.c.b16 %v3829, %v3822
    %v4712 = vpack.c.b16 %v3830, %v3823
    %v4713 = vpack.c.b16 %v3831, %v3824
    %v4714 = vpack.c.b16 %v3832, %v3825
    %v4715 = vpack.c.b16 %v3833, %v3826
    %v4716 = vpack.c.b16 %v3834, %v3827
    %v4717 = vpack.c.b16 %v3842, %v3835
    %v4718 = vpack.c.b16 %v3843, %v3836
    %v4719 = vpack.c.b16 %v3844, %v3837
    %v4720 = vpack.c.b16 %v3845, %v3838
    %v4721 = vpack.c.b16 %v3846, %v3839
    %v4722 = vpack.c.b16 %v3847, %v3840
    %v4723 = vpack.c.b16 %v3848, %v3841
    %v4724 = vpack.c.b16 %v3856, %v3849
    %v4725 = vpack.c.b16 %v3857, %v3850
    %v4726 = vpack.c.b16 %v3858, %v3851
    %v4727 = vpack.c.b16 %v3859, %v3852
    %v4728 = vpack.c.b16 %v3860, %v3853
    %v4729 = vpack.c.b16 %v3861, %v3854
    %v4730 = vpack.c.b16 %v3862, %v3855
    %v4731 = vpack.c.b16 %v3870, %v3863
    %v4732 = vpack.c.b16 %v3871, %v3864
    %v4733 = vpack.c.b16 %v3872, %v3865
    %v4734 = vpack.c.b16 %v3873, %v3866
    %v4735 = vpack.c.b16 %v3874, %v3867
    %v4736 = vpack.c.b16 %v3875, %v3868
    %v4737 = vpack.c.b16 %v3876, %v3869
    %v4738 = vpack.c.b16 %v3884, %v3877
    %v4739 = vpack.c.b16 %v3885, %v3878
    %v4740 = vpack.c.b16 %v3886, %v3879
    %v4741 = vpack.c.b16 %v3887, %v3880
    %v4742 = vpack.c.b16 %v3888, %v3881
    %v4743 = vpack.c.b16 %v3889, %v3882
    %v4744 = vpack.c.b16 %v3890, %v3883
    %v4745 = vpack.c.b16 %v3898, %v3891
    %v4746 = vpack.c.b16 %v3899, %v3892
    %v4747 = vpack.c.b16 %v3900, %v3893
    %v4748 = vpack.c.b16 %v3901, %v3894
    %v4749 = vpack.c.b16 %v3902, %v3895
    %v4750 = vpack.c.b16 %v3903, %v3896
    %v4751 = vpack.c.b16 %v3904, %v3897
    %v4752 = vpack.c.b16 %v3912, %v3905
    %v4753 = vpack.c.b16 %v3913, %v3906
    %v4754 = vpack.c.b16 %v3914, %v3907
    %v4755 = vpack.c.b16 %v3915, %v3908
    %v4756 = vpack.c.b16 %v3916, %v3909
    %v4757 = vpack.c.b16 %v3917, %v3910
    %v4758 = vpack.c.b16 %v3918, %v3911
    %v4759 = vpack.c.b16 %v3926, %v3919
    %v4760 = vpack.c.b16 %v3927, %v3920
    %v4761 = vpack.c.b16 %v3928, %v3921
    %v4762 = vpack.c.b16 %v3929, %v3922
    %v4763 = vpack.c.b16 %v3930, %v3923
    %v4764 = vpack.c.b16 %v3931, %v3924
    %v4765 = vpack.c.b16 %v3932, %v3925
    %v4766 = vpack.c.b16 %v3940, %v3933
    %v4767 = vpack.c.b16 %v3941, %v3934
    %v4768 = vpack.c.b16 %v3942, %v3935
    %v4769 = vpack.c.b16 %v3943, %v3936
    %v4770 = vpack.c.b16 %v3944, %v3937
    %v4771 = vpack.c.b16 %v3945, %v3938
    %v4772 = vpack.c.b16 %v3946, %v3939
    %v4773 = vpack.c.b16 %v3954, %v3947
    %v4774 = vpack.c.b16 %v3955, %v3948
    %v4775 = vpack.c.b16 %v3956, %v3949
    %v4776 = vpack.c.b16 %v3957, %v3950
    %v4777 = vpack.c.b16 %v3958, %v3951
    %v4778 = vpack.c.b16 %v3959, %v3952
    %v4779 = vpack.c.b16 %v3960, %v3953
    %v4780 = vpack.c.b16 %v3968, %v3961
    %v4781 = vpack.c.b16 %v3969, %v3962
    %v4782 = vpack.c.b16 %v3970, %v3963
    %v4783 = vpack.c.b16 %v3971, %v3964
    %v4784 = vpack.c.b16 %v3972, %v3965
    %v4785 = vpack.c.b16 %v3973, %v3966
    %v4786 = vpack.c.b16 %v3974, %v3967
    %v4787 = vpack.c.b16 %v3982, %v3975
    %v4788 = vpack.c.b16 %v3983, %v3976
    %v4789 = vpack.c.b16 %v3984, %v3977
    %v4790 = vpack.c.b16 %v3985, %v3978
    %v4791 = vpack.c.b16 %v3986, %v3979
    %v4792 = vpack.c.b16 %v3987, %v3980
    %v4793 = vpack.c.b16 %v3988, %v3981
    %v4794 = vpack.c.b16 %v3996, %v3989
    %v4795 = vpack.c.b16 %v3997, %v3990
    %v4796 = vpack.c.b16 %v3998, %v3991
    %v4797 = vpack.c.b16 %v3999, %v3992
    %v4798 = vpack.c.b16 %v4000, %v3993
    %v4799 = vpack.c.b16 %v4001, %v3994
    %v4800 = vpack.c.b16 %v4002, %v3995
    %v4801 = vpack.c.b16 %v4010, %v4003
    %v4802 = vpack.c.b16 %v4011, %v4004
    %v4803 = vpack.c.b16 %v4012, %v4005
    %v4804 = vpack.c.b16 %v4013, %v4006
    %v4805 = vpack.c.b16 %v4014, %v4007
    %v4806 = vpack.c.b16 %v4015, %v4008
    %v4807 = vpack.c.b16 %v4016, %v4009
    %v4808 = vpack.c.b16 %v4024, %v4017
    %v4809 = vpack.c.b16 %v4025, %v4018
    %v4810 = vpack.c.b16 %v4026, %v4019
    %v4811 = vpack.c.b16 %v4027, %v4020
    %v4812 = vpack.c.b16 %v4028, %v4021
    %v4813 = vpack.c.b16 %v4029, %v4022
    %v4814 = vpack.c.b16 %v4030, %v4023
    %v4815 = vpack.c.b16 %v4038, %v4031
    %v4816 = vpack.c.b16 %v4039, %v4032
    %v4817 = vpack.c.b16 %v4040, %v4033
    %v4818 = vpack.c.b16 %v4041, %v4034
    %v4819 = vpack.c.b16 %v4042, %v4035
    %v4820 = vpack.c.b16 %v4043, %v4036
    %v4821 = vpack.c.b16 %v4044, %v4037
    %v4822 = vpack.c.b16 %v4052, %v4045
    %v4823 = vpack.c.b16 %v4053, %v4046
    %v4824 = vpack.c.b16 %v4054, %v4047
    %v4825 = vpack.c.b16 %v4055, %v4048
    %v4826 = vpack.c.b16 %v4056, %v4049
    %v4827 = vpack.c.b16 %v4057, %v4050
    %v4828 = vpack.c.b16 %v4058, %v4051
    %v4829 = vpack.c.b16 %v4066, %v4059
    %v4830 = vpack.c.b16 %v4067, %v4060
    %v4831 = vpack.c.b16 %v4068, %v4061
    %v4832 = vpack.c.b16 %v4069, %v4062
    %v4833 = vpack.c.b16 %v4070, %v4063
    %v4834 = vpack.c.b16 %v4071, %v4064
    %v4835 = vpack.c.b16 %v4072, %v4065
    %v4836 = vpack.c.b16 %v4080, %v4073
    %v4837 = vpack.c.b16 %v4081, %v4074
    %v4838 = vpack.c.b16 %v4082, %v4075
    %v4839 = vpack.c.b16 %v4083, %v4076
    %v4840 = vpack.c.b16 %v4084, %v4077
    %v4841 = vpack.c.b16 %v4085, %v4078
    %v4842 = vpack.c.b16 %v4086, %v4079
    %v4843 = vpack.c.b16 %v4094, %v4087
    %v4844 = vpack.c.b16 %v4095, %v4088
    %v4845 = vpack.c.b16 %v4096, %v4089
    %v4846 = vpack.c.b16 %v4097, %v4090
    %v4847 = vpack.c.b16 %v4098, %v4091
    %v4848 = vpack.c.b16 %v4099, %v4092
    %v4849 = vpack.c.b16 %v4100, %v4093
    %v4850 = vpack.c.b16 %v4108, %v4101
    %v4851 = vpack.c.b16 %v4109, %v4102
    %v4852 = vpack.c.b16 %v4110, %v4103
    %v4853 = vpack.c.b16 %v4111, %v4104
    %v4854 = vpack.c.b16 %v4112, %v4105
    %v4855 = vpack.c.b16 %v4113, %v4106
    %v4856 = vpack.c.b16 %v4114, %v4107
    %v4857 = vpack.c.b16 %v4122, %v4115
    %v4858 = vpack.c.b16 %v4123, %v4116
    %v4859 = vpack.c.b16 %v4124, %v4117
    %v4860 = vpack.c.b16 %v4125, %v4118
    %v4861 = vpack.c.b16 %v4126, %v4119
    %v4862 = vpack.c.b16 %v4127, %v4120
    %v4863 = vpack.c.b16 %v4128, %v4121
    %v4864 = vpack.c.b16 %v4136, %v4129
    %v4865 = vpack.c.b16 %v4137, %v4130
    %v4866 = vpack.c.b16 %v4138, %v4131
    %v4867 = vpack.c.b16 %v4139, %v4132
    %v4868 = vpack.c.b16 %v4140, %v4133
    %v4869 = vpack.c.b16 %v4141, %v4134
    %v4870 = vpack.c.b16 %v4142, %v4135
    %v4871 = vpack.c.b16 %v4150, %v4143
    %v4872 = vpack.c.b16 %v4151, %v4144
    %v4873 = vpack.c.b16 %v4152, %v4145
    %v4874 = vpack.c.b16 %v4153, %v4146
    %v4875 = vpack.c.b16 %v4154, %v4147
    %v4876 = vpack.c.b16 %v4155, %v4148
    %v4877 = vpack.c.b16 %v4156, %v4149
    %v4878 = vpack.c.b16 %v4164, %v4157
    %v4879 = vpack.c.b16 %v4165, %v4158
    %v4880 = vpack.c.b16 %v4166, %v4159
    %v4881 = vpack.c.b16 %v4167, %v4160
    %v4882 = vpack.c.b16 %v4168, %v4161
    %v4883 = vpack.c.b16 %v4169, %v4162
    %v4884 = vpack.c.b16 %v4170, %v4163
    %v4885 = vpack.c.b16 %v4178, %v4171
    %v4886 = vpack.c.b16 %v4179, %v4172
    %v4887 = vpack.c.b16 %v4180, %v4173
    %v4888 = vpack.c.b16 %v4181, %v4174
    %v4889 = vpack.c.b16 %v4182, %v4175
    %v4890 = vpack.c.b16 %v4183, %v4176
    %v4891 = vpack.c.b16 %v4184, %v4177
    %v4892 = vpack.c.b16 %v4192, %v4185
    %v4893 = vpack.c.b16 %v4193, %v4186
    %v4894 = vpack.c.b16 %v4194, %v4187
    %v4895 = vpack.c.b16 %v4195, %v4188
    %v4896 = vpack.c.b16 %v4196, %v4189
    %v4897 = vpack.c.b16 %v4197, %v4190
    %v4898 = vpack.c.b16 %v4198, %v4191
    %v4899 = vpack.c.b16 %v4206, %v4199
    %v4900 = vpack.c.b16 %v4207, %v4200
    %v4901 = vpack.c.b16 %v4208, %v4201
    %v4902 = vpack.c.b16 %v4209, %v4202
    %v4903 = vpack.c.b16 %v4210, %v4203
    %v4904 = vpack.c.b16 %v4211, %v4204
    %v4905 = vpack.c.b16 %v4212, %v4205
    %v4906 = vpack.c.b16 %v4220, %v4213
    %v4907 = vpack.c.b16 %v4221, %v4214
    %v4908 = vpack.c.b16 %v4222, %v4215
    %v4909 = vpack.c.b16 %v4223, %v4216
    %v4910 = vpack.c.b16 %v4224, %v4217
    %v4911 = vpack.c.b16 %v4225, %v4218
    %v4912 = vpack.c.b16 %v4226, %v4219
    %v4913 = vpack.c.b16 %v4234, %v4227
    %v4914 = vpack.c.b16 %v4235, %v4228
    %v4915 = vpack.c.b16 %v4236, %v4229
    %v4916 = vpack.c.b16 %v4237, %v4230
    %v4917 = vpack.c.b16 %v4238, %v4231
    %v4918 = vpack.c.b16 %v4239, %v4232
    %v4919 = vpack.c.b16 %v4240, %v4233
    %v4920 = vpack.c.b16 %v4248, %v4241
    %v4921 = vpack.c.b16 %v4249, %v4242
    %v4922 = vpack.c.b16 %v4250, %v4243
    %v4923 = vpack.c.b16 %v4251, %v4244
    %v4924 = vpack.c.b16 %v4252, %v4245
    %v4925 = vpack.c.b16 %v4253, %v4246
    %v4926 = vpack.c.b16 %v4254, %v4247
    %v4927 = vpack.c.b16 %v4262, %v4255
    %v4928 = vpack.c.b16 %v4263, %v4256
    %v4929 = vpack.c.b16 %v4264, %v4257
    %v4930 = vpack.c.b16 %v4265, %v4258
    %v4931 = vpack.c.b16 %v4266, %v4259
    %v4932 = vpack.c.b16 %v4267, %v4260
    %v4933 = vpack.c.b16 %v4268, %v4261
    %v4934 = vpack.c.b16 %v4276, %v4269
    %v4935 = vpack.c.b16 %v4277, %v4270
    %v4936 = vpack.c.b16 %v4278, %v4271
    %v4937 = vpack.c.b16 %v4279, %v4272
    %v4938 = vpack.c.b16 %v4280, %v4273
    %v4939 = vpack.c.b16 %v4281, %v4274
    %v4940 = vpack.c.b16 %v4282, %v4275
    %v4941 = vpack.c.b16 %v4290, %v4283
    %v4942 = vpack.c.b16 %v4291, %v4284
    %v4943 = vpack.c.b16 %v4292, %v4285
    %v4944 = vpack.c.b16 %v4293, %v4286
    %v4945 = vpack.c.b16 %v4294, %v4287
    %v4946 = vpack.c.b16 %v4295, %v4288
    %v4947 = vpack.c.b16 %v4296, %v4289
    %v4948 = vpack.c.b16 %v4304, %v4297
    %v4949 = vpack.c.b16 %v4305, %v4298
    %v4950 = vpack.c.b16 %v4306, %v4299
    %v4951 = vpack.c.b16 %v4307, %v4300
    %v4952 = vpack.c.b16 %v4308, %v4301
    %v4953 = vpack.c.b16 %v4309, %v4302
    %v4954 = vpack.c.b16 %v4310, %v4303
    %v4955 = vpack.c.b16 %v4318, %v4311
    %v4956 = vpack.c.b16 %v4319, %v4312
    %v4957 = vpack.c.b16 %v4320, %v4313
    %v4958 = vpack.c.b16 %v4321, %v4314
    %v4959 = vpack.c.b16 %v4322, %v4315
    %v4960 = vpack.c.b16 %v4323, %v4316
    %v4961 = vpack.c.b16 %v4324, %v4317
    %v4962 = vpack.c.b16 %v4332, %v4325
    %v4963 = vpack.c.b16 %v4333, %v4326
    %v4964 = vpack.c.b16 %v4334, %v4327
    %v4965 = vpack.c.b16 %v4335, %v4328
    %v4966 = vpack.c.b16 %v4336, %v4329
    %v4967 = vpack.c.b16 %v4337, %v4330
    %v4968 = vpack.c.b16 %v4338, %v4331
    %v4969 = vpack.c.b16 %v4346, %v4339
    %v4970 = vpack.c.b16 %v4347, %v4340
    %v4971 = vpack.c.b16 %v4348, %v4341
    %v4972 = vpack.c.b16 %v4349, %v4342
    %v4973 = vpack.c.b16 %v4350, %v4343
    %v4974 = vpack.c.b16 %v4351, %v4344
    %v4975 = vpack.c.b16 %v4352, %v4345
    %v4976 = vpack.c.b16 %v4360, %v4353
    %v4977 = vpack.c.b16 %v4361, %v4354
    %v4978 = vpack.c.b16 %v4362, %v4355
    %v4979 = vpack.c.b16 %v4363, %v4356
    %v4980 = vpack.c.b16 %v4364, %v4357
    %v4981 = vpack.c.b16 %v4365, %v4358
    %v4982 = vpack.c.b16 %v4366, %v4359
    %v4983 = vpack.c.b16 %v4374, %v4367
    %v4984 = vpack.c.b16 %v4375, %v4368
    %v4985 = vpack.c.b16 %v4376, %v4369
    %v4986 = vpack.c.b16 %v4377, %v4370
    %v4987 = vpack.c.b16 %v4378, %v4371
    %v4988 = vpack.c.b16 %v4379, %v4372
    %v4989 = vpack.c.b16 %v4380, %v4373
    %v4990 = vpack.c.b16 %v4388, %v4381
    %v4991 = vpack.c.b16 %v4389, %v4382
    %v4992 = vpack.c.b16 %v4390, %v4383
    %v4993 = vpack.c.b16 %v4391, %v4384
    %v4994 = vpack.c.b16 %v4392, %v4385
    %v4995 = vpack.c.b16 %v4393, %v4386
    %v4996 = vpack.c.b16 %v4394, %v4387
    %v4997 = vpack.c.b16 %v4402, %v4395
    %v4998 = vpack.c.b16 %v4403, %v4396
    %v4999 = vpack.c.b16 %v4404, %v4397
    %v5000 = vpack.c.b16 %v4405, %v4398
    %v5001 = vpack.c.b16 %v4406, %v4399
    %v5002 = vpack.c.b16 %v4407, %v4400
    %v5003 = vpack.c.b16 %v4408, %v4401
    %v5004 = vpack.c.b16 %v4416, %v4409
    %v5005 = vpack.c.b16 %v4417, %v4410
    %v5006 = vpack.c.b16 %v4418, %v4411
    %v5007 = vpack.c.b16 %v4419, %v4412
    %v5008 = vpack.c.b16 %v4420, %v4413
    %v5009 = vpack.c.b16 %v4421, %v4414
    %v5010 = vpack.c.b16 %v4422, %v4415
    %v5011 = vpack.c.b16 %v4430, %v4423
    %v5012 = vpack.c.b16 %v4431, %v4424
    %v5013 = vpack.c.b16 %v4432, %v4425
    %v5014 = vpack.c.b16 %v4433, %v4426
    %v5015 = vpack.c.b16 %v4434, %v4427
    %v5016 = vpack.c.b16 %v4435, %v4428
    %v5017 = vpack.c.b16 %v4436, %v4429
    %v5018 = vpack.c.b16 %v4444, %v4437
    %v5019 = vpack.c.b16 %v4445, %v4438
    %v5020 = vpack.c.b16 %v4446, %v4439
    %v5021 = vpack.c.b16 %v4447, %v4440
    %v5022 = vpack.c.b16 %v4448, %v4441
    %v5023 = vpack.c.b16 %v4449, %v4442
    %v5024 = vpack.c.b16 %v4450, %v4443
    %v5025 = vpack.c.b16 %v4458, %v4451
    %v5026 = vpack.c.b16 %v4459, %v4452
    %v5027 = vpack.c.b16 %v4460, %v4453
    %v5028 = vpack.c.b16 %v4461, %v4454
    %v5029 = vpack.c.b16 %v4462, %v4455
    %v5030 = vpack.c.b16 %v4463, %v4456
    %v5031 = vpack.c.b16 %v4464, %v4457
    %v5032 = vpack.c.b16 %v4472, %v4465
    %v5033 = vpack.c.b16 %v4473, %v4466
    %v5034 = vpack.c.b16 %v4474, %v4467
    %v5035 = vpack.c.b16 %v4475, %v4468
    %v5036 = vpack.c.b16 %v4476, %v4469
    %v5037 = vpack.c.b16 %v4477, %v4470
    %v5038 = vpack.c.b16 %v4478, %v4471
    %v5039 = vpack.c.b16 %v4486, %v4479
    %v5040 = vpack.c.b16 %v4487, %v4480
    %v5041 = vpack.c.b16 %v4488, %v4481
    %v5042 = vpack.c.b16 %v4489, %v4482
    %v5043 = vpack.c.b16 %v4490, %v4483
    %v5044 = vpack.c.b16 %v4491, %v4484
    %v5045 = vpack.c.b16 %v4492, %v4485
    %v5046 = vpack.c.b16 %v4500, %v4493
    %v5047 = vpack.c.b16 %v4501, %v4494
    %v5048 = vpack.c.b16 %v4502, %v4495
    %v5049 = vpack.c.b16 %v4503, %v4496
    %v5050 = vpack.c.b16 %v4504, %v4497
    %v5051 = vpack.c.b16 %v4505, %v4498
    %v5052 = vpack.c.b16 %v4506, %v4499
    %v5053 = vpack.c.b16 %v4514, %v4507
    %v5054 = vpack.c.b16 %v4515, %v4508
    %v5055 = vpack.c.b16 %v4516, %v4509
    %v5056 = vpack.c.b16 %v4517, %v4510
    %v5057 = vpack.c.b16 %v4518, %v4511
    %v5058 = vpack.c.b16 %v4519, %v4512
    %v5059 = vpack.c.b16 %v4520, %v4513
    %v5060 = vpack.c.b16 %v4528, %v4521
    %v5061 = vpack.c.b16 %v4529, %v4522
    %v5062 = vpack.c.b16 %v4530, %v4523
    %v5063 = vpack.c.b16 %v4531, %v4524
    %v5064 = vpack.c.b16 %v4532, %v4525
    %v5065 = vpack.c.b16 %v4533, %v4526
    %v5066 = vpack.c.b16 %v4534, %v4527
    %v5067 = vpack.c.b16 %v4542, %v4535
    %v5068 = vpack.c.b16 %v4543, %v4536
    %v5069 = vpack.c.b16 %v4544, %v4537
    %v5070 = vpack.c.b16 %v4545, %v4538
    %v5071 = vpack.c.b16 %v4546, %v4539
    %v5072 = vpack.c.b16 %v4547, %v4540
    %v5073 = vpack.c.b16 %v4548, %v4541
    %v5074 = vpack.c.b16 %v4556, %v4549
    %v5075 = vpack.c.b16 %v4557, %v4550
    %v5076 = vpack.c.b16 %v4558, %v4551
    %v5077 = vpack.c.b16 %v4559, %v4552
    %v5078 = vpack.c.b16 %v4560, %v4553
    %v5079 = vpack.c.b16 %v4561, %v4554
    %v5080 = vpack.c.b16 %v4562, %v4555
    %v5081 = vpack.c.b16 %v4570, %v4563
    %v5082 = vpack.c.b16 %v4571, %v4564
    %v5083 = vpack.c.b16 %v4572, %v4565
    %v5084 = vpack.c.b16 %v4573, %v4566
    %v5085 = vpack.c.b16 %v4574, %v4567
    %v5086 = vpack.c.b16 %v4575, %v4568
    %v5087 = vpack.c.b16 %v4576, %v4569
    %v5088 = vpack.c.b16 %v4584, %v4577
    %v5089 = vpack.c.b16 %v4585, %v4578
    %v5090 = vpack.c.b16 %v4586, %v4579
    %v5091 = vpack.c.b16 %v4587, %v4580
    %v5092 = vpack.c.b16 %v4588, %v4581
    %v5093 = vpack.c.b16 %v4589, %v4582
    %v5094 = vpack.c.b16 %v4590, %v4583
    %v5095 = vpack.c.b16 %v4598, %v4591
    %v5096 = vpack.c.b16 %v4599, %v4592
    %v5097 = vpack.c.b16 %v4600, %v4593
    %v5098 = vpack.c.b16 %v4601, %v4594
    %v5099 = vpack.c.b16 %v4602, %v4595
    %v5100 = vpack.c.b16 %v4603, %v4596
    %v5101 = vpack.c.b16 %v4604, %v4597
    %v5102 = vpack.c.b16 %v4612, %v4605
    %v5103 = vpack.c.b16 %v4613, %v4606
    %v5104 = vpack.c.b16 %v4614, %v4607
    %v5105 = vpack.c.b16 %v4615, %v4608
    %v5106 = vpack.c.b16 %v4616, %v4609
    %v5107 = vpack.c.b16 %v4617, %v4610
    %v5108 = vpack.c.b16 %v4618, %v4611
    %v5109 = vpack.c.b16 %v4626, %v4619
    %v5110 = vpack.c.b16 %v4627, %v4620
    %v5111 = vpack.c.b16 %v4628, %v4621
    %v5112 = vpack.c.b16 %v4629, %v4622
    %v5113 = vpack.c.b16 %v4630, %v4623
    %v5114 = vpack.c.b16 %v4631, %v4624
    %v5115 = vpack.c.b16 %v4632, %v4625
    %v5116 = vpack.c.b16 %v4640, %v4633
    %v5117 = vpack.c.b16 %v4641, %v4634
    %v5118 = vpack.c.b16 %v4642, %v4635
    %v5119 = vpack.c.b16 %v4643, %v4636
    %v5120 = vpack.c.b16 %v4644, %v4637
    %v5121 = vpack.c.b16 %v4645, %v4638
    %v5122 = vpack.c.b16 %v4646, %v4639
    %v5123 = vpack.c.b16 %v4654, %v4647
    %v5124 = vpack.c.b16 %v4655, %v4648
    %v5125 = vpack.c.b16 %v4656, %v4649
    %v5126 = vpack.c.b16 %v4657, %v4650
    %v5127 = vpack.c.b16 %v4658, %v4651
    %v5128 = vpack.c.b16 %v4659, %v4652
    %v5129 = vpack.c.b16 %v4660, %v4653
    %v5130 = vpack.c.b16 %v4668, %v4661
    %v5131 = vpack.c.b16 %v4669, %v4662
    %v5132 = vpack.c.b16 %v4670, %v4663
    %v5133 = vpack.c.b16 %v4671, %v4664
    %v5134 = vpack.c.b16 %v4672, %v4665
    %v5135 = vpack.c.b16 %v4673, %v4666
    %v5136 = vpack.c.b16 %v4674, %v4667
    %v5137 = vpack.c.b16 %v4682, %v4675
    %v5138 = vpack.c.b16 %v4683, %v4676
    %v5139 = vpack.c.b16 %v4684, %v4677
    %v5140 = vpack.c.b16 %v4685, %v4678
    %v5141 = vpack.c.b16 %v4686, %v4679
    %v5142 = vpack.c.b16 %v4687, %v4680
    %v5143 = vpack.c.b16 %v4688, %v4681
    %v5144 = vpack.c.b16 %v4696, %v4689
    %v5145 = vpack.c.b16 %v4697, %v4690
    %v5146 = vpack.c.b16 %v4698, %v4691
    %v5147 = vpack.c.b16 %v4699, %v4692
    %v5148 = vpack.c.b16 %v4700, %v4693
    %v5149 = vpack.c.b16 %v4701, %v4694
    %v5150 = vpack.c.b16 %v4702, %v4695
    %5599 = vmatprep.subr.bf16.mxu0 %v4704
    %5600 = vmatpush1.bf16.msra.mxu0 %v4703
    %5601 = vmatprep.subr.bf16.mxu0 %v4711
    %5602 = vmatpush1.bf16.msra.mxu0 %v4710
    %5603 = vmatprep.subr.bf16.mxu0 %v4718
    %5604 = vmatpush1.bf16.msra.mxu0 %v4717
    %5605 = vmatprep.subr.bf16.mxu0 %v4725
    %5606 = vmatpush1.bf16.msra.mxu0 %v4724
    %5607 = vmatprep.subr.bf16.mxu0 %v4732
    %5608 = vmatpush1.bf16.msra.mxu0 %v4731
    %5609 = vmatprep.subr.bf16.mxu0 %v4739
    %5610 = vmatpush1.bf16.msra.mxu0 %v4738
    %5611 = vmatprep.subr.bf16.mxu0 %v4746
    %5612 = vmatpush1.bf16.msra.mxu0 %v4745
    %5613 = vmatprep.subr.bf16.mxu0 %v4753
    %5614 = vmatpush1.bf16.msra.mxu0 %v4752
    %5615 = vmatprep.subr.bf16.mxu0 %v4760
    %5616 = vmatpush1.bf16.msra.mxu0 %v4759
    %5617 = vmatprep.subr.bf16.mxu0 %v4767
    %5618 = vmatpush1.bf16.msra.mxu0 %v4766
    %5619 = vmatprep.subr.bf16.mxu0 %v4774
    %5620 = vmatpush1.bf16.msra.mxu0 %v4773
    %5621 = vmatprep.subr.bf16.mxu0 %v4781
    %5622 = vmatpush1.bf16.msra.mxu0 %v4780
    %5623 = vmatprep.subr.bf16.mxu0 %v4788
    %5624 = vmatpush1.bf16.msra.mxu0 %v4787
    %5625 = vmatprep.subr.bf16.mxu0 %v4795
    %5626 = vmatpush1.bf16.msra.mxu0 %v4794
    %5627 = vmatprep.subr.bf16.mxu0 %v4802
    %5628 = vmatpush1.bf16.msra.mxu0 %v4801
    %5629 = vmatprep.subr.bf16.mxu0 %v4809
    %5630 = vmatpush1.bf16.msra.mxu0 %v4808
    %5631 = vmatprep.mubr.bf16.mxu0 %v2739
    %5632 = vmatmul.mubr.bf16.gmra.mrb[0].mxu0 %v2738
    %v5633 = vpop.f32.mrb[0].mxu0
    %v5634 = vadd.f32 %v3263, %v5633
    %v5635 = vpop.f32.mrb[0].mxu0
    %v5636 = vadd.f32 %v3267, %v5635
    %v5637 = vpop.f32.mrb[0].mxu0
    %v5638 = vpop.f32.mrb[0].mxu0
    %5639 = vdwg.mxu0
    %5640 = vmatprep.subr.bf16.mxu0 %v4816
    %5641 = vmatpush1.bf16.msra.mxu0 %v4815
    %5642 = vmatprep.subr.bf16.mxu0 %v4823
    %5643 = vmatpush1.bf16.msra.mxu0 %v4822
    %5644 = vmatprep.subr.bf16.mxu0 %v4830
    %5645 = vmatpush1.bf16.msra.mxu0 %v4829
    %5646 = vmatprep.subr.bf16.mxu0 %v4837
    %5647 = vmatpush1.bf16.msra.mxu0 %v4836
    %5648 = vmatprep.subr.bf16.mxu0 %v4844
    %5649 = vmatpush1.bf16.msra.mxu0 %v4843
    %5650 = vmatprep.subr.bf16.mxu0 %v4851
    %5651 = vmatpush1.bf16.msra.mxu0 %v4850
    %5652 = vmatprep.subr.bf16.mxu0 %v4858
    %5653 = vmatpush1.bf16.msra.mxu0 %v4857
    %5654 = vmatprep.subr.bf16.mxu0 %v4865
    %5655 = vmatpush1.bf16.msra.mxu0 %v4864
    %5656 = vmatprep.subr.bf16.mxu0 %v4872
    %5657 = vmatpush1.bf16.msra.mxu0 %v4871
    %5658 = vmatprep.subr.bf16.mxu0 %v4879
    %5659 = vmatpush1.bf16.msra.mxu0 %v4878
    %5660 = vmatprep.subr.bf16.mxu0 %v4886
    %5661 = vmatpush1.bf16.msra.mxu0 %v4885
    %5662 = vmatprep.subr.bf16.mxu0 %v4893
    %5663 = vmatpush1.bf16.msra.mxu0 %v4892
    %5664 = vmatprep.subr.bf16.mxu0 %v4900
    %5665 = vmatpush1.bf16.msra.mxu0 %v4899
    %5666 = vmatprep.subr.bf16.mxu0 %v4907
    %5667 = vmatpush1.bf16.msra.mxu0 %v4906
    %5668 = vmatprep.subr.bf16.mxu0 %v4914
    %5669 = vmatpush1.bf16.msra.mxu0 %v4913
    %5670 = vmatprep.subr.bf16.mxu0 %v4921
    %5671 = vmatpush1.bf16.msra.mxu0 %v4920
    %5672 = vmatprep.mubr.bf16.mxu0 %v2741
    %5673 = vmatmul.mubr.bf16.gmra.mrb[0].mxu0 %v2740
    %v5674 = vpop.f32.mrb[0].mxu0
    %v5675 = vadd.f32 %v5634, %v5674
    %v5676 = vpop.f32.mrb[0].mxu0
    %v5677 = vadd.f32 %v5636, %v5676
    %v5678 = vpop.f32.mrb[0].mxu0
    %v5679 = vpop.f32.mrb[0].mxu0
    %5680 = vdwg.mxu0
    %5681 = vmatprep.subr.bf16.mxu0 %v4928
    %5682 = vmatpush1.bf16.msra.mxu0 %v4927
    %5683 = vmatprep.subr.bf16.mxu0 %v4935
    %5684 = vmatpush1.bf16.msra.mxu0 %v4934
    %5685 = vmatprep.subr.bf16.mxu0 %v4942
    %5686 = vmatpush1.bf16.msra.mxu0 %v4941
    %5687 = vmatprep.subr.bf16.mxu0 %v4949
    %5688 = vmatpush1.bf16.msra.mxu0 %v4948
    %5689 = vmatprep.subr.bf16.mxu0 %v4956
    %5690 = vmatpush1.bf16.msra.mxu0 %v4955
    %5691 = vmatprep.subr.bf16.mxu0 %v4963
    %5692 = vmatpush1.bf16.msra.mxu0 %v4962
    %5693 = vmatprep.subr.bf16.mxu0 %v4970
    %5694 = vmatpush1.bf16.msra.mxu0 %v4969
    %5695 = vmatprep.subr.bf16.mxu0 %v4977
    %5696 = vmatpush1.bf16.msra.mxu0 %v4976
    %5697 = vmatprep.subr.bf16.mxu0 %v4984
    %5698 = vmatpush1.bf16.msra.mxu0 %v4983
    %5699 = vmatprep.subr.bf16.mxu0 %v4991
    %5700 = vmatpush1.bf16.msra.mxu0 %v4990
    %5701 = vmatprep.subr.bf16.mxu0 %v4998
    %5702 = vmatpush1.bf16.msra.mxu0 %v4997
    %5703 = vmatprep.subr.bf16.mxu0 %v5005
    %5704 = vmatpush1.bf16.msra.mxu0 %v5004
    %5705 = vmatprep.subr.bf16.mxu0 %v5012
    %5706 = vmatpush1.bf16.msra.mxu0 %v5011
    %5707 = vmatprep.subr.bf16.mxu0 %v5019
    %5708 = vmatpush1.bf16.msra.mxu0 %v5018
    %5709 = vmatprep.subr.bf16.mxu0 %v5026
    %5710 = vmatpush1.bf16.msra.mxu0 %v5025
    %5711 = vmatprep.subr.bf16.mxu0 %v5033
    %5712 = vmatpush1.bf16.msra.mxu0 %v5032
    %5713 = vmatprep.mubr.bf16.mxu0 %v2743
    %5714 = vmatmul.mubr.bf16.gmra.mrb[0].mxu0 %v2742
    %v5715 = vpop.f32.mrb[0].mxu0
    %v5716 = vadd.f32 %v5675, %v5715
    %v5717 = vpop.f32.mrb[0].mxu0
    %v5718 = vadd.f32 %v5677, %v5717
    %v5719 = vpop.f32.mrb[0].mxu0
    %v5720 = vpop.f32.mrb[0].mxu0
    %5721 = vdwg.mxu0
    %5722 = vmatprep.subr.bf16.mxu0 %v5040
    %5723 = vmatpush1.bf16.msra.mxu0 %v5039
    %5724 = vmatprep.subr.bf16.mxu0 %v5047
    %5725 = vmatpush1.bf16.msra.mxu0 %v5046
    %5726 = vmatprep.subr.bf16.mxu0 %v5054
    %5727 = vmatpush1.bf16.msra.mxu0 %v5053
    %5728 = vmatprep.subr.bf16.mxu0 %v5061
    %5729 = vmatpush1.bf16.msra.mxu0 %v5060
    %5730 = vmatprep.subr.bf16.mxu0 %v5068
    %5731 = vmatpush1.bf16.msra.mxu0 %v5067
    %5732 = vmatprep.subr.bf16.mxu0 %v5075
    %5733 = vmatpush1.bf16.msra.mxu0 %v5074
    %5734 = vmatprep.subr.bf16.mxu0 %v5082
    %5735 = vmatpush1.bf16.msra.mxu0 %v5081
    %5736 = vmatprep.subr.bf16.mxu0 %v5089
    %5737 = vmatpush1.bf16.msra.mxu0 %v5088
    %5738 = vmatprep.subr.bf16.mxu0 %v5096
    %5739 = vmatpush1.bf16.msra.mxu0 %v5095
    %5740 = vmatprep.subr.bf16.mxu0 %v5103
    %5741 = vmatpush1.bf16.msra.mxu0 %v5102
    %5742 = vmatprep.subr.bf16.mxu0 %v5110
    %5743 = vmatpush1.bf16.msra.mxu0 %v5109
    %5744 = vmatprep.subr.bf16.mxu0 %v5117
    %5745 = vmatpush1.bf16.msra.mxu0 %v5116
    %5746 = vmatprep.subr.bf16.mxu0 %v5124
    %5747 = vmatpush1.bf16.msra.mxu0 %v5123
    %5748 = vmatprep.subr.bf16.mxu0 %v5131
    %5749 = vmatpush1.bf16.msra.mxu0 %v5130
    %5750 = vmatprep.subr.bf16.mxu0 %v5138
    %5751 = vmatpush1.bf16.msra.mxu0 %v5137
    %5752 = vmatprep.subr.bf16.mxu0 %v5145
    %5753 = vmatpush1.bf16.msra.mxu0 %v5144
    %5754 = vmatprep.mubr.bf16.mxu0 %v2745
    %5755 = vmatmul.mubr.bf16.gmra.mrb[0].mxu0 %v2744
    %v5756 = vpop.f32.mrb[0].mxu0
    %v5757 = vadd.f32 %v5716, %v5756
    %v5758 = vpop.f32.mrb[0].mxu0
    %v5759 = vadd.f32 %v5718, %v5758
    %v5760 = vpop.f32.mrb[0].mxu0
    %v5761 = vpop.f32.mrb[0].mxu0
    %5762 = vdwg.mxu0
    %5763 = vmatprep.subr.bf16.mxu0 %v4706
    %5764 = vmatpush1.bf16.msra.mxu0 %v4705
    %5765 = vmatprep.subr.bf16.mxu0 %v4713
    %5766 = vmatpush1.bf16.msra.mxu0 %v4712
    %5767 = vmatprep.subr.bf16.mxu0 %v4720
    %5768 = vmatpush1.bf16.msra.mxu0 %v4719
    %5769 = vmatprep.subr.bf16.mxu0 %v4727
    %5770 = vmatpush1.bf16.msra.mxu0 %v4726
    %5771 = vmatprep.subr.bf16.mxu0 %v4734
    %5772 = vmatpush1.bf16.msra.mxu0 %v4733
    %5773 = vmatprep.subr.bf16.mxu0 %v4741
    %5774 = vmatpush1.bf16.msra.mxu0 %v4740
    %5775 = vmatprep.subr.bf16.mxu0 %v4748
    %5776 = vmatpush1.bf16.msra.mxu0 %v4747
    %5777 = vmatprep.subr.bf16.mxu0 %v4755
    %5778 = vmatpush1.bf16.msra.mxu0 %v4754
    %5779 = vmatprep.subr.bf16.mxu0 %v4762
    %5780 = vmatpush1.bf16.msra.mxu0 %v4761
    %5781 = vmatprep.subr.bf16.mxu0 %v4769
    %5782 = vmatpush1.bf16.msra.mxu0 %v4768
    %5783 = vmatprep.subr.bf16.mxu0 %v4776
    %5784 = vmatpush1.bf16.msra.mxu0 %v4775
    %5785 = vmatprep.subr.bf16.mxu0 %v4783
    %5786 = vmatpush1.bf16.msra.mxu0 %v4782
    %5787 = vmatprep.subr.bf16.mxu0 %v4790
    %5788 = vmatpush1.bf16.msra.mxu0 %v4789
    %5789 = vmatprep.subr.bf16.mxu0 %v4797
    %5790 = vmatpush1.bf16.msra.mxu0 %v4796
    %5791 = vmatprep.subr.bf16.mxu0 %v4804
    %5792 = vmatpush1.bf16.msra.mxu0 %v4803
    %5793 = vmatprep.subr.bf16.mxu0 %v4811
    %5794 = vmatpush1.bf16.msra.mxu0 %v4810
    %5795 = vmatprep.mubr.bf16.mxu0 %v2739
    %5796 = vmatmul.mubr.bf16.gmra.mrb[0].mxu0 %v2738
    %v5797 = vpop.f32.mrb[0].mxu0
    %v5798 = vadd.f32 %v3271, %v5797
    %v5799 = vpop.f32.mrb[0].mxu0
    %v5800 = vadd.f32 %v3275, %v5799
    %v5801 = vpop.f32.mrb[0].mxu0
    %v5802 = vpop.f32.mrb[0].mxu0
    %5803 = vdwg.mxu0
    %5804 = vmatprep.subr.bf16.mxu0 %v4818
    %5805 = vmatpush1.bf16.msra.mxu0 %v4817
    %5806 = vmatprep.subr.bf16.mxu0 %v4825
    %5807 = vmatpush1.bf16.msra.mxu0 %v4824
    %5808 = vmatprep.subr.bf16.mxu0 %v4832
    %5809 = vmatpush1.bf16.msra.mxu0 %v4831
    %5810 = vmatprep.subr.bf16.mxu0 %v4839
    %5811 = vmatpush1.bf16.msra.mxu0 %v4838
    %5812 = vmatprep.subr.bf16.mxu0 %v4846
    %5813 = vmatpush1.bf16.msra.mxu0 %v4845
    %5814 = vmatprep.subr.bf16.mxu0 %v4853
    %5815 = vmatpush1.bf16.msra.mxu0 %v4852
    %5816 = vmatprep.subr.bf16.mxu0 %v4860
    %5817 = vmatpush1.bf16.msra.mxu0 %v4859
    %5818 = vmatprep.subr.bf16.mxu0 %v4867
    %5819 = vmatpush1.bf16.msra.mxu0 %v4866
    %5820 = vmatprep.subr.bf16.mxu0 %v4874
    %5821 = vmatpush1.bf16.msra.mxu0 %v4873
    %5822 = vmatprep.subr.bf16.mxu0 %v4881
    %5823 = vmatpush1.bf16.msra.mxu0 %v4880
    %5824 = vmatprep.subr.bf16.mxu0 %v4888
    %5825 = vmatpush1.bf16.msra.mxu0 %v4887
    %5826 = vmatprep.subr.bf16.mxu0 %v4895
    %5827 = vmatpush1.bf16.msra.mxu0 %v4894
    %5828 = vmatprep.subr.bf16.mxu0 %v4902
    %5829 = vmatpush1.bf16.msra.mxu0 %v4901
    %5830 = vmatprep.subr.bf16.mxu0 %v4909
    %5831 = vmatpush1.bf16.msra.mxu0 %v4908
    %5832 = vmatprep.subr.bf16.mxu0 %v4916
    %5833 = vmatpush1.bf16.msra.mxu0 %v4915
    %5834 = vmatprep.subr.bf16.mxu0 %v4923
    %5835 = vmatpush1.bf16.msra.mxu0 %v4922
    %5836 = vmatprep.mubr.bf16.mxu0 %v2741
    %5837 = vmatmul.mubr.bf16.gmra.mrb[0].mxu0 %v2740
    %v5838 = vpop.f32.mrb[0].mxu0
    %v5839 = vadd.f32 %v5798, %v5838
    %v5840 = vpop.f32.mrb[0].mxu0
    %v5841 = vadd.f32 %v5800, %v5840
    %v5842 = vpop.f32.mrb[0].mxu0
    %v5843 = vpop.f32.mrb[0].mxu0
    %5844 = vdwg.mxu0
    %5845 = vmatprep.subr.bf16.mxu0 %v4930
    %5846 = vmatpush1.bf16.msra.mxu0 %v4929
    %5847 = vmatprep.subr.bf16.mxu0 %v4937
    %5848 = vmatpush1.bf16.msra.mxu0 %v4936
    %5849 = vmatprep.subr.bf16.mxu0 %v4944
    %5850 = vmatpush1.bf16.msra.mxu0 %v4943
    %5851 = vmatprep.subr.bf16.mxu0 %v4951
    %5852 = vmatpush1.bf16.msra.mxu0 %v4950
    %5853 = vmatprep.subr.bf16.mxu0 %v4958
    %5854 = vmatpush1.bf16.msra.mxu0 %v4957
    %5855 = vmatprep.subr.bf16.mxu0 %v4965
    %5856 = vmatpush1.bf16.msra.mxu0 %v4964
    %5857 = vmatprep.subr.bf16.mxu0 %v4972
    %5858 = vmatpush1.bf16.msra.mxu0 %v4971
    %5859 = vmatprep.subr.bf16.mxu0 %v4979
    %5860 = vmatpush1.bf16.msra.mxu0 %v4978
    %5861 = vmatprep.subr.bf16.mxu0 %v4986
    %5862 = vmatpush1.bf16.msra.mxu0 %v4985
    %5863 = vmatprep.subr.bf16.mxu0 %v4993
    %5864 = vmatpush1.bf16.msra.mxu0 %v4992
    %5865 = vmatprep.subr.bf16.mxu0 %v5000
    %5866 = vmatpush1.bf16.msra.mxu0 %v4999
    %5867 = vmatprep.subr.bf16.mxu0 %v5007
    %5868 = vmatpush1.bf16.msra.mxu0 %v5006
    %5869 = vmatprep.subr.bf16.mxu0 %v5014
    %5870 = vmatpush1.bf16.msra.mxu0 %v5013
    %5871 = vmatprep.subr.bf16.mxu0 %v5021
    %5872 = vmatpush1.bf16.msra.mxu0 %v5020
    %5873 = vmatprep.subr.bf16.mxu0 %v5028
    %5874 = vmatpush1.bf16.msra.mxu0 %v5027
    %5875 = vmatprep.subr.bf16.mxu0 %v5035
    %5876 = vmatpush1.bf16.msra.mxu0 %v5034
    %5877 = vmatprep.mubr.bf16.mxu0 %v2743
    %5878 = vmatmul.mubr.bf16.gmra.mrb[0].mxu0 %v2742
    %v5879 = vpop.f32.mrb[0].mxu0
    %v5880 = vadd.f32 %v5839, %v5879
    %v5881 = vpop.f32.mrb[0].mxu0
    %v5882 = vadd.f32 %v5841, %v5881
    %v5883 = vpop.f32.mrb[0].mxu0
    %v5884 = vpop.f32.mrb[0].mxu0
    %5885 = vdwg.mxu0
    %5886 = vmatprep.subr.bf16.mxu0 %v5042
    %5887 = vmatpush1.bf16.msra.mxu0 %v5041
    %5888 = vmatprep.subr.bf16.mxu0 %v5049
    %5889 = vmatpush1.bf16.msra.mxu0 %v5048
    %5890 = vmatprep.subr.bf16.mxu0 %v5056
    %5891 = vmatpush1.bf16.msra.mxu0 %v5055
    %5892 = vmatprep.subr.bf16.mxu0 %v5063
    %5893 = vmatpush1.bf16.msra.mxu0 %v5062
    %5894 = vmatprep.subr.bf16.mxu0 %v5070
    %5895 = vmatpush1.bf16.msra.mxu0 %v5069
    %5896 = vmatprep.subr.bf16.mxu0 %v5077
    %5897 = vmatpush1.bf16.msra.mxu0 %v5076
    %5898 = vmatprep.subr.bf16.mxu0 %v5084
    %5899 = vmatpush1.bf16.msra.mxu0 %v5083
    %5900 = vmatprep.subr.bf16.mxu0 %v5091
    %5901 = vmatpush1.bf16.msra.mxu0 %v5090
    %5902 = vmatprep.subr.bf16.mxu0 %v5098
    %5903 = vmatpush1.bf16.msra.mxu0 %v5097
    %5904 = vmatprep.subr.bf16.mxu0 %v5105
    %5905 = vmatpush1.bf16.msra.mxu0 %v5104
    %5906 = vmatprep.subr.bf16.mxu0 %v5112
    %5907 = vmatpush1.bf16.msra.mxu0 %v5111
    %5908 = vmatprep.subr.bf16.mxu0 %v5119
    %5909 = vmatpush1.bf16.msra.mxu0 %v5118
    %5910 = vmatprep.subr.bf16.mxu0 %v5126
    %5911 = vmatpush1.bf16.msra.mxu0 %v5125
    %5912 = vmatprep.subr.bf16.mxu0 %v5133
    %5913 = vmatpush1.bf16.msra.mxu0 %v5132
    %5914 = vmatprep.subr.bf16.mxu0 %v5140
    %5915 = vmatpush1.bf16.msra.mxu0 %v5139
    %5916 = vmatprep.subr.bf16.mxu0 %v5147
    %5917 = vmatpush1.bf16.msra.mxu0 %v5146
    %5918 = vmatprep.mubr.bf16.mxu0 %v2745
    %5919 = vmatmul.mubr.bf16.gmra.mrb[0].mxu0 %v2744
    %v5920 = vpop.f32.mrb[0].mxu0
    %v5921 = vadd.f32 %v5880, %v5920
    %v5922 = vpop.f32.mrb[0].mxu0
    %v5923 = vadd.f32 %v5882, %v5922
    %v5924 = vpop.f32.mrb[0].mxu0
    %v5925 = vpop.f32.mrb[0].mxu0
    %5926 = vdwg.mxu0
    %5927 = vmatprep.subr.bf16.mxu0 %v4708
    %5928 = vmatpush1.bf16.msra.mxu0 %v4707
    %5929 = vmatprep.subr.bf16.mxu0 %v4715
    %5930 = vmatpush1.bf16.msra.mxu0 %v4714
    %5931 = vmatprep.subr.bf16.mxu0 %v4722
    %5932 = vmatpush1.bf16.msra.mxu0 %v4721
    %5933 = vmatprep.subr.bf16.mxu0 %v4729
    %5934 = vmatpush1.bf16.msra.mxu0 %v4728
    %5935 = vmatprep.subr.bf16.mxu0 %v4736
    %5936 = vmatpush1.bf16.msra.mxu0 %v4735
    %5937 = vmatprep.subr.bf16.mxu0 %v4743
    %5938 = vmatpush1.bf16.msra.mxu0 %v4742
    %5939 = vmatprep.subr.bf16.mxu0 %v4750
    %5940 = vmatpush1.bf16.msra.mxu0 %v4749
    %5941 = vmatprep.subr.bf16.mxu0 %v4757
    %5942 = vmatpush1.bf16.msra.mxu0 %v4756
    %5943 = vmatprep.subr.bf16.mxu0 %v4764
    %5944 = vmatpush1.bf16.msra.mxu0 %v4763
    %5945 = vmatprep.subr.bf16.mxu0 %v4771
    %5946 = vmatpush1.bf16.msra.mxu0 %v4770
    %5947 = vmatprep.subr.bf16.mxu0 %v4778
    %5948 = vmatpush1.bf16.msra.mxu0 %v4777
    %5949 = vmatprep.subr.bf16.mxu0 %v4785
    %5950 = vmatpush1.bf16.msra.mxu0 %v4784
    %5951 = vmatprep.subr.bf16.mxu0 %v4792
    %5952 = vmatpush1.bf16.msra.mxu0 %v4791
    %5953 = vmatprep.subr.bf16.mxu0 %v4799
    %5954 = vmatpush1.bf16.msra.mxu0 %v4798
    %5955 = vmatprep.subr.bf16.mxu0 %v4806
    %5956 = vmatpush1.bf16.msra.mxu0 %v4805
    %5957 = vmatprep.subr.bf16.mxu0 %v4813
    %5958 = vmatpush1.bf16.msra.mxu0 %v4812
    %5959 = vmatprep.mubr.bf16.mxu0 %v2739
    %5960 = vmatmul.mubr.bf16.gmra.mrb[0].mxu0 %v2738
    %v5961 = vpop.f32.mrb[0].mxu0
    %v5962 = vadd.f32 %v3279, %v5961
    %v5963 = vpop.f32.mrb[0].mxu0
    %v5964 = vadd.f32 %v3283, %v5963
    %v5965 = vpop.f32.mrb[0].mxu0
    %v5966 = vpop.f32.mrb[0].mxu0
    %5967 = vdwg.mxu0
    %5968 = vmatprep.subr.bf16.mxu0 %v4820
    %5969 = vmatpush1.bf16.msra.mxu0 %v4819
    %5970 = vmatprep.subr.bf16.mxu0 %v4827
    %5971 = vmatpush1.bf16.msra.mxu0 %v4826
    %5972 = vmatprep.subr.bf16.mxu0 %v4834
    %5973 = vmatpush1.bf16.msra.mxu0 %v4833
    %5974 = vmatprep.subr.bf16.mxu0 %v4841
    %5975 = vmatpush1.bf16.msra.mxu0 %v4840
    %5976 = vmatprep.subr.bf16.mxu0 %v4848
    %5977 = vmatpush1.bf16.msra.mxu0 %v4847
    %5978 = vmatprep.subr.bf16.mxu0 %v4855
    %5979 = vmatpush1.bf16.msra.mxu0 %v4854
    %5980 = vmatprep.subr.bf16.mxu0 %v4862
    %5981 = vmatpush1.bf16.msra.mxu0 %v4861
    %5982 = vmatprep.subr.bf16.mxu0 %v4869
    %5983 = vmatpush1.bf16.msra.mxu0 %v4868
    %5984 = vmatprep.subr.bf16.mxu0 %v4876
    %5985 = vmatpush1.bf16.msra.mxu0 %v4875
    %5986 = vmatprep.subr.bf16.mxu0 %v4883
    %5987 = vmatpush1.bf16.msra.mxu0 %v4882
    %5988 = vmatprep.subr.bf16.mxu0 %v4890
    %5989 = vmatpush1.bf16.msra.mxu0 %v4889
    %5990 = vmatprep.subr.bf16.mxu0 %v4897
    %5991 = vmatpush1.bf16.msra.mxu0 %v4896
    %5992 = vmatprep.subr.bf16.mxu0 %v4904
    %5993 = vmatpush1.bf16.msra.mxu0 %v4903
    %5994 = vmatprep.subr.bf16.mxu0 %v4911
    %5995 = vmatpush1.bf16.msra.mxu0 %v4910
    %5996 = vmatprep.subr.bf16.mxu0 %v4918
    %5997 = vmatpush1.bf16.msra.mxu0 %v4917
    %5998 = vmatprep.subr.bf16.mxu0 %v4925
    %5999 = vmatpush1.bf16.msra.mxu0 %v4924
    %6000 = vmatprep.mubr.bf16.mxu0 %v2741
    %6001 = vmatmul.mubr.bf16.gmra.mrb[0].mxu0 %v2740
    %v6002 = vpop.f32.mrb[0].mxu0
    %v6003 = vadd.f32 %v5962, %v6002
    %v6004 = vpop.f32.mrb[0].mxu0
    %v6005 = vadd.f32 %v5964, %v6004
    %v6006 = vpop.f32.mrb[0].mxu0
    %v6007 = vpop.f32.mrb[0].mxu0
    %6008 = vdwg.mxu0
    %6009 = vmatprep.subr.bf16.mxu0 %v4932
    %6010 = vmatpush1.bf16.msra.mxu0 %v4931
    %6011 = vmatprep.subr.bf16.mxu0 %v4939
    %6012 = vmatpush1.bf16.msra.mxu0 %v4938
    %6013 = vmatprep.subr.bf16.mxu0 %v4946
    %6014 = vmatpush1.bf16.msra.mxu0 %v4945
    %6015 = vmatprep.subr.bf16.mxu0 %v4953
    %6016 = vmatpush1.bf16.msra.mxu0 %v4952
    %6017 = vmatprep.subr.bf16.mxu0 %v4960
    %6018 = vmatpush1.bf16.msra.mxu0 %v4959
    %6019 = vmatprep.subr.bf16.mxu0 %v4967
    %6020 = vmatpush1.bf16.msra.mxu0 %v4966
    %6021 = vmatprep.subr.bf16.mxu0 %v4974
    %6022 = vmatpush1.bf16.msra.mxu0 %v4973
    %6023 = vmatprep.subr.bf16.mxu0 %v4981
    %6024 = vmatpush1.bf16.msra.mxu0 %v4980
    %6025 = vmatprep.subr.bf16.mxu0 %v4988
    %6026 = vmatpush1.bf16.msra.mxu0 %v4987
    %6027 = vmatprep.subr.bf16.mxu0 %v4995
    %6028 = vmatpush1.bf16.msra.mxu0 %v4994
    %6029 = vmatprep.subr.bf16.mxu0 %v5002
    %6030 = vmatpush1.bf16.msra.mxu0 %v5001
    %6031 = vmatprep.subr.bf16.mxu0 %v5009
    %6032 = vmatpush1.bf16.msra.mxu0 %v5008
    %6033 = vmatprep.subr.bf16.mxu0 %v5016
    %6034 = vmatpush1.bf16.msra.mxu0 %v5015
    %6035 = vmatprep.subr.bf16.mxu0 %v5023
    %6036 = vmatpush1.bf16.msra.mxu0 %v5022
    %6037 = vmatprep.subr.bf16.mxu0 %v5030
    %6038 = vmatpush1.bf16.msra.mxu0 %v5029
    %6039 = vmatprep.subr.bf16.mxu0 %v5037
    %6040 = vmatpush1.bf16.msra.mxu0 %v5036
    %6041 = vmatprep.mubr.bf16.mxu0 %v2743
    %6042 = vmatmul.mubr.bf16.gmra.mrb[0].mxu0 %v2742
    %v6043 = vpop.f32.mrb[0].mxu0
    %v6044 = vadd.f32 %v6003, %v6043
    %v6045 = vpop.f32.mrb[0].mxu0
    %v6046 = vadd.f32 %v6005, %v6045
    %v6047 = vpop.f32.mrb[0].mxu0
    %v6048 = vpop.f32.mrb[0].mxu0
    %6049 = vdwg.mxu0
    %6050 = vmatprep.subr.bf16.mxu0 %v5044
    %6051 = vmatpush1.bf16.msra.mxu0 %v5043
    %6052 = vmatprep.subr.bf16.mxu0 %v5051
    %6053 = vmatpush1.bf16.msra.mxu0 %v5050
    %6054 = vmatprep.subr.bf16.mxu0 %v5058
    %6055 = vmatpush1.bf16.msra.mxu0 %v5057
    %6056 = vmatprep.subr.bf16.mxu0 %v5065
    %6057 = vmatpush1.bf16.msra.mxu0 %v5064
    %6058 = vmatprep.subr.bf16.mxu0 %v5072
    %6059 = vmatpush1.bf16.msra.mxu0 %v5071
    %6060 = vmatprep.subr.bf16.mxu0 %v5079
    %6061 = vmatpush1.bf16.msra.mxu0 %v5078
    %6062 = vmatprep.subr.bf16.mxu0 %v5086
    %6063 = vmatpush1.bf16.msra.mxu0 %v5085
    %6064 = vmatprep.subr.bf16.mxu0 %v5093
    %6065 = vmatpush1.bf16.msra.mxu0 %v5092
    %6066 = vmatprep.subr.bf16.mxu0 %v5100
    %6067 = vmatpush1.bf16.msra.mxu0 %v5099
    %6068 = vmatprep.subr.bf16.mxu0 %v5107
    %6069 = vmatpush1.bf16.msra.mxu0 %v5106
    %6070 = vmatprep.subr.bf16.mxu0 %v5114
    %6071 = vmatpush1.bf16.msra.mxu0 %v5113
    %6072 = vmatprep.subr.bf16.mxu0 %v5121
    %6073 = vmatpush1.bf16.msra.mxu0 %v5120
    %6074 = vmatprep.subr.bf16.mxu0 %v5128
    %6075 = vmatpush1.bf16.msra.mxu0 %v5127
    %6076 = vmatprep.subr.bf16.mxu0 %v5135
    %6077 = vmatpush1.bf16.msra.mxu0 %v5134
    %6078 = vmatprep.subr.bf16.mxu0 %v5142
    %6079 = vmatpush1.bf16.msra.mxu0 %v5141
    %6080 = vmatprep.subr.bf16.mxu0 %v5149
    %6081 = vmatpush1.bf16.msra.mxu0 %v5148
    %6082 = vmatprep.mubr.bf16.mxu0 %v2745
    %6083 = vmatmul.mubr.bf16.gmra.mrb[0].mxu0 %v2744
    %v6084 = vpop.f32.mrb[0].mxu0
    %v6085 = vadd.f32 %v6044, %v6084
    %v6086 = vpop.f32.mrb[0].mxu0
    %v6087 = vadd.f32 %v6046, %v6086
    %v6088 = vpop.f32.mrb[0].mxu0
    %v6089 = vpop.f32.mrb[0].mxu0
    %6090 = vdwg.mxu0
    %6091 = vmatprep.subr.bf16.mxu0 0
    %6092 = vmatpush1.bf16.msra.mxu0 %v4709
    %6093 = vmatprep.subr.bf16.mxu0 0
    %6094 = vmatpush1.bf16.msra.mxu0 %v4716
    %6095 = vmatprep.subr.bf16.mxu0 0
    %6096 = vmatpush1.bf16.msra.mxu0 %v4723
    %6097 = vmatprep.subr.bf16.mxu0 0
    %6098 = vmatpush1.bf16.msra.mxu0 %v4730
    %6099 = vmatprep.subr.bf16.mxu0 0
    %6100 = vmatpush1.bf16.msra.mxu0 %v4737
    %6101 = vmatprep.subr.bf16.mxu0 0
    %6102 = vmatpush1.bf16.msra.mxu0 %v4744
    %6103 = vmatprep.subr.bf16.mxu0 0
    %6104 = vmatpush1.bf16.msra.mxu0 %v4751
    %6105 = vmatprep.subr.bf16.mxu0 0
    %6106 = vmatpush1.bf16.msra.mxu0 %v4758
    %6107 = vmatprep.subr.bf16.mxu0 0
    %6108 = vmatpush1.bf16.msra.mxu0 %v4765
    %6109 = vmatprep.subr.bf16.mxu0 0
    %6110 = vmatpush1.bf16.msra.mxu0 %v4772
    %6111 = vmatprep.subr.bf16.mxu0 0
    %6112 = vmatpush1.bf16.msra.mxu0 %v4779
    %6113 = vmatprep.subr.bf16.mxu0 0
    %6114 = vmatpush1.bf16.msra.mxu0 %v4786
    %6115 = vmatprep.subr.bf16.mxu0 0
    %6116 = vmatpush1.bf16.msra.mxu0 %v4793
    %6117 = vmatprep.subr.bf16.mxu0 0
    %6118 = vmatpush1.bf16.msra.mxu0 %v4800
    %6119 = vmatprep.subr.bf16.mxu0 0
    %6120 = vmatpush1.bf16.msra.mxu0 %v4807
    %6121 = vmatprep.subr.bf16.mxu0 0
    %6122 = vmatpush1.bf16.msra.mxu0 %v4814
    %6123 = vmatprep.mubr.bf16.mxu0 %v2739
    %6124 = vmatmul.mubr.bf16.gmra.mrb[0].mxu0 %v2738
    %v6125 = vpop.f32.mrb[0].mxu0
    %v6126 = vadd.f32 %v3287, %v6125
    %v6127 = vpop.f32.mrb[0].mxu0
    %v6128 = vpop.f32.mrb[0].mxu0
    %v6129 = vpop.f32.mrb[0].mxu0
    %6130 = vdwg.mxu0
    %6131 = vmatprep.subr.bf16.mxu0 0
    %6132 = vmatpush1.bf16.msra.mxu0 %v4821
    %6133 = vmatprep.subr.bf16.mxu0 0
    %6134 = vmatpush1.bf16.msra.mxu0 %v4828
    %6135 = vmatprep.subr.bf16.mxu0 0
    %6136 = vmatpush1.bf16.msra.mxu0 %v4835
    %6137 = vmatprep.subr.bf16.mxu0 0
    %6138 = vmatpush1.bf16.msra.mxu0 %v4842
    %6139 = vmatprep.subr.bf16.mxu0 0
    %6140 = vmatpush1.bf16.msra.mxu0 %v4849
    %6141 = vmatprep.subr.bf16.mxu0 0
    %6142 = vmatpush1.bf16.msra.mxu0 %v4856
    %6143 = vmatprep.subr.bf16.mxu0 0
    %6144 = vmatpush1.bf16.msra.mxu0 %v4863
    %6145 = vmatprep.subr.bf16.mxu0 0
    %6146 = vmatpush1.bf16.msra.mxu0 %v4870
    %6147 = vmatprep.subr.bf16.mxu0 0
    %6148 = vmatpush1.bf16.msra.mxu0 %v4877
    %6149 = vmatprep.subr.bf16.mxu0 0
    %6150 = vmatpush1.bf16.msra.mxu0 %v4884
    %6151 = vmatprep.subr.bf16.mxu0 0
    %6152 = vmatpush1.bf16.msra.mxu0 %v4891
    %6153 = vmatprep.subr.bf16.mxu0 0
    %6154 = vmatpush1.bf16.msra.mxu0 %v4898
    %6155 = vmatprep.subr.bf16.mxu0 0
    %6156 = vmatpush1.bf16.msra.mxu0 %v4905
    %6157 = vmatprep.subr.bf16.mxu0 0
    %6158 = vmatpush1.bf16.msra.mxu0 %v4912
    %6159 = vmatprep.subr.bf16.mxu0 0
    %6160 = vmatpush1.bf16.msra.mxu0 %v4919
    %6161 = vmatprep.subr.bf16.mxu0 0
    %6162 = vmatpush1.bf16.msra.mxu0 %v4926
    %6163 = vmatprep.mubr.bf16.mxu0 %v2741
    %6164 = vmatmul.mubr.bf16.gmra.mrb[0].mxu0 %v2740
    %v6165 = vpop.f32.mrb[0].mxu0
    %v6166 = vadd.f32 %v6126, %v6165
    %v6167 = vpop.f32.mrb[0].mxu0
    %v6168 = vpop.f32.mrb[0].mxu0
    %v6169 = vpop.f32.mrb[0].mxu0
    %6170 = vdwg.mxu0
    %6171 = vmatprep.subr.bf16.mxu0 0
    %6172 = vmatpush1.bf16.msra.mxu0 %v4933
    %6173 = vmatprep.subr.bf16.mxu0 0
    %6174 = vmatpush1.bf16.msra.mxu0 %v4940
    %6175 = vmatprep.subr.bf16.mxu0 0
    %6176 = vmatpush1.bf16.msra.mxu0 %v4947
    %6177 = vmatprep.subr.bf16.mxu0 0
    %6178 = vmatpush1.bf16.msra.mxu0 %v4954
    %6179 = vmatprep.subr.bf16.mxu0 0
    %6180 = vmatpush1.bf16.msra.mxu0 %v4961
    %6181 = vmatprep.subr.bf16.mxu0 0
    %6182 = vmatpush1.bf16.msra.mxu0 %v4968
    %6183 = vmatprep.subr.bf16.mxu0 0
    %6184 = vmatpush1.bf16.msra.mxu0 %v4975
    %6185 = vmatprep.subr.bf16.mxu0 0
    %6186 = vmatpush1.bf16.msra.mxu0 %v4982
    %6187 = vmatprep.subr.bf16.mxu0 0
    %6188 = vmatpush1.bf16.msra.mxu0 %v4989
    %6189 = vmatprep.subr.bf16.mxu0 0
    %6190 = vmatpush1.bf16.msra.mxu0 %v4996
    %6191 = vmatprep.subr.bf16.mxu0 0
    %6192 = vmatpush1.bf16.msra.mxu0 %v5003
    %6193 = vmatprep.subr.bf16.mxu0 0
    %6194 = vmatpush1.bf16.msra.mxu0 %v5010
    %6195 = vmatprep.subr.bf16.mxu0 0
    %6196 = vmatpush1.bf16.msra.mxu0 %v5017
    %6197 = vmatprep.subr.bf16.mxu0 0
    %6198 = vmatpush1.bf16.msra.mxu0 %v5024
    %6199 = vmatprep.subr.bf16.mxu0 0
    %6200 = vmatpush1.bf16.msra.mxu0 %v5031
    %6201 = vmatprep.subr.bf16.mxu0 0
    %6202 = vmatpush1.bf16.msra.mxu0 %v5038
    %6203 = vmatprep.mubr.bf16.mxu0 %v2743
    %6204 = vmatmul.mubr.bf16.gmra.mrb[0].mxu0 %v2742
    %v6205 = vpop.f32.mrb[0].mxu0
    %v6206 = vadd.f32 %v6166, %v6205
    %v6207 = vpop.f32.mrb[0].mxu0
    %v6208 = vpop.f32.mrb[0].mxu0
    %v6209 = vpop.f32.mrb[0].mxu0
    %6210 = vdwg.mxu0
    %6211 = vmatprep.subr.bf16.mxu0 0
    %6212 = vmatpush1.bf16.msra.mxu0 %v5045
    %6213 = vmatprep.subr.bf16.mxu0 0
    %6214 = vmatpush1.bf16.msra.mxu0 %v5052
    %6215 = vmatprep.subr.bf16.mxu0 0
    %6216 = vmatpush1.bf16.msra.mxu0 %v5059
    %6217 = vmatprep.subr.bf16.mxu0 0
    %6218 = vmatpush1.bf16.msra.mxu0 %v5066
    %6219 = vmatprep.subr.bf16.mxu0 0
    %6220 = vmatpush1.bf16.msra.mxu0 %v5073
    %6221 = vmatprep.subr.bf16.mxu0 0
    %6222 = vmatpush1.bf16.msra.mxu0 %v5080
    %6223 = vmatprep.subr.bf16.mxu0 0
    %6224 = vmatpush1.bf16.msra.mxu0 %v5087
    %6225 = vmatprep.subr.bf16.mxu0 0
    %6226 = vmatpush1.bf16.msra.mxu0 %v5094
    %6227 = vmatprep.subr.bf16.mxu0 0
    %6228 = vmatpush1.bf16.msra.mxu0 %v5101
    %6229 = vmatprep.subr.bf16.mxu0 0
    %6230 = vmatpush1.bf16.msra.mxu0 %v5108
    %6231 = vmatprep.subr.bf16.mxu0 0
    %6232 = vmatpush1.bf16.msra.mxu0 %v5115
    %6233 = vmatprep.subr.bf16.mxu0 0
    %6234 = vmatpush1.bf16.msra.mxu0 %v5122
    %6235 = vmatprep.subr.bf16.mxu0 0
    %6236 = vmatpush1.bf16.msra.mxu0 %v5129
    %6237 = vmatprep.subr.bf16.mxu0 0
    %6238 = vmatpush1.bf16.msra.mxu0 %v5136
    %6239 = vmatprep.subr.bf16.mxu0 0
    %6240 = vmatpush1.bf16.msra.mxu0 %v5143
    %6241 = vmatprep.subr.bf16.mxu0 0
    %6242 = vmatpush1.bf16.msra.mxu0 %v5150
    %6243 = vmatprep.mubr.bf16.mxu0 %v2745
    %6244 = vmatmul.mubr.bf16.gmra.mrb[0].mxu0 %v2744
    %v6245 = vpop.f32.mrb[0].mxu0
    %v6246 = vadd.f32 %v6206, %v6245
    %v6247 = vpop.f32.mrb[0].mxu0
    %v6248 = vpop.f32.mrb[0].mxu0
    %v6249 = vpop.f32.mrb[0].mxu0
    %6250 = vdwg.mxu0
    %v6251 = vtanh.pop %v5757
    %v6252 = vtanh.pop %v5759
    %v6253 = vtanh.pop %v5921
    %v6254 = vtanh.pop %v5923
    %v6255 = vtanh.pop %v6085
    %v6256 = vtanh.pop %v6087
    %v6257 = vtanh.pop %v6246
    %6258 = vst [vmem:[#allocation17] sm:$0xff] %v6251
    %6259 = vst [vmem:[#allocation17 + $0x8] sm:$0xff] %v6252
    %6260 = vst [vmem:[#allocation17 + $0x10] sm:$0xff] %v6253
    %6261 = vst [vmem:[#allocation17 + $0x18] sm:$0xff] %v6254
    %6262 = vst [vmem:[#allocation17 + $0x20] sm:$0xff] %v6255
    %6263 = vst [vmem:[#allocation17 + $0x28] sm:$0xff] %v6256
    %6264 = vst [vmem:[#allocation17 + $0x30] sm:$0xff] %v6257
    // Predicated region
    $region74: #{tpu_custom_call.1} parent=1 // pred_check
      _
    $region75: #{tpu_custom_call.1} parent=1 // pred_check_branch
      %6266 = sbr.rel (0) target = $region77
    $region76: #{tpu_custom_call.1} parent=1 // pred_region
      %s6268 = ssub.s32 896, 896
      %6269 = vsyncadd [#allocation4], %s6268
      %s6271 = sshll.u32 [#allocation17], 4
      %s6272 = int_to_ptr.vmem [resolvable:$true] %s6271
      %6274 = dma.vmem_to_hbm [thread:$0]  %s6272, 896, %s9, [#allocation4]
    $region77: #{tpu_custom_call.1} parent=1 // pred_fallthru
      _
    // Predicated region
    $region78: #{tpu_custom_call.1} parent=1 // pred_check
      _
    $region79: #{tpu_custom_call.1} parent=1 // pred_check_branch
      %6276 = sbr.rel (0) target = $region81
    $region80: #{tpu_custom_call.1} parent=1 // pred_region
      %6277 = dma.done [#allocation4], 896
    $region81: #{tpu_custom_call.1} parent=1 // pred_fallthru
      _
    %6278 = vsyncpa [#allocation3], 1
    %6279 = vsyncpa [#allocation6], 1
    %6280 = vsyncpa [#allocation9], 1
    %6281 = vsyncpa [#allocation12], 1
    %6282 = vsyncpa [#allocation15], 1
    %6283 = vsyncpa [#allocation4], 1

</llo_original>
